<compile_context>
chip_gen: v7x
topology: tpu7x:2x2x1
jax: 0.10.0
libtpu: 0.0.40
codegen_flags: <defaults>
</compile_context>

<pallas_src>
import functools

import jax
import jax.numpy as jnp
from jax.experimental import pallas as pl
from jax.experimental.pallas import tpu as pltpu

EPS = 1e-5
LANES = 128


def _round_up(x, m):
    return (x + m - 1) // m * m


# --------------------------------------------------------------------------------------
# Pass 1: conv (sum of shifted matmuls over depth taps) + bias + partial BN statistics.
# --------------------------------------------------------------------------------------
def _conv_stats_kernel(x_ref, w_ref, b_ref, m_ref, y_ref, s1_ref, s2_ref, acc_ref,
                       *, k, W, Mfull, Cin):
    # x_ref : (1, 1, H*W + k-1, Cin) bf16   input plane at depth do+dz (flattened H,W)
    # w_ref : (1, k*k*Cin, Cpad)     bf16   weight slice for this depth tap dz
    # b_ref : (1, Cpad)              f32    conv bias (channel-padded)
    # m_ref : (Mfull, 1)             f32    1.0 for valid output columns (wo < Wo), else 0.0
    # y_ref : (1, 1, Mfull, Cpad)    f32    conv output slab (full-width rows)
    # s1_ref: (1, 1, 1, Cpad)        f32    masked per-slab channel sum
    # s2_ref: (1, 1, 1, Cpad)        f32    masked per-slab channel sum of squares
    # acc_ref: (Mfull, Cpad)         f32    VMEM accumulator carried across depth taps
    dz = pl.program_id(2)

    @pl.when(dz == 0)
    def _init():
        acc_ref[...] = jnp.broadcast_to(b_ref[...], acc_ref.shape)

    acc = acc_ref[...]
    for dy in range(k):
        for dx in range(k):
            off = dy * W + dx                      # static shift into the flattened plane
            t = dy * k + dx
            xs = x_ref[0, 0, off:off + Mfull, :]   # (Mfull, Cin)  bf16
            wt = w_ref[0, t * Cin:(t + 1) * Cin, :]  # (Cin, Cpad) bf16
            acc = acc + jnp.dot(xs, wt, preferred_element_type=jnp.float32)
    acc_ref[...] = acc

    @pl.when(dz == k - 1)
    def _finish():
        yv = acc_ref[...]
        y_ref[0, 0, :, :] = yv
        ym = yv * m_ref[...]                       # zero out the W-padding columns
        s1_ref[0, 0, :, :] = jnp.sum(ym, axis=0, keepdims=True)
        s2_ref[0, 0, :, :] = jnp.sum(ym * yv, axis=0, keepdims=True)


# --------------------------------------------------------------------------------------
# Pass 2: apply BatchNorm (precomputed scale/shift from batch stats) + ReLU.
# --------------------------------------------------------------------------------------
def _bn_relu_kernel(y_ref, sc_ref, sh_ref, o_ref):
    yv = y_ref[0, 0, :, :]                                            # (Mfull, Cpad) f32
    o_ref[0, 0, :, :] = jnp.maximum(yv * sc_ref[...] + sh_ref[...], 0.0).astype(o_ref.dtype)


# --------------------------------------------------------------------------------------
# One Conv3DDropoutNormActivation block (channels-last in / out).
# --------------------------------------------------------------------------------------
def _conv_bn_relu_block(a, w, b, gamma, beta, k, out_dtype):
    """a: (N, D, H, W, Cin).  Returns (N, Do, Ho, Wo, Cout) in out_dtype."""
    N, D, H, W, Cin = a.shape
    Cout = w.shape[-1]
    Do, Ho, Wo = D - k + 1, H - k + 1, W - k + 1
    Cpad = _round_up(Cout, LANES)
    Mfull = Ho * W                      # full-width output rows per (n, do) slab
    HWp = H * W + (k - 1)               # flattened plane padded so tap slices stay in range

    # --- operand prep (cheap XLA ops, no k^3 patch expansion) ---
    xf = a.reshape(N, D, H * W, Cin)
    xf = jnp.pad(xf, ((0, 0), (0, 0), (0, k - 1), (0, 0))).astype(jnp.bfloat16)
    wf = jnp.pad(w, ((0, 0), (0, 0), (0, 0), (0, 0), (0, Cpad - Cout)))
    wf = wf.reshape(k, k * k * Cin, Cpad).astype(jnp.bfloat16)          # (dz, (dy,dx,ci), co)
    bp = jnp.pad(b, (0, Cpad - Cout)).reshape(1, Cpad).astype(jnp.float32)
    mask = (jnp.arange(Mfull) % W < Wo).astype(jnp.float32).reshape(Mfull, 1)

    kern = functools.partial(_conv_stats_kernel, k=k, W=W, Mfull=Mfull, Cin=Cin)
    flops = 2 * N * Do * (k ** 3) * Mfull * Cin * Cpad
    bytes_acc = (N * Do * k * HWp * Cin * 2 + k * k * k * Cin * Cpad * 2
                 + N * Do * Mfull * Cpad * 4 + 2 * N * Do * Cpad * 4)

    y, s1, s2 = pl.pallas_call(
        kern,
        out_shape=(jax.ShapeDtypeStruct((N, Do, Mfull, Cpad), jnp.float32),
                   jax.ShapeDtypeStruct((N, Do, 1, Cpad), jnp.float32),
                   jax.ShapeDtypeStruct((N, Do, 1, Cpad), jnp.float32)),
        grid_spec=pltpu.PrefetchScalarGridSpec(
            num_scalar_prefetch=0,
            grid=(N, Do, k),
            in_specs=[
                pl.BlockSpec((1, 1, HWp, Cin), lambda n, d, z: (n, d + z, 0, 0)),
                pl.BlockSpec((1, k * k * Cin, Cpad), lambda n, d, z: (z, 0, 0)),
                pl.BlockSpec((1, Cpad), lambda n, d, z: (0, 0)),
                pl.BlockSpec((Mfull, 1), lambda n, d, z: (0, 0)),
            ],
            out_specs=[
                pl.BlockSpec((1, 1, Mfull, Cpad), lambda n, d, z: (n, d, 0, 0)),
                pl.BlockSpec((1, 1, 1, Cpad), lambda n, d, z: (n, d, 0, 0)),
                pl.BlockSpec((1, 1, 1, Cpad), lambda n, d, z: (n, d, 0, 0)),
            ],
            scratch_shapes=[pltpu.VMEM((Mfull, Cpad), jnp.float32)],
        ),
        compiler_params=pltpu.CompilerParams(
            dimension_semantics=("parallel", "parallel", "arbitrary")),
        cost_estimate=pl.CostEstimate(flops=flops, transcendentals=0,
                                      bytes_accessed=bytes_acc),
    )(xf, wf, bp, mask)

    # --- global BatchNorm batch statistics over all valid output positions (tiny) ---
    cnt = jnp.float32(N * Do * Ho * Wo)
    mu = jnp.sum(s1, axis=(0, 1, 2)) / cnt                                   # (Cpad,)
    var = jnp.maximum(jnp.sum(s2, axis=(0, 1, 2)) / cnt - mu * mu, 0.0)      # biased variance
    gpad = jnp.pad(gamma, (0, Cpad - Cout)).astype(jnp.float32)
    bepad = jnp.pad(beta, (0, Cpad - Cout)).astype(jnp.float32)
    scale = gpad * jax.lax.rsqrt(var + EPS)
    shift = bepad - mu * scale
    scale = scale.reshape(1, Cpad)
    shift = shift.reshape(1, Cpad)

    # --- pass 2: normalize + affine + ReLU (lane-dense, padded-Cout output) ---
    act = pl.pallas_call(
        _bn_relu_kernel,
        out_shape=jax.ShapeDtypeStruct((N, Do, Mfull, Cpad), out_dtype),
        grid_spec=pltpu.PrefetchScalarGridSpec(
            num_scalar_prefetch=0,
            grid=(N, Do),
            in_specs=[
                pl.BlockSpec((1, 1, Mfull, Cpad), lambda n, d: (n, d, 0, 0)),
                pl.BlockSpec((1, Cpad), lambda n, d: (0, 0)),
                pl.BlockSpec((1, Cpad), lambda n, d: (0, 0)),
            ],
            out_specs=pl.BlockSpec((1, 1, Mfull, Cpad), lambda n, d: (n, d, 0, 0)),
        ),
        compiler_params=pltpu.CompilerParams(
            dimension_semantics=("parallel", "parallel")),
    )(y, scale, shift)

    # drop the W-padding columns and the channel padding; stay channels-last.
    act = act.reshape(N, Do, Ho, W, Cpad)[:, :, :, :Wo, :Cout]
    return act


@functools.partial(jax.jit, static_argnames=("k",))
def double_conv_block(x_ncdhw, params, k):
    (w1, b1, g1, be1), (w2, b2, g2, be2) = params
    x = jnp.transpose(x_ncdhw, (0, 2, 3, 4, 1))                      # NCDHW -> NDHWC (once)
    a1 = _conv_bn_relu_block(x, w1, b1, g1, be1, k, jnp.bfloat16)    # stays NDHWC
    a2 = _conv_bn_relu_block(a1, w2, b2, g2, be2, k, jnp.float32)
    return jnp.transpose(a2, (0, 4, 1, 2, 3))                        # NDHWC -> NCDHW (once)


def init_params(key, in_channels, out_channels, k):
    """Deterministic synthetic params. Weight layout: (kd, kh, kw, Cin, Cout)."""
    ks = jax.random.split(key, 8)
    fan1 = in_channels * k ** 3
    fan2 = out_channels * k ** 3
    w1 = jax.random.normal(ks[0], (k, k, k, in_channels, out_channels), jnp.float32) / jnp.sqrt(fan1)
    b1 = jax.random.normal(ks[1], (out_channels,), jnp.float32) * 0.1
    g1 = 1.0 + 0.1 * jax.random.normal(ks[2], (out_channels,), jnp.float32)
    be1 = 0.1 * jax.random.normal(ks[3], (out_channels,), jnp.float32)
    w2 = jax.random.normal(ks[4], (k, k, k, out_channels, out_channels), jnp.float32) / jnp.sqrt(fan2)
    b2 = jax.random.normal(ks[5], (out_channels,), jnp.float32) * 0.1
    g2 = 1.0 + 0.1 * jax.random.normal(ks[6], (out_channels,), jnp.float32)
    be2 = 0.1 * jax.random.normal(ks[7], (out_channels,), jnp.float32)
    return ((w1, b1, g1, be1), (w2, b2, g2, be2))


if __name__ == "__main__":
    key = jax.random.PRNGKey(0)
    k_in, k_par = jax.random.split(key)

    N, Cin, Cout, D, H, W, K = 2, 4, 8, 8, 8, 8, 3
    x = jax.random.normal(k_in, (N, Cin, D, H, W), jnp.float32)      # NCDHW like PyTorch
    params = init_params(k_par, Cin, Cout, K)

    out = double_conv_block(x, params, K)
    out = jax.block_until_ready(out)
    expected = (N, Cout, D - 2 * (K - 1), H - 2 * (K - 1), W - 2 * (K - 1))
    assert out.shape == expected, out.shape
    assert bool(jnp.all(jnp.isfinite(out)))
    print("KERNEL_OK")
</pallas_src>

<mosaic_0001>
module attributes {stable_mosaic.version = 11 : i64} {
  func.func @_conv_stats_kernel(%arg0: i32, %arg1: i32, %arg2: i32, %arg3: memref<1x1x66x4xbf16, #tpu.memory_space<vmem>>, %arg4: memref<1x36x128xbf16, #tpu.memory_space<vmem>>, %arg5: memref<1x128xf32, #tpu.memory_space<vmem>>, %arg6: memref<48x1xf32, #tpu.memory_space<vmem>>, %arg7: memref<1x1x48x128xf32, #tpu.memory_space<vmem>>, %arg8: memref<1x1x1x128xf32, #tpu.memory_space<vmem>>, %arg9: memref<1x1x1x128xf32, #tpu.memory_space<vmem>>, %arg10: memref<48x128xf32, #tpu.memory_space<vmem>>) attributes {dimension_semantics = [#tpu.dimension_semantics<parallel>, #tpu.dimension_semantics<parallel>, #tpu.dimension_semantics<arbitrary>], iteration_bounds = array<i64: 2, 6, 3>, scalar_prefetch = 0 : i64, scratch_operands = 1 : i64, tpu.core_type = #tpu.core_type<tc>, window_params = [{transform_indices = @transform_0, window_bounds = array<i64: 1, 1, 66, 4>}, {transform_indices = @transform_1, window_bounds = array<i64: 1, 36, 128>}, {pipeline_mode = #tpu.pipeline_mode<synchronous>, transform_indices = @transform_2, window_bounds = array<i64: 1, 128>}, {pipeline_mode = #tpu.pipeline_mode<synchronous>, transform_indices = @transform_3, window_bounds = array<i64: 48, 1>}, {transform_indices = @transform_4, window_bounds = array<i64: 1, 1, 48, 128>}, {transform_indices = @transform_5, window_bounds = array<i64: 1, 1, 1, 128>}, {transform_indices = @transform_6, window_bounds = array<i64: 1, 1, 1, 128>}]} {
    %c0_i32 = arith.constant 0 : i32
    %0 = arith.cmpi eq, %arg2, %c0_i32 : i32
    %1 = arith.extui %0 : i1 to i32
    %c0_i32_0 = arith.constant 0 : i32
    %2 = arith.cmpi ne, %1, %c0_i32_0 : i32
    scf.if %2 {
      %c0_62 = arith.constant 0 : index
      %c0_63 = arith.constant 0 : index
      %62 = vector.load %arg5[%c0_62, %c0_63] : memref<1x128xf32, #tpu.memory_space<vmem>>, vector<1x128xf32>
      %63 = vector.shape_cast %62 : vector<1x128xf32> to vector<1x128xf32>
      %64 = vector.broadcast %63 : vector<1x128xf32> to vector<48x128xf32>
      %c0_64 = arith.constant 0 : index
      %c0_65 = arith.constant 0 : index
      %65 = vector.load %arg10[%c0_64, %c0_65] : memref<48x128xf32, #tpu.memory_space<vmem>>, vector<48x128xf32>
      tpu.vector_store %arg10[%c0_64, %c0_65], %64 {strides = array<i32>} : memref<48x128xf32, #tpu.memory_space<vmem>>, vector<48x128xf32>,
    } else {
    }
    %c0 = arith.constant 0 : index
    %c0_1 = arith.constant 0 : index
    %3 = vector.load %arg10[%c0, %c0_1] : memref<48x128xf32, #tpu.memory_space<vmem>>, vector<48x128xf32>
    %c0_2 = arith.constant 0 : index
    %c0_3 = arith.constant 0 : index
    %c0_4 = arith.constant 0 : index
    %c0_5 = arith.constant 0 : index
    %4 = vector.load %arg3[%c0_2, %c0_3, %c0_4, %c0_5] : memref<1x1x66x4xbf16, #tpu.memory_space<vmem>>, vector<1x1x48x4xbf16>
    %5 = vector.shape_cast %4 : vector<1x1x48x4xbf16> to vector<48x4xbf16>
    %c0_6 = arith.constant 0 : index
    %c0_7 = arith.constant 0 : index
    %c0_8 = arith.constant 0 : index
    %6 = vector.load %arg4[%c0_6, %c0_7, %c0_8] : memref<1x36x128xbf16, #tpu.memory_space<vmem>>, vector<1x4x128xbf16>
    %7 = vector.shape_cast %6 : vector<1x4x128xbf16> to vector<4x128xbf16>
    %cst = arith.constant dense<0.000000e+00> : vector<48x128xf32>
    %8 = tpu.matmul %5, %7, %cst {dimension_numbers = #tpu.dot_dimension_numbers<[1], [0], [0], [1], [0, 0, 1, 1], [], []>} : vector<48x4xbf16>, vector<4x128xbf16>, vector<48x128xf32> -> vector<48x128xf32>
    %9 = arith.addf %3, %8 : vector<48x128xf32>
    %c0_9 = arith.constant 0 : index
    %c0_10 = arith.constant 0 : index
    %c1 = arith.constant 1 : index
    %c0_11 = arith.constant 0 : index
    %10 = vector.load %arg3[%c0_9, %c0_10, %c1, %c0_11] : memref<1x1x66x4xbf16, #tpu.memory_space<vmem>>, vector<1x1x48x4xbf16>
    %11 = vector.shape_cast %10 : vector<1x1x48x4xbf16> to vector<48x4xbf16>
    %c0_12 = arith.constant 0 : index
    %c4 = arith.constant 4 : index
    %c0_13 = arith.constant 0 : index
    %12 = vector.load %arg4[%c0_12, %c4, %c0_13] : memref<1x36x128xbf16, #tpu.memory_space<vmem>>, vector<1x4x128xbf16>
    %13 = vector.shape_cast %12 : vector<1x4x128xbf16> to vector<4x128xbf16>
    %cst_14 = arith.constant dense<0.000000e+00> : vector<48x128xf32>
    %14 = tpu.matmul %11, %13, %cst_14 {dimension_numbers = #tpu.dot_dimension_numbers<[1], [0], [0], [1], [0, 0, 1, 1], [], []>} : vector<48x4xbf16>, vector<4x128xbf16>, vector<48x128xf32> -> vector<48x128xf32>
    %15 = arith.addf %9, %14 : vector<48x128xf32>
    %c0_15 = arith.constant 0 : index
    %c0_16 = arith.constant 0 : index
    %c2 = arith.constant 2 : index
    %c0_17 = arith.constant 0 : index
    %16 = vector.load %arg3[%c0_15, %c0_16, %c2, %c0_17] : memref<1x1x66x4xbf16, #tpu.memory_space<vmem>>, vector<1x1x48x4xbf16>
    %17 = vector.shape_cast %16 : vector<1x1x48x4xbf16> to vector<48x4xbf16>
    %c0_18 = arith.constant 0 : index
    %c8 = arith.constant 8 : index
    %c0_19 = arith.constant 0 : index
    %18 = vector.load %arg4[%c0_18, %c8, %c0_19] : memref<1x36x128xbf16, #tpu.memory_space<vmem>>, vector<1x4x128xbf16>
    %19 = vector.shape_cast %18 : vector<1x4x128xbf16> to vector<4x128xbf16>
    %cst_20 = arith.constant dense<0.000000e+00> : vector<48x128xf32>
    %20 = tpu.matmul %17, %19, %cst_20 {dimension_numbers = #tpu.dot_dimension_numbers<[1], [0], [0], [1], [0, 0, 1, 1], [], []>} : vector<48x4xbf16>, vector<4x128xbf16>, vector<48x128xf32> -> vector<48x128xf32>
    %21 = arith.addf %15, %20 : vector<48x128xf32>
    %c0_21 = arith.constant 0 : index
    %c0_22 = arith.constant 0 : index
    %c8_23 = arith.constant 8 : index
    %c0_24 = arith.constant 0 : index
    %22 = vector.load %arg3[%c0_21, %c0_22, %c8_23, %c0_24] : memref<1x1x66x4xbf16, #tpu.memory_space<vmem>>, vector<1x1x48x4xbf16>
    %23 = vector.shape_cast %22 : vector<1x1x48x4xbf16> to vector<48x4xbf16>
    %c0_25 = arith.constant 0 : index
    %c12 = arith.constant 12 : index
    %c0_26 = arith.constant 0 : index
    %24 = vector.load %arg4[%c0_25, %c12, %c0_26] : memref<1x36x128xbf16, #tpu.memory_space<vmem>>, vector<1x4x128xbf16>
    %25 = vector.shape_cast %24 : vector<1x4x128xbf16> to vector<4x128xbf16>
    %cst_27 = arith.constant dense<0.000000e+00> : vector<48x128xf32>
    %26 = tpu.matmul %23, %25, %cst_27 {dimension_numbers = #tpu.dot_dimension_numbers<[1], [0], [0], [1], [0, 0, 1, 1], [], []>} : vector<48x4xbf16>, vector<4x128xbf16>, vector<48x128xf32> -> vector<48x128xf32>
    %27 = arith.addf %21, %26 : vector<48x128xf32>
    %c0_28 = arith.constant 0 : index
    %c0_29 = arith.constant 0 : index
    %c9 = arith.constant 9 : index
    %c0_30 = arith.constant 0 : index
    %28 = vector.load %arg3[%c0_28, %c0_29, %c9, %c0_30] : memref<1x1x66x4xbf16, #tpu.memory_space<vmem>>, vector<1x1x48x4xbf16>
    %29 = vector.shape_cast %28 : vector<1x1x48x4xbf16> to vector<48x4xbf16>
    %c0_31 = arith.constant 0 : index
    %c16 = arith.constant 16 : index
    %c0_32 = arith.constant 0 : index
    %30 = vector.load %arg4[%c0_31, %c16, %c0_32] : memref<1x36x128xbf16, #tpu.memory_space<vmem>>, vector<1x4x128xbf16>
    %31 = vector.shape_cast %30 : vector<1x4x128xbf16> to vector<4x128xbf16>
    %cst_33 = arith.constant dense<0.000000e+00> : vector<48x128xf32>
    %32 = tpu.matmul %29, %31, %cst_33 {dimension_numbers = #tpu.dot_dimension_numbers<[1], [0], [0], [1], [0, 0, 1, 1], [], []>} : vector<48x4xbf16>, vector<4x128xbf16>, vector<48x128xf32> -> vector<48x128xf32>
    %33 = arith.addf %27, %32 : vector<48x128xf32>
    %c0_34 = arith.constant 0 : index
    %c0_35 = arith.constant 0 : index
    %c10 = arith.constant 10 : index
    %c0_36 = arith.constant 0 : index
    %34 = vector.load %arg3[%c0_34, %c0_35, %c10, %c0_36] : memref<1x1x66x4xbf16, #tpu.memory_space<vmem>>, vector<1x1x48x4xbf16>
    %35 = vector.shape_cast %34 : vector<1x1x48x4xbf16> to vector<48x4xbf16>
    %c0_37 = arith.constant 0 : index
    %c20 = arith.constant 20 : index
    %c0_38 = arith.constant 0 : index
    %36 = vector.load %arg4[%c0_37, %c20, %c0_38] : memref<1x36x128xbf16, #tpu.memory_space<vmem>>, vector<1x4x128xbf16>
    %37 = vector.shape_cast %36 : vector<1x4x128xbf16> to vector<4x128xbf16>
    %cst_39 = arith.constant dense<0.000000e+00> : vector<48x128xf32>
    %38 = tpu.matmul %35, %37, %cst_39 {dimension_numbers = #tpu.dot_dimension_numbers<[1], [0], [0], [1], [0, 0, 1, 1], [], []>} : vector<48x4xbf16>, vector<4x128xbf16>, vector<48x128xf32> -> vector<48x128xf32>
    %39 = arith.addf %33, %38 : vector<48x128xf32>
    %c0_40 = arith.constant 0 : index
    %c0_41 = arith.constant 0 : index
    %c16_42 = arith.constant 16 : index
    %c0_43 = arith.constant 0 : index
    %40 = vector.load %arg3[%c0_40, %c0_41, %c16_42, %c0_43] : memref<1x1x66x4xbf16, #tpu.memory_space<vmem>>, vector<1x1x48x4xbf16>
    %41 = vector.shape_cast %40 : vector<1x1x48x4xbf16> to vector<48x4xbf16>
    %c0_44 = arith.constant 0 : index
    %c24 = arith.constant 24 : index
    %c0_45 = arith.constant 0 : index
    %42 = vector.load %arg4[%c0_44, %c24, %c0_45] : memref<1x36x128xbf16, #tpu.memory_space<vmem>>, vector<1x4x128xbf16>
    %43 = vector.shape_cast %42 : vector<1x4x128xbf16> to vector<4x128xbf16>
    %cst_46 = arith.constant dense<0.000000e+00> : vector<48x128xf32>
    %44 = tpu.matmul %41, %43, %cst_46 {dimension_numbers = #tpu.dot_dimension_numbers<[1], [0], [0], [1], [0, 0, 1, 1], [], []>} : vector<48x4xbf16>, vector<4x128xbf16>, vector<48x128xf32> -> vector<48x128xf32>
    %45 = arith.addf %39, %44 : vector<48x128xf32>
    %c0_47 = arith.constant 0 : index
    %c0_48 = arith.constant 0 : index
    %c17 = arith.constant 17 : index
    %c0_49 = arith.constant 0 : index
    %46 = vector.load %arg3[%c0_47, %c0_48, %c17, %c0_49] : memref<1x1x66x4xbf16, #tpu.memory_space<vmem>>, vector<1x1x48x4xbf16>
    %47 = vector.shape_cast %46 : vector<1x1x48x4xbf16> to vector<48x4xbf16>
    %c0_50 = arith.constant 0 : index
    %c28 = arith.constant 28 : index
    %c0_51 = arith.constant 0 : index
    %48 = vector.load %arg4[%c0_50, %c28, %c0_51] : memref<1x36x128xbf16, #tpu.memory_space<vmem>>, vector<1x4x128xbf16>
    %49 = vector.shape_cast %48 : vector<1x4x128xbf16> to vector<4x128xbf16>
    %cst_52 = arith.constant dense<0.000000e+00> : vector<48x128xf32>
    %50 = tpu.matmul %47, %49, %cst_52 {dimension_numbers = #tpu.dot_dimension_numbers<[1], [0], [0], [1], [0, 0, 1, 1], [], []>} : vector<48x4xbf16>, vector<4x128xbf16>, vector<48x128xf32> -> vector<48x128xf32>
    %51 = arith.addf %45, %50 : vector<48x128xf32>
    %c0_53 = arith.constant 0 : index
    %c0_54 = arith.constant 0 : index
    %c18 = arith.constant 18 : index
    %c0_55 = arith.constant 0 : index
    %52 = vector.load %arg3[%c0_53, %c0_54, %c18, %c0_55] : memref<1x1x66x4xbf16, #tpu.memory_space<vmem>>, vector<1x1x48x4xbf16>
    %53 = vector.shape_cast %52 : vector<1x1x48x4xbf16> to vector<48x4xbf16>
    %c0_56 = arith.constant 0 : index
    %c32 = arith.constant 32 : index
    %c0_57 = arith.constant 0 : index
    %54 = vector.load %arg4[%c0_56, %c32, %c0_57] : memref<1x36x128xbf16, #tpu.memory_space<vmem>>, vector<1x4x128xbf16>
    %55 = vector.shape_cast %54 : vector<1x4x128xbf16> to vector<4x128xbf16>
    %cst_58 = arith.constant dense<0.000000e+00> : vector<48x128xf32>
    %56 = tpu.matmul %53, %55, %cst_58 {dimension_numbers = #tpu.dot_dimension_numbers<[1], [0], [0], [1], [0, 0, 1, 1], [], []>} : vector<48x4xbf16>, vector<4x128xbf16>, vector<48x128xf32> -> vector<48x128xf32>
    %57 = arith.addf %51, %56 : vector<48x128xf32>
    %c0_59 = arith.constant 0 : index
    %c0_60 = arith.constant 0 : index
    %58 = vector.load %arg10[%c0_59, %c0_60] : memref<48x128xf32, #tpu.memory_space<vmem>>, vector<48x128xf32>
    tpu.vector_store %arg10[%c0_59, %c0_60], %57 {strides = array<i32>} : memref<48x128xf32, #tpu.memory_space<vmem>>, vector<48x128xf32>,
    %c2_i32 = arith.constant 2 : i32
    %59 = arith.cmpi eq, %arg2, %c2_i32 : i32
    %60 = arith.extui %59 : i1 to i32
    %c0_i32_61 = arith.constant 0 : i32
    %61 = arith.cmpi ne, %60, %c0_i32_61 : i32
    scf.if %61 {
      %c0_62 = arith.constant 0 : index
      %c0_63 = arith.constant 0 : index
      %62 = vector.load %arg10[%c0_62, %c0_63] : memref<48x128xf32, #tpu.memory_space<vmem>>, vector<48x128xf32>
      %c0_64 = arith.constant 0 : index
      %c0_65 = arith.constant 0 : index
      %c0_66 = arith.constant 0 : index
      %c0_67 = arith.constant 0 : index
      %63 = vector.load %arg7[%c0_64, %c0_65, %c0_66, %c0_67] : memref<1x1x48x128xf32, #tpu.memory_space<vmem>>, vector<1x1x48x128xf32>
      %64 = vector.shape_cast %63 : vector<1x1x48x128xf32> to vector<48x128xf32>
      %65 = vector.shape_cast %62 : vector<48x128xf32> to vector<1x1x48x128xf32>
      tpu.vector_store %arg7[%c0_64, %c0_65, %c0_66, %c0_67], %65 {strides = array<i32>} : memref<1x1x48x128xf32, #tpu.memory_space<vmem>>, vector<1x1x48x128xf32>,
      %c0_68 = arith.constant 0 : index
      %c0_69 = arith.constant 0 : index
      %66 = vector.load %arg6[%c0_68, %c0_69] : memref<48x1xf32, #tpu.memory_space<vmem>>, vector<48x1xf32>
      %67 = vector.broadcast %66 : vector<48x1xf32> to vector<48x128xf32>
      %68 = arith.mulf %62, %67 : vector<48x128xf32>
      %cst_70 = arith.constant dense<0.000000e+00> : vector<128xf32>
      %69 = vector.multi_reduction <add>, %68, %cst_70 [0] : vector<48x128xf32> to vector<128xf32>
      %70 = vector.shape_cast %69 : vector<128xf32> to vector<1x128xf32>
      %c0_71 = arith.constant 0 : index
      %c0_72 = arith.constant 0 : index
      %c0_73 = arith.constant 0 : index
      %c0_74 = arith.constant 0 : index
      %71 = vector.load %arg8[%c0_71, %c0_72, %c0_73, %c0_74] : memref<1x1x1x128xf32, #tpu.memory_space<vmem>>, vector<1x1x1x128xf32>
      %72 = vector.shape_cast %71 : vector<1x1x1x128xf32> to vector<1x128xf32>
      %73 = vector.shape_cast %70 : vector<1x128xf32> to vector<1x1x1x128xf32>
      tpu.vector_store %arg8[%c0_71, %c0_72, %c0_73, %c0_74], %73 {strides = array<i32>} : memref<1x1x1x128xf32, #tpu.memory_space<vmem>>, vector<1x1x1x128xf32>,
      %74 = arith.mulf %68, %62 : vector<48x128xf32>
      %cst_75 = arith.constant dense<0.000000e+00> : vector<128xf32>
      %75 = vector.multi_reduction <add>, %74, %cst_75 [0] : vector<48x128xf32> to vector<128xf32>
      %76 = vector.shape_cast %75 : vector<128xf32> to vector<1x128xf32>
      %c0_76 = arith.constant 0 : index
      %c0_77 = arith.constant 0 : index
      %c0_78 = arith.constant 0 : index
      %c0_79 = arith.constant 0 : index
      %77 = vector.load %arg9[%c0_76, %c0_77, %c0_78, %c0_79] : memref<1x1x1x128xf32, #tpu.memory_space<vmem>>, vector<1x1x1x128xf32>
      %78 = vector.shape_cast %77 : vector<1x1x1x128xf32> to vector<1x128xf32>
      %79 = vector.shape_cast %76 : vector<1x128xf32> to vector<1x1x1x128xf32>
      tpu.vector_store %arg9[%c0_76, %c0_77, %c0_78, %c0_79], %79 {strides = array<i32>} : memref<1x1x1x128xf32, #tpu.memory_space<vmem>>, vector<1x1x1x128xf32>,
    } else {
    }
    return
  }
  func.func @transform_0(%arg0: i32, %arg1: i32, %arg2: i32) -> (i32, i32, i32, i32) {
    %0 = arith.addi %arg1, %arg2 : i32
    %c0_i32 = arith.constant 0 : i32
    %c0_i32_0 = arith.constant 0 : i32
    %c0_i32_1 = arith.constant 0 : i32
    return %arg0, %0, %c0_i32, %c0_i32_0 : i32, i32, i32, i32
  }
  func.func @transform_1(%arg0: i32, %arg1: i32, %arg2: i32) -> (i32, i32, i32) {
    %c0_i32 = arith.constant 0 : i32
    %c0_i32_0 = arith.constant 0 : i32
    %c0_i32_1 = arith.constant 0 : i32
    return %arg2, %c0_i32, %c0_i32_0 : i32, i32, i32
  }
  func.func @transform_2(%arg0: i32, %arg1: i32, %arg2: i32) -> (i32, i32) {
    %c0_i32 = arith.constant 0 : i32
    %c0_i32_0 = arith.constant 0 : i32
    %c0_i32_1 = arith.constant 0 : i32
    return %c0_i32, %c0_i32_0 : i32, i32
  }
  func.func @transform_3(%arg0: i32, %arg1: i32, %arg2: i32) -> (i32, i32) {
    %c0_i32 = arith.constant 0 : i32
    %c0_i32_0 = arith.constant 0 : i32
    %c0_i32_1 = arith.constant 0 : i32
    return %c0_i32, %c0_i32_0 : i32, i32
  }
  func.func @transform_4(%arg0: i32, %arg1: i32, %arg2: i32) -> (i32, i32, i32, i32) {
    %c0_i32 = arith.constant 0 : i32
    %c0_i32_0 = arith.constant 0 : i32
    %c0_i32_1 = arith.constant 0 : i32
    return %arg0, %arg1, %c0_i32, %c0_i32_0 : i32, i32, i32, i32
  }
  func.func @transform_5(%arg0: i32, %arg1: i32, %arg2: i32) -> (i32, i32, i32, i32) {
    %c0_i32 = arith.constant 0 : i32
    %c0_i32_0 = arith.constant 0 : i32
    %c0_i32_1 = arith.constant 0 : i32
    return %arg0, %arg1, %c0_i32, %c0_i32_0 : i32, i32, i32, i32
  }
  func.func @transform_6(%arg0: i32, %arg1: i32, %arg2: i32) -> (i32, i32, i32, i32) {
    %c0_i32 = arith.constant 0 : i32
    %c0_i32_0 = arith.constant 0 : i32
    %c0_i32_1 = arith.constant 0 : i32
    return %arg0, %arg1, %c0_i32, %c0_i32_0 : i32, i32, i32, i32
  }
}

module attributes {stable_mosaic.version = 11 : i64} {
  func.func @_bn_relu_kernel(%arg0: i32, %arg1: i32, %arg2: memref<1x1x48x128xf32, #tpu.memory_space<vmem>>, %arg3: memref<1x128xf32, #tpu.memory_space<vmem>>, %arg4: memref<1x128xf32, #tpu.memory_space<vmem>>, %arg5: memref<1x1x48x128xbf16, #tpu.memory_space<vmem>>) attributes {dimension_semantics = [#tpu.dimension_semantics<parallel>, #tpu.dimension_semantics<parallel>], iteration_bounds = array<i64: 2, 6>, scalar_prefetch = 0 : i64, scratch_operands = 0 : i64, tpu.core_type = #tpu.core_type<tc>, window_params = [{transform_indices = @transform_0, window_bounds = array<i64: 1, 1, 48, 128>}, {pipeline_mode = #tpu.pipeline_mode<synchronous>, transform_indices = @transform_1, window_bounds = array<i64: 1, 128>}, {pipeline_mode = #tpu.pipeline_mode<synchronous>, transform_indices = @transform_2, window_bounds = array<i64: 1, 128>}, {transform_indices = @transform_3, window_bounds = array<i64: 1, 1, 48, 128>}]} {
    %c0 = arith.constant 0 : index
    %c0_0 = arith.constant 0 : index
    %c0_1 = arith.constant 0 : index
    %c0_2 = arith.constant 0 : index
    %0 = vector.load %arg2[%c0, %c0_0, %c0_1, %c0_2] : memref<1x1x48x128xf32, #tpu.memory_space<vmem>>, vector<1x1x48x128xf32>
    %1 = vector.shape_cast %0 : vector<1x1x48x128xf32> to vector<48x128xf32>
    %c0_3 = arith.constant 0 : index
    %c0_4 = arith.constant 0 : index
    %2 = vector.load %arg3[%c0_3, %c0_4] : memref<1x128xf32, #tpu.memory_space<vmem>>, vector<1x128xf32>
    %3 = vector.broadcast %2 : vector<1x128xf32> to vector<48x128xf32>
    %4 = arith.mulf %1, %3 : vector<48x128xf32>
    %c0_5 = arith.constant 0 : index
    %c0_6 = arith.constant 0 : index
    %5 = vector.load %arg4[%c0_5, %c0_6] : memref<1x128xf32, #tpu.memory_space<vmem>>, vector<1x128xf32>
    %6 = vector.broadcast %5 : vector<1x128xf32> to vector<48x128xf32>
    %7 = arith.addf %4, %6 : vector<48x128xf32>
    %cst = arith.constant 0.000000e+00 : f32
    %8 = vector.broadcast %cst : f32 to vector<48x128xf32>
    %9 = arith.maximumf %7, %8 : vector<48x128xf32>
    %10 = arith.truncf %9 : vector<48x128xf32> to vector<48x128xbf16>
    %c0_7 = arith.constant 0 : index
    %c0_8 = arith.constant 0 : index
    %c0_9 = arith.constant 0 : index
    %c0_10 = arith.constant 0 : index
    %11 = vector.load %arg5[%c0_7, %c0_8, %c0_9, %c0_10] : memref<1x1x48x128xbf16, #tpu.memory_space<vmem>>, vector<1x1x48x128xbf16>
    %12 = vector.shape_cast %11 : vector<1x1x48x128xbf16> to vector<48x128xbf16>
    %13 = vector.shape_cast %10 : vector<48x128xbf16> to vector<1x1x48x128xbf16>
    tpu.vector_store %arg5[%c0_7, %c0_8, %c0_9, %c0_10], %13 {strides = array<i32>} : memref<1x1x48x128xbf16, #tpu.memory_space<vmem>>, vector<1x1x48x128xbf16>,
    return
  }
  func.func @transform_0(%arg0: i32, %arg1: i32) -> (i32, i32, i32, i32) {
    %c0_i32 = arith.constant 0 : i32
    %c0_i32_0 = arith.constant 0 : i32
    %c0_i32_1 = arith.constant 0 : i32
    return %arg0, %arg1, %c0_i32, %c0_i32_0 : i32, i32, i32, i32
  }
  func.func @transform_1(%arg0: i32, %arg1: i32) -> (i32, i32) {
    %c0_i32 = arith.constant 0 : i32
    %c0_i32_0 = arith.constant 0 : i32
    %c0_i32_1 = arith.constant 0 : i32
    return %c0_i32, %c0_i32_0 : i32, i32
  }
  func.func @transform_2(%arg0: i32, %arg1: i32) -> (i32, i32) {
    %c0_i32 = arith.constant 0 : i32
    %c0_i32_0 = arith.constant 0 : i32
    %c0_i32_1 = arith.constant 0 : i32
    return %c0_i32, %c0_i32_0 : i32, i32
  }
  func.func @transform_3(%arg0: i32, %arg1: i32) -> (i32, i32, i32, i32) {
    %c0_i32 = arith.constant 0 : i32
    %c0_i32_0 = arith.constant 0 : i32
    %c0_i32_1 = arith.constant 0 : i32
    return %arg0, %arg1, %c0_i32, %c0_i32_0 : i32, i32, i32, i32
  }
}

module attributes {stable_mosaic.version = 11 : i64} {
  func.func @_bn_relu_kernel(%arg0: i32, %arg1: i32, %arg2: memref<1x1x24x128xf32, #tpu.memory_space<vmem>>, %arg3: memref<1x128xf32, #tpu.memory_space<vmem>>, %arg4: memref<1x128xf32, #tpu.memory_space<vmem>>, %arg5: memref<1x1x24x128xf32, #tpu.memory_space<vmem>>) attributes {dimension_semantics = [#tpu.dimension_semantics<parallel>, #tpu.dimension_semantics<parallel>], iteration_bounds = array<i64: 2, 4>, scalar_prefetch = 0 : i64, scratch_operands = 0 : i64, tpu.core_type = #tpu.core_type<tc>, window_params = [{transform_indices = @transform_0, window_bounds = array<i64: 1, 1, 24, 128>}, {pipeline_mode = #tpu.pipeline_mode<synchronous>, transform_indices = @transform_1, window_bounds = array<i64: 1, 128>}, {pipeline_mode = #tpu.pipeline_mode<synchronous>, transform_indices = @transform_2, window_bounds = array<i64: 1, 128>}, {transform_indices = @transform_3, window_bounds = array<i64: 1, 1, 24, 128>}]} {
    %c0 = arith.constant 0 : index
    %c0_0 = arith.constant 0 : index
    %c0_1 = arith.constant 0 : index
    %c0_2 = arith.constant 0 : index
    %0 = vector.load %arg2[%c0, %c0_0, %c0_1, %c0_2] : memref<1x1x24x128xf32, #tpu.memory_space<vmem>>, vector<1x1x24x128xf32>
    %1 = vector.shape_cast %0 : vector<1x1x24x128xf32> to vector<24x128xf32>
    %c0_3 = arith.constant 0 : index
    %c0_4 = arith.constant 0 : index
    %2 = vector.load %arg3[%c0_3, %c0_4] : memref<1x128xf32, #tpu.memory_space<vmem>>, vector<1x128xf32>
    %3 = vector.broadcast %2 : vector<1x128xf32> to vector<24x128xf32>
    %4 = arith.mulf %1, %3 : vector<24x128xf32>
    %c0_5 = arith.constant 0 : index
    %c0_6 = arith.constant 0 : index
    %5 = vector.load %arg4[%c0_5, %c0_6] : memref<1x128xf32, #tpu.memory_space<vmem>>, vector<1x128xf32>
    %6 = vector.broadcast %5 : vector<1x128xf32> to vector<24x128xf32>
    %7 = arith.addf %4, %6 : vector<24x128xf32>
    %cst = arith.constant 0.000000e+00 : f32
    %8 = vector.broadcast %cst : f32 to vector<24x128xf32>
    %9 = arith.maximumf %7, %8 : vector<24x128xf32>
    %c0_7 = arith.constant 0 : index
    %c0_8 = arith.constant 0 : index
    %c0_9 = arith.constant 0 : index
    %c0_10 = arith.constant 0 : index
    %10 = vector.load %arg5[%c0_7, %c0_8, %c0_9, %c0_10] : memref<1x1x24x128xf32, #tpu.memory_space<vmem>>, vector<1x1x24x128xf32>
    %11 = vector.shape_cast %10 : vector<1x1x24x128xf32> to vector<24x128xf32>
    %12 = vector.shape_cast %9 : vector<24x128xf32> to vector<1x1x24x128xf32>
    tpu.vector_store %arg5[%c0_7, %c0_8, %c0_9, %c0_10], %12 {strides = array<i32>} : memref<1x1x24x128xf32, #tpu.memory_space<vmem>>, vector<1x1x24x128xf32>,
    return
  }
  func.func @transform_0(%arg0: i32, %arg1: i32) -> (i32, i32, i32, i32) {
    %c0_i32 = arith.constant 0 : i32
    %c0_i32_0 = arith.constant 0 : i32
    %c0_i32_1 = arith.constant 0 : i32
    return %arg0, %arg1, %c0_i32, %c0_i32_0 : i32, i32, i32, i32
  }
  func.func @transform_1(%arg0: i32, %arg1: i32) -> (i32, i32) {
    %c0_i32 = arith.constant 0 : i32
    %c0_i32_0 = arith.constant 0 : i32
    %c0_i32_1 = arith.constant 0 : i32
    return %c0_i32, %c0_i32_0 : i32, i32
  }
  func.func @transform_2(%arg0: i32, %arg1: i32) -> (i32, i32) {
    %c0_i32 = arith.constant 0 : i32
    %c0_i32_0 = arith.constant 0 : i32
    %c0_i32_1 = arith.constant 0 : i32
    return %c0_i32, %c0_i32_0 : i32, i32
  }
  func.func @transform_3(%arg0: i32, %arg1: i32) -> (i32, i32, i32, i32) {
    %c0_i32 = arith.constant 0 : i32
    %c0_i32_0 = arith.constant 0 : i32
    %c0_i32_1 = arith.constant 0 : i32
    return %arg0, %arg1, %c0_i32, %c0_i32_0 : i32, i32, i32, i32
  }
}

module attributes {stable_mosaic.version = 11 : i64} {
  func.func @_conv_stats_kernel(%arg0: i32, %arg1: i32, %arg2: i32, %arg3: memref<1x1x38x8xbf16, #tpu.memory_space<vmem>>, %arg4: memref<1x72x128xbf16, #tpu.memory_space<vmem>>, %arg5: memref<1x128xf32, #tpu.memory_space<vmem>>, %arg6: memref<24x1xf32, #tpu.memory_space<vmem>>, %arg7: memref<1x1x24x128xf32, #tpu.memory_space<vmem>>, %arg8: memref<1x1x1x128xf32, #tpu.memory_space<vmem>>, %arg9: memref<1x1x1x128xf32, #tpu.memory_space<vmem>>, %arg10: memref<24x128xf32, #tpu.memory_space<vmem>>) attributes {dimension_semantics = [#tpu.dimension_semantics<parallel>, #tpu.dimension_semantics<parallel>, #tpu.dimension_semantics<arbitrary>], iteration_bounds = array<i64: 2, 4, 3>, scalar_prefetch = 0 : i64, scratch_operands = 1 : i64, tpu.core_type = #tpu.core_type<tc>, window_params = [{transform_indices = @transform_0, window_bounds = array<i64: 1, 1, 38, 8>}, {transform_indices = @transform_1, window_bounds = array<i64: 1, 72, 128>}, {pipeline_mode = #tpu.pipeline_mode<synchronous>, transform_indices = @transform_2, window_bounds = array<i64: 1, 128>}, {pipeline_mode = #tpu.pipeline_mode<synchronous>, transform_indices = @transform_3, window_bounds = array<i64: 24, 1>}, {transform_indices = @transform_4, window_bounds = array<i64: 1, 1, 24, 128>}, {transform_indices = @transform_5, window_bounds = array<i64: 1, 1, 1, 128>}, {transform_indices = @transform_6, window_bounds = array<i64: 1, 1, 1, 128>}]} {
    %c0_i32 = arith.constant 0 : i32
    %0 = arith.cmpi eq, %arg2, %c0_i32 : i32
    %1 = arith.extui %0 : i1 to i32
    %c0_i32_0 = arith.constant 0 : i32
    %2 = arith.cmpi ne, %1, %c0_i32_0 : i32
    scf.if %2 {
      %c0_61 = arith.constant 0 : index
      %c0_62 = arith.constant 0 : index
      %62 = vector.load %arg5[%c0_61, %c0_62] : memref<1x128xf32, #tpu.memory_space<vmem>>, vector<1x128xf32>
      %63 = vector.shape_cast %62 : vector<1x128xf32> to vector<1x128xf32>
      %64 = vector.broadcast %63 : vector<1x128xf32> to vector<24x128xf32>
      %c0_63 = arith.constant 0 : index
      %c0_64 = arith.constant 0 : index
      %65 = vector.load %arg10[%c0_63, %c0_64] : memref<24x128xf32, #tpu.memory_space<vmem>>, vector<24x128xf32>
      tpu.vector_store %arg10[%c0_63, %c0_64], %64 {strides = array<i32>} : memref<24x128xf32, #tpu.memory_space<vmem>>, vector<24x128xf32>,
    } else {
    }
    %c0 = arith.constant 0 : index
    %c0_1 = arith.constant 0 : index
    %3 = vector.load %arg10[%c0, %c0_1] : memref<24x128xf32, #tpu.memory_space<vmem>>, vector<24x128xf32>
    %c0_2 = arith.constant 0 : index
    %c0_3 = arith.constant 0 : index
    %c0_4 = arith.constant 0 : index
    %c0_5 = arith.constant 0 : index
    %4 = vector.load %arg3[%c0_2, %c0_3, %c0_4, %c0_5] : memref<1x1x38x8xbf16, #tpu.memory_space<vmem>>, vector<1x1x24x8xbf16>
    %5 = vector.shape_cast %4 : vector<1x1x24x8xbf16> to vector<24x8xbf16>
    %c0_6 = arith.constant 0 : index
    %c0_7 = arith.constant 0 : index
    %c0_8 = arith.constant 0 : index
    %6 = vector.load %arg4[%c0_6, %c0_7, %c0_8] : memref<1x72x128xbf16, #tpu.memory_space<vmem>>, vector<1x8x128xbf16>
    %7 = vector.shape_cast %6 : vector<1x8x128xbf16> to vector<8x128xbf16>
    %cst = arith.constant dense<0.000000e+00> : vector<24x128xf32>
    %8 = tpu.matmul %5, %7, %cst {dimension_numbers = #tpu.dot_dimension_numbers<[1], [0], [0], [1], [0, 0, 1, 1], [], []>} : vector<24x8xbf16>, vector<8x128xbf16>, vector<24x128xf32> -> vector<24x128xf32>
    %9 = arith.addf %3, %8 : vector<24x128xf32>
    %c0_9 = arith.constant 0 : index
    %c0_10 = arith.constant 0 : index
    %c1 = arith.constant 1 : index
    %c0_11 = arith.constant 0 : index
    %10 = vector.load %arg3[%c0_9, %c0_10, %c1, %c0_11] : memref<1x1x38x8xbf16, #tpu.memory_space<vmem>>, vector<1x1x24x8xbf16>
    %11 = vector.shape_cast %10 : vector<1x1x24x8xbf16> to vector<24x8xbf16>
    %c0_12 = arith.constant 0 : index
    %c8 = arith.constant 8 : index
    %c0_13 = arith.constant 0 : index
    %12 = vector.load %arg4[%c0_12, %c8, %c0_13] : memref<1x72x128xbf16, #tpu.memory_space<vmem>>, vector<1x8x128xbf16>
    %13 = vector.shape_cast %12 : vector<1x8x128xbf16> to vector<8x128xbf16>
    %cst_14 = arith.constant dense<0.000000e+00> : vector<24x128xf32>
    %14 = tpu.matmul %11, %13, %cst_14 {dimension_numbers = #tpu.dot_dimension_numbers<[1], [0], [0], [1], [0, 0, 1, 1], [], []>} : vector<24x8xbf16>, vector<8x128xbf16>, vector<24x128xf32> -> vector<24x128xf32>
    %15 = arith.addf %9, %14 : vector<24x128xf32>
    %c0_15 = arith.constant 0 : index
    %c0_16 = arith.constant 0 : index
    %c2 = arith.constant 2 : index
    %c0_17 = arith.constant 0 : index
    %16 = vector.load %arg3[%c0_15, %c0_16, %c2, %c0_17] : memref<1x1x38x8xbf16, #tpu.memory_space<vmem>>, vector<1x1x24x8xbf16>
    %17 = vector.shape_cast %16 : vector<1x1x24x8xbf16> to vector<24x8xbf16>
    %c0_18 = arith.constant 0 : index
    %c16 = arith.constant 16 : index
    %c0_19 = arith.constant 0 : index
    %18 = vector.load %arg4[%c0_18, %c16, %c0_19] : memref<1x72x128xbf16, #tpu.memory_space<vmem>>, vector<1x8x128xbf16>
    %19 = vector.shape_cast %18 : vector<1x8x128xbf16> to vector<8x128xbf16>
    %cst_20 = arith.constant dense<0.000000e+00> : vector<24x128xf32>
    %20 = tpu.matmul %17, %19, %cst_20 {dimension_numbers = #tpu.dot_dimension_numbers<[1], [0], [0], [1], [0, 0, 1, 1], [], []>} : vector<24x8xbf16>, vector<8x128xbf16>, vector<24x128xf32> -> vector<24x128xf32>
    %21 = arith.addf %15, %20 : vector<24x128xf32>
    %c0_21 = arith.constant 0 : index
    %c0_22 = arith.constant 0 : index
    %c6 = arith.constant 6 : index
    %c0_23 = arith.constant 0 : index
    %22 = vector.load %arg3[%c0_21, %c0_22, %c6, %c0_23] : memref<1x1x38x8xbf16, #tpu.memory_space<vmem>>, vector<1x1x24x8xbf16>
    %23 = vector.shape_cast %22 : vector<1x1x24x8xbf16> to vector<24x8xbf16>
    %c0_24 = arith.constant 0 : index
    %c24 = arith.constant 24 : index
    %c0_25 = arith.constant 0 : index
    %24 = vector.load %arg4[%c0_24, %c24, %c0_25] : memref<1x72x128xbf16, #tpu.memory_space<vmem>>, vector<1x8x128xbf16>
    %25 = vector.shape_cast %24 : vector<1x8x128xbf16> to vector<8x128xbf16>
    %cst_26 = arith.constant dense<0.000000e+00> : vector<24x128xf32>
    %26 = tpu.matmul %23, %25, %cst_26 {dimension_numbers = #tpu.dot_dimension_numbers<[1], [0], [0], [1], [0, 0, 1, 1], [], []>} : vector<24x8xbf16>, vector<8x128xbf16>, vector<24x128xf32> -> vector<24x128xf32>
    %27 = arith.addf %21, %26 : vector<24x128xf32>
    %c0_27 = arith.constant 0 : index
    %c0_28 = arith.constant 0 : index
    %c7 = arith.constant 7 : index
    %c0_29 = arith.constant 0 : index
    %28 = vector.load %arg3[%c0_27, %c0_28, %c7, %c0_29] : memref<1x1x38x8xbf16, #tpu.memory_space<vmem>>, vector<1x1x24x8xbf16>
    %29 = vector.shape_cast %28 : vector<1x1x24x8xbf16> to vector<24x8xbf16>
    %c0_30 = arith.constant 0 : index
    %c32 = arith.constant 32 : index
    %c0_31 = arith.constant 0 : index
    %30 = vector.load %arg4[%c0_30, %c32, %c0_31] : memref<1x72x128xbf16, #tpu.memory_space<vmem>>, vector<1x8x128xbf16>
    %31 = vector.shape_cast %30 : vector<1x8x128xbf16> to vector<8x128xbf16>
    %cst_32 = arith.constant dense<0.000000e+00> : vector<24x128xf32>
    %32 = tpu.matmul %29, %31, %cst_32 {dimension_numbers = #tpu.dot_dimension_numbers<[1], [0], [0], [1], [0, 0, 1, 1], [], []>} : vector<24x8xbf16>, vector<8x128xbf16>, vector<24x128xf32> -> vector<24x128xf32>
    %33 = arith.addf %27, %32 : vector<24x128xf32>
    %c0_33 = arith.constant 0 : index
    %c0_34 = arith.constant 0 : index
    %c8_35 = arith.constant 8 : index
    %c0_36 = arith.constant 0 : index
    %34 = vector.load %arg3[%c0_33, %c0_34, %c8_35, %c0_36] : memref<1x1x38x8xbf16, #tpu.memory_space<vmem>>, vector<1x1x24x8xbf16>
    %35 = vector.shape_cast %34 : vector<1x1x24x8xbf16> to vector<24x8xbf16>
    %c0_37 = arith.constant 0 : index
    %c40 = arith.constant 40 : index
    %c0_38 = arith.constant 0 : index
    %36 = vector.load %arg4[%c0_37, %c40, %c0_38] : memref<1x72x128xbf16, #tpu.memory_space<vmem>>, vector<1x8x128xbf16>
    %37 = vector.shape_cast %36 : vector<1x8x128xbf16> to vector<8x128xbf16>
    %cst_39 = arith.constant dense<0.000000e+00> : vector<24x128xf32>
    %38 = tpu.matmul %35, %37, %cst_39 {dimension_numbers = #tpu.dot_dimension_numbers<[1], [0], [0], [1], [0, 0, 1, 1], [], []>} : vector<24x8xbf16>, vector<8x128xbf16>, vector<24x128xf32> -> vector<24x128xf32>
    %39 = arith.addf %33, %38 : vector<24x128xf32>
    %c0_40 = arith.constant 0 : index
    %c0_41 = arith.constant 0 : index
    %c12 = arith.constant 12 : index
    %c0_42 = arith.constant 0 : index
    %40 = vector.load %arg3[%c0_40, %c0_41, %c12, %c0_42] : memref<1x1x38x8xbf16, #tpu.memory_space<vmem>>, vector<1x1x24x8xbf16>
    %41 = vector.shape_cast %40 : vector<1x1x24x8xbf16> to vector<24x8xbf16>
    %c0_43 = arith.constant 0 : index
    %c48 = arith.constant 48 : index
    %c0_44 = arith.constant 0 : index
    %42 = vector.load %arg4[%c0_43, %c48, %c0_44] : memref<1x72x128xbf16, #tpu.memory_space<vmem>>, vector<1x8x128xbf16>
    %43 = vector.shape_cast %42 : vector<1x8x128xbf16> to vector<8x128xbf16>
    %cst_45 = arith.constant dense<0.000000e+00> : vector<24x128xf32>
    %44 = tpu.matmul %41, %43, %cst_45 {dimension_numbers = #tpu.dot_dimension_numbers<[1], [0], [0], [1], [0, 0, 1, 1], [], []>} : vector<24x8xbf16>, vector<8x128xbf16>, vector<24x128xf32> -> vector<24x128xf32>
    %45 = arith.addf %39, %44 : vector<24x128xf32>
    %c0_46 = arith.constant 0 : index
    %c0_47 = arith.constant 0 : index
    %c13 = arith.constant 13 : index
    %c0_48 = arith.constant 0 : index
    %46 = vector.load %arg3[%c0_46, %c0_47, %c13, %c0_48] : memref<1x1x38x8xbf16, #tpu.memory_space<vmem>>, vector<1x1x24x8xbf16>
    %47 = vector.shape_cast %46 : vector<1x1x24x8xbf16> to vector<24x8xbf16>
    %c0_49 = arith.constant 0 : index
    %c56 = arith.constant 56 : index
    %c0_50 = arith.constant 0 : index
    %48 = vector.load %arg4[%c0_49, %c56, %c0_50] : memref<1x72x128xbf16, #tpu.memory_space<vmem>>, vector<1x8x128xbf16>
    %49 = vector.shape_cast %48 : vector<1x8x128xbf16> to vector<8x128xbf16>
    %cst_51 = arith.constant dense<0.000000e+00> : vector<24x128xf32>
    %50 = tpu.matmul %47, %49, %cst_51 {dimension_numbers = #tpu.dot_dimension_numbers<[1], [0], [0], [1], [0, 0, 1, 1], [], []>} : vector<24x8xbf16>, vector<8x128xbf16>, vector<24x128xf32> -> vector<24x128xf32>
    %51 = arith.addf %45, %50 : vector<24x128xf32>
    %c0_52 = arith.constant 0 : index
    %c0_53 = arith.constant 0 : index
    %c14 = arith.constant 14 : index
    %c0_54 = arith.constant 0 : index
    %52 = vector.load %arg3[%c0_52, %c0_53, %c14, %c0_54] : memref<1x1x38x8xbf16, #tpu.memory_space<vmem>>, vector<1x1x24x8xbf16>
    %53 = vector.shape_cast %52 : vector<1x1x24x8xbf16> to vector<24x8xbf16>
    %c0_55 = arith.constant 0 : index
    %c64 = arith.constant 64 : index
    %c0_56 = arith.constant 0 : index
    %54 = vector.load %arg4[%c0_55, %c64, %c0_56] : memref<1x72x128xbf16, #tpu.memory_space<vmem>>, vector<1x8x128xbf16>
    %55 = vector.shape_cast %54 : vector<1x8x128xbf16> to vector<8x128xbf16>
    %cst_57 = arith.constant dense<0.000000e+00> : vector<24x128xf32>
    %56 = tpu.matmul %53, %55, %cst_57 {dimension_numbers = #tpu.dot_dimension_numbers<[1], [0], [0], [1], [0, 0, 1, 1], [], []>} : vector<24x8xbf16>, vector<8x128xbf16>, vector<24x128xf32> -> vector<24x128xf32>
    %57 = arith.addf %51, %56 : vector<24x128xf32>
    %c0_58 = arith.constant 0 : index
    %c0_59 = arith.constant 0 : index
    %58 = vector.load %arg10[%c0_58, %c0_59] : memref<24x128xf32, #tpu.memory_space<vmem>>, vector<24x128xf32>
    tpu.vector_store %arg10[%c0_58, %c0_59], %57 {strides = array<i32>} : memref<24x128xf32, #tpu.memory_space<vmem>>, vector<24x128xf32>,
    %c2_i32 = arith.constant 2 : i32
    %59 = arith.cmpi eq, %arg2, %c2_i32 : i32
    %60 = arith.extui %59 : i1 to i32
    %c0_i32_60 = arith.constant 0 : i32
    %61 = arith.cmpi ne, %60, %c0_i32_60 : i32
    scf.if %61 {
      %c0_61 = arith.constant 0 : index
      %c0_62 = arith.constant 0 : index
      %62 = vector.load %arg10[%c0_61, %c0_62] : memref<24x128xf32, #tpu.memory_space<vmem>>, vector<24x128xf32>
      %c0_63 = arith.constant 0 : index
      %c0_64 = arith.constant 0 : index
      %c0_65 = arith.constant 0 : index
      %c0_66 = arith.constant 0 : index
      %63 = vector.load %arg7[%c0_63, %c0_64, %c0_65, %c0_66] : memref<1x1x24x128xf32, #tpu.memory_space<vmem>>, vector<1x1x24x128xf32>
      %64 = vector.shape_cast %63 : vector<1x1x24x128xf32> to vector<24x128xf32>
      %65 = vector.shape_cast %62 : vector<24x128xf32> to vector<1x1x24x128xf32>
      tpu.vector_store %arg7[%c0_63, %c0_64, %c0_65, %c0_66], %65 {strides = array<i32>} : memref<1x1x24x128xf32, #tpu.memory_space<vmem>>, vector<1x1x24x128xf32>,
      %c0_67 = arith.constant 0 : index
      %c0_68 = arith.constant 0 : index
      %66 = vector.load %arg6[%c0_67, %c0_68] : memref<24x1xf32, #tpu.memory_space<vmem>>, vector<24x1xf32>
      %67 = vector.broadcast %66 : vector<24x1xf32> to vector<24x128xf32>
      %68 = arith.mulf %62, %67 : vector<24x128xf32>
      %cst_69 = arith.constant dense<0.000000e+00> : vector<128xf32>
      %69 = vector.multi_reduction <add>, %68, %cst_69 [0] : vector<24x128xf32> to vector<128xf32>
      %70 = vector.shape_cast %69 : vector<128xf32> to vector<1x128xf32>
      %c0_70 = arith.constant 0 : index
      %c0_71 = arith.constant 0 : index
      %c0_72 = arith.constant 0 : index
      %c0_73 = arith.constant 0 : index
      %71 = vector.load %arg8[%c0_70, %c0_71, %c0_72, %c0_73] : memref<1x1x1x128xf32, #tpu.memory_space<vmem>>, vector<1x1x1x128xf32>
      %72 = vector.shape_cast %71 : vector<1x1x1x128xf32> to vector<1x128xf32>
      %73 = vector.shape_cast %70 : vector<1x128xf32> to vector<1x1x1x128xf32>
      tpu.vector_store %arg8[%c0_70, %c0_71, %c0_72, %c0_73], %73 {strides = array<i32>} : memref<1x1x1x128xf32, #tpu.memory_space<vmem>>, vector<1x1x1x128xf32>,
      %74 = arith.mulf %68, %62 : vector<24x128xf32>
      %cst_74 = arith.constant dense<0.000000e+00> : vector<128xf32>
      %75 = vector.multi_reduction <add>, %74, %cst_74 [0] : vector<24x128xf32> to vector<128xf32>
      %76 = vector.shape_cast %75 : vector<128xf32> to vector<1x128xf32>
      %c0_75 = arith.constant 0 : index
      %c0_76 = arith.constant 0 : index
      %c0_77 = arith.constant 0 : index
      %c0_78 = arith.constant 0 : index
      %77 = vector.load %arg9[%c0_75, %c0_76, %c0_77, %c0_78] : memref<1x1x1x128xf32, #tpu.memory_space<vmem>>, vector<1x1x1x128xf32>
      %78 = vector.shape_cast %77 : vector<1x1x1x128xf32> to vector<1x128xf32>
      %79 = vector.shape_cast %76 : vector<1x128xf32> to vector<1x1x1x128xf32>
      tpu.vector_store %arg9[%c0_75, %c0_76, %c0_77, %c0_78], %79 {strides = array<i32>} : memref<1x1x1x128xf32, #tpu.memory_space<vmem>>, vector<1x1x1x128xf32>,
    } else {
    }
    return
  }
  func.func @transform_0(%arg0: i32, %arg1: i32, %arg2: i32) -> (i32, i32, i32, i32) {
    %0 = arith.addi %arg1, %arg2 : i32
    %c0_i32 = arith.constant 0 : i32
    %c0_i32_0 = arith.constant 0 : i32
    %c0_i32_1 = arith.constant 0 : i32
    return %arg0, %0, %c0_i32, %c0_i32_0 : i32, i32, i32, i32
  }
  func.func @transform_1(%arg0: i32, %arg1: i32, %arg2: i32) -> (i32, i32, i32) {
    %c0_i32 = arith.constant 0 : i32
    %c0_i32_0 = arith.constant 0 : i32
    %c0_i32_1 = arith.constant 0 : i32
    return %arg2, %c0_i32, %c0_i32_0 : i32, i32, i32
  }
  func.func @transform_2(%arg0: i32, %arg1: i32, %arg2: i32) -> (i32, i32) {
    %c0_i32 = arith.constant 0 : i32
    %c0_i32_0 = arith.constant 0 : i32
    %c0_i32_1 = arith.constant 0 : i32
    return %c0_i32, %c0_i32_0 : i32, i32
  }
  func.func @transform_3(%arg0: i32, %arg1: i32, %arg2: i32) -> (i32, i32) {
    %c0_i32 = arith.constant 0 : i32
    %c0_i32_0 = arith.constant 0 : i32
    %c0_i32_1 = arith.constant 0 : i32
    return %c0_i32, %c0_i32_0 : i32, i32
  }
  func.func @transform_4(%arg0: i32, %arg1: i32, %arg2: i32) -> (i32, i32, i32, i32) {
    %c0_i32 = arith.constant 0 : i32
    %c0_i32_0 = arith.constant 0 : i32
    %c0_i32_1 = arith.constant 0 : i32
    return %arg0, %arg1, %c0_i32, %c0_i32_0 : i32, i32, i32, i32
  }
  func.func @transform_5(%arg0: i32, %arg1: i32, %arg2: i32) -> (i32, i32, i32, i32) {
    %c0_i32 = arith.constant 0 : i32
    %c0_i32_0 = arith.constant 0 : i32
    %c0_i32_1 = arith.constant 0 : i32
    return %arg0, %arg1, %c0_i32, %c0_i32_0 : i32, i32, i32, i32
  }
  func.func @transform_6(%arg0: i32, %arg1: i32, %arg2: i32) -> (i32, i32, i32, i32) {
    %c0_i32 = arith.constant 0 : i32
    %c0_i32_0 = arith.constant 0 : i32
    %c0_i32_1 = arith.constant 0 : i32
    return %arg0, %arg1, %c0_i32, %c0_i32_0 : i32, i32, i32, i32
  }
}

</mosaic_0001>

<llo_original>
// kernel: double_conv_block.5
$region0: #{double_conv_block.5}
  #allocation0 [shape = 'u32[]', space=smem, size = 0x4, offset = 0x4, fixed_abs, tag = 'smem constant byte address 0x4 - core index']
  #allocation1 [shape = 'u32[144,128]{1,0:T(1,128)}', space=vmem, size = 0x12000, scoped, tag = 'internal scratch']
  %s0 = inlined_call_operand.vmem [shape: f32[2,6,48,128], index: 0, kind: input, shape index: {}]
  %s1 = inlined_call_operand.vmem [shape: f32[1,128], index: 1, kind: input, shape index: {}]
  %s2 = inlined_call_operand.vmem [shape: f32[1,128], index: 2, kind: input, shape index: {}]
  %s3 = inlined_call_operand.vmem [shape: bf16[2,6,48,128], index: 3, kind: output, shape index: {}]
  %s4 = sld [smem:[#allocation0]]
  $region45: #{double_conv_block.5} parent=0
    _
  %s6 = ssub.s32 1, %s4
  %s7 = scalar_select 0, %s6, %s4
  loop: start=0, step=1, limit=14
  $region2: #{double_conv_block.5} parent=0 // loop_pre_header
    _
  $region3: #{double_conv_block.5} parent=0 // loop_header
    %s9 = sphi 0, %s13
    %p10 = scmp.ge.s32.totalorder %s9, 14
    %s16 = sphi 0, %s28
    %s17 = sphi 0, %s24
    %s18 = sphi 0, %s16
    %s19 = sphi 0, %s17
    %s20 = sphi 0, %s18
    %s21 = sphi 0, %s19
    %s33 = sphi 0, %s35
    %s36 = sphi 0, %s33
    %s37 = sphi 0, %s36
    %s53 = sphi 0, %s37
    %s57 = sphi 0, %s57
    %s59 = sphi 0, %s57
    %s60 = sphi 0, %s59
    %s74 = sphi 0, %s60
    %s78 = sphi 0, %s78
    %s80 = sphi 0, %s78
    %s81 = sphi 0, %s80
    %s95 = sphi 0, %s81
    %s103 = sphi 0, %s105
    %s106 = sphi 0, %s103
    %s107 = sphi 0, %s106
    %s123 = sphi 0, %s107
  $region4: #{double_conv_block.5} parent=0 // loop_header_branch
    %12 = sbr.rel (%p10) target = $region8
  $region5: #{double_conv_block.5} parent=0 // loop_body
    %s14 = ssub.s32 %s9, 1
    %s15 = ssub.s32 %s9, 2
    %s22 = sadd.s32 1, %s17
    %p23 = scmp.ge.s32.totalorder %s22, 6
    %s24 = scalar_select %p23, 0, %s22
    %s25 = sadd.s32 1, %s16
    %s26 = scalar_select %p23, %s25, %s16
    %p27 = scmp.ge.s32.totalorder %s26, 2
    %s28 = scalar_select %p27, 0, %s26
    %s29 = ssub.s32 %s16, %s28
    %s30 = ssub.s32 %s17, %s24
    %s31 = sor.u32 %s29, %s30
    %p32 = scmp.eq.s32.totalorder %s31, 0
    %s34 = sadd.s32 %s33, 1
    %s35 = scalar_select %p32, %s33, %s34
    %p38 = pneg %p32
    %p39 = scmp.eq.s32.totalorder %s9, 11
    %p40 = por %p38, %p39
    %p41 = scmp.ne.s32.totalorder %s33, %s36
    %p42 = scmp.eq.s32.totalorder %s9, 0
    %p43 = por %p41, %p42
    %p44 = scmp.ne.s32.totalorder %s33, %s36
    %p45 = scmp.eq.s32.totalorder %s14, 11
    %p46 = por %p44, %p45
    %p47 = scmp.ne.s32.totalorder %s36, %s37
    %p48 = scmp.eq.s32.totalorder %s14, 0
    %p49 = por %p47, %p48
    %p50 = scmp.ne.s32.totalorder %s36, %s37
    %p51 = scmp.eq.s32.totalorder %s15, 11
    %p52 = por %p50, %p51
    %p54 = scmp.ne.s32.totalorder %s37, %s53
    %p55 = scmp.eq.s32.totalorder %s15, 0
    %p56 = por %p54, %p55
    %s58 = sadd.s32 %s57, 1
    %p61 = scmp.eq.s32.totalorder %s9, 11
    %p62 = scmp.ne.s32.totalorder %s57, %s59
    %p63 = scmp.eq.s32.totalorder %s9, 0
    %p64 = por %p62, %p63
    %p65 = scmp.ne.s32.totalorder %s57, %s59
    %p66 = scmp.eq.s32.totalorder %s14, 11
    %p67 = por %p65, %p66
    %p68 = scmp.ne.s32.totalorder %s59, %s60
    %p69 = scmp.eq.s32.totalorder %s14, 0
    %p70 = por %p68, %p69
    %p71 = scmp.ne.s32.totalorder %s59, %s60
    %p72 = scmp.eq.s32.totalorder %s15, 11
    %p73 = por %p71, %p72
    %p75 = scmp.ne.s32.totalorder %s60, %s74
    %p76 = scmp.eq.s32.totalorder %s15, 0
    %p77 = por %p75, %p76
    %s79 = sadd.s32 %s78, 1
    %p82 = scmp.eq.s32.totalorder %s9, 11
    %p83 = scmp.ne.s32.totalorder %s78, %s80
    %p84 = scmp.eq.s32.totalorder %s9, 0
    %p85 = por %p83, %p84
    %p86 = scmp.ne.s32.totalorder %s78, %s80
    %p87 = scmp.eq.s32.totalorder %s14, 11
    %p88 = por %p86, %p87
    %p89 = scmp.ne.s32.totalorder %s80, %s81
    %p90 = scmp.eq.s32.totalorder %s14, 0
    %p91 = por %p89, %p90
    %p92 = scmp.ne.s32.totalorder %s80, %s81
    %p93 = scmp.eq.s32.totalorder %s15, 11
    %p94 = por %p92, %p93
    %p96 = scmp.ne.s32.totalorder %s81, %s95
    %p97 = scmp.eq.s32.totalorder %s15, 0
    %p98 = por %p96, %p97
    %s99 = ssub.s32 %s16, %s28
    %s100 = ssub.s32 %s17, %s24
    %s101 = sor.u32 %s99, %s100
    %p102 = scmp.eq.s32.totalorder %s101, 0
    %s104 = sadd.s32 %s103, 1
    %s105 = scalar_select %p102, %s103, %s104
    %p108 = pneg %p102
    %p109 = scmp.eq.s32.totalorder %s9, 11
    %p110 = por %p108, %p109
    %p111 = scmp.ne.s32.totalorder %s103, %s106
    %p112 = scmp.eq.s32.totalorder %s9, 0
    %p113 = por %p111, %p112
    %p114 = scmp.ne.s32.totalorder %s103, %s106
    %p115 = scmp.eq.s32.totalorder %s14, 11
    %p116 = por %p114, %p115
    %p117 = scmp.ne.s32.totalorder %s106, %s107
    %p118 = scmp.eq.s32.totalorder %s14, 0
    %p119 = por %p117, %p118
    %p120 = scmp.ne.s32.totalorder %s106, %s107
    %p121 = scmp.eq.s32.totalorder %s15, 11
    %p122 = por %p120, %p121
    %p124 = scmp.ne.s32.totalorder %s107, %s123
    %p125 = scmp.eq.s32.totalorder %s15, 0
    %p126 = por %p124, %p125
    %p127 = scmp.le.s32.totalorder 1, %s9
    %p128 = scmp.lt.s32.totalorder %s9, 13
    %p129 = pnand %p127, %p128
    %p130 = pneg %p129
    // Predicated region
    $region9: #{double_conv_block.5} parent=5 // pred_check
      _
    $region10: #{double_conv_block.5} parent=5 // pred_check_branch
      %132 = sbr.rel (%p129) target = $region12
    $region11: #{double_conv_block.5} parent=5 // pred_region
      %s133 = ssub.s32 %s9, 1
      // Predicated region
      $region13: #{double_conv_block.5} parent=11 // pred_check
        %p134 = pneg %p70
      $region14: #{double_conv_block.5} parent=11 // pred_check_branch
        %136 = sbr.rel (%p134) target = $region16
      $region15: #{double_conv_block.5} parent=11 // pred_region
        _
      $region16: #{double_conv_block.5} parent=11 // pred_fallthru
        _
      // Predicated region
      $region17: #{double_conv_block.5} parent=11 // pred_check
        %p137 = pneg %p91
      $region18: #{double_conv_block.5} parent=11 // pred_check_branch
        %139 = sbr.rel (%p137) target = $region20
      $region19: #{double_conv_block.5} parent=11 // pred_region
        _
      $region20: #{double_conv_block.5} parent=11 // pred_fallthru
        _
    $region12: #{double_conv_block.5} parent=5 // pred_fallthru
      _
    %p140 = scmp.lt.s32.totalorder %s9, 12
    // Predicated region
    $region21: #{double_conv_block.5} parent=5 // pred_check
      %p141 = pneg %p140
    $region22: #{double_conv_block.5} parent=5 // pred_check_branch
      %143 = sbr.rel (%p141) target = $region24
    $region23: #{double_conv_block.5} parent=5 // pred_region
      // Predicated region
      $region25: #{double_conv_block.5} parent=23 // pred_check
        %p144 = pneg %p43
      $region26: #{double_conv_block.5} parent=23 // pred_check_branch
        %146 = sbr.rel (%p144) target = $region28
      $region27: #{double_conv_block.5} parent=23 // pred_region
        %p147 = scmp.lt.s32.totalorder %s16, 1
        %s148 = scalar_select %p147, %s16, 1
        %p149 = scmp.lt.s32.totalorder %s17, 5
        %s150 = scalar_select %p149, %s17, 5
        %s151 = smul.addr %s150, 6
        %s152 = smul.addr %s148, 36
        %s153 = sadd.s32 %s151, %s152
        %s154 = smul.addr %s153, 8
        %s155 = scalar_lea.vmem %s0, %s154
      $region28: #{double_conv_block.5} parent=23 // pred_fallthru
        _
    $region24: #{double_conv_block.5} parent=5 // pred_fallthru
      _
    %p156 = scmp.le.s32.totalorder 1, %s9
    %p157 = scmp.lt.s32.totalorder %s9, 13
    %p158 = pnand %p156, %p157
    %p159 = pneg %p158
    // Predicated region
    $region29: #{double_conv_block.5} parent=5 // pred_check
      _
    $region30: #{double_conv_block.5} parent=5 // pred_check_branch
      %161 = sbr.rel (%p158) target = $region32
    $region31: #{double_conv_block.5} parent=5 // pred_region
      %s162 = ssub.s32 %s9, 1
      %p163 = scmp.lt.s32.totalorder %s18, 1
      %s164 = scalar_select %p163, %s18, 1
      %p165 = scmp.lt.s32.totalorder %s19, 5
      %s166 = scalar_select %p165, %s19, 5
      %s167 = smul.addr %s166, 6
      %s168 = smul.addr %s164, 36
      %s169 = sadd.s32 %s167, %s168
      %s170 = smul.addr %s169, 8
      %s171 = scalar_lea.vmem %s0, %s170
      %p172 = pneg %p49
      %p173 = pneg %p46
      %p174 = pneg %p70
      %p175 = pneg %p67
      %p176 = pneg %p91
      %p177 = pneg %p88
      %p178 = pneg %p119
      %p179 = pneg %p116
      %p180 = scmp.lt.s32.totalorder %s18, 1
      %s181 = scalar_select %p180, %s18, 1
      %p182 = scmp.lt.s32.totalorder %s19, 5
      %s183 = scalar_select %p182, %s19, 5
      %s184 = smul.addr %s183, 6
      %s185 = smul.addr %s181, 36
      %s186 = sadd.s32 %s184, %s185
      %s187 = smul.addr %s186, 4
      %s188 = scalar_lea.vmem %s3, %s187
      %p189 = scmp.lt.s32.totalorder %s18, 1
      %s190 = scalar_select %p189, %s18, 1
      %p191 = scmp.lt.s32.totalorder %s19, 5
      %s192 = scalar_select %p191, %s19, 5
      %s193 = smul.addr %s192, 6
      %s194 = smul.addr %s190, 36
      %s195 = sadd.s32 %s193, %s194
      %s196 = smul.addr %s195, 8
      %s197 = scalar_lea.vmem %s0, %s196
      %p198 = scmp.lt.s32.totalorder %s18, 1
      %s199 = scalar_select %p198, %s18, 1
      %p200 = scmp.lt.s32.totalorder %s19, 5
      %s201 = scalar_select %p200, %s19, 5
      %s202 = smul.addr %s201, 6
      %s203 = smul.addr %s199, 36
      %s204 = sadd.s32 %s202, %s203
      %s205 = smul.addr %s204, 4
      %s206 = scalar_lea.vmem %s3, %s205
      %v207 = vld [vmem:[%s197] sm:$0xff]
      %v208 = vld [vmem:[%s197 + $0x8] sm:$0xff]
      %v209 = vld [vmem:[%s197 + $0x10] sm:$0xff]
      %v210 = vld [vmem:[%s197 + $0x18] sm:$0xff]
      %v211 = vld [vmem:[%s197 + $0x20] sm:$0xff]
      %v212 = vld [vmem:[%s197 + $0x28] sm:$0xff]
      %v213 = vld [vmem:[%s1] sm:$0x1]
      %v215 = vlaneseq
      %v216 = vshrl.u32 %v215, 7
      %v217 = vsub.s32 0, %v216
      %v218 = vrot.slane %v213, %v217
      %v220 = vmul.f32 %v207, %v218
      %v221 = vmul.f32 %v208, %v218
      %v222 = vmul.f32 %v209, %v218
      %v223 = vmul.f32 %v210, %v218
      %v224 = vmul.f32 %v211, %v218
      %v225 = vmul.f32 %v212, %v218
      %v226 = vld [vmem:[%s2] sm:$0x1]
      %v228 = vlaneseq
      %v229 = vshrl.u32 %v228, 7
      %v230 = vsub.s32 0, %v229
      %v231 = vrot.slane %v226, %v230
      %v233 = vadd.f32 %v220, %v231
      %v234 = vadd.f32 %v221, %v231
      %v235 = vadd.f32 %v222, %v231
      %v236 = vadd.f32 %v223, %v231
      %v237 = vadd.f32 %v224, %v231
      %v238 = vadd.f32 %v225, %v231
      %v239 = vmax.f32 %v233, 0.0
      %v240 = vmax.f32 %v234, 0.0
      %v241 = vmax.f32 %v235, 0.0
      %v242 = vmax.f32 %v236, 0.0
      %v243 = vmax.f32 %v237, 0.0
      %v244 = vmax.f32 %v238, 0.0
      %v245 = vpack.c.bf16 %v240, %v239
      %v246 = vpack.c.bf16 %v242, %v241
      %v247 = vpack.c.bf16 %v244, %v243
      %v251 = vunpack.c.l.b16 %v245
      %v252 = vunpack.c.h.b16 %v245
      %v253 = vunpack.c.l.b16 %v246
      %v254 = vunpack.c.h.b16 %v246
      %v255 = vunpack.c.l.b16 %v247
      %v256 = vunpack.c.h.b16 %v247
      %v257 = vpack.c.b16 %v251, %v251
      %v258 = vpack.c.b16 %v252, %v252
      %v259 = vpack.c.b16 %v253, %v253
      %v260 = vpack.c.b16 %v254, %v254
      %v261 = vpack.c.b16 %v255, %v255
      %v262 = vpack.c.b16 %v256, %v256
      %269 = vst [vmem:[%s206] sm:$0xf] %v257
      %270 = vst [vmem:[%s206 + $0x4] sm:$0xf] %v258
      %271 = vst [vmem:[%s206 + $0x8] sm:$0xf] %v259
      %272 = vst [vmem:[%s206 + $0xc] sm:$0xf] %v260
      %273 = vst [vmem:[%s206 + $0x10] sm:$0xf] %v261
      %274 = vst [vmem:[%s206 + $0x14] sm:$0xf] %v262
      %p275 = scmp.lt.s32.totalorder %s18, 1
      %s276 = scalar_select %p275, %s18, 1
      %p277 = scmp.lt.s32.totalorder %s19, 5
      %s278 = scalar_select %p277, %s19, 5
      %s279 = smul.addr %s278, 6
      %s280 = smul.addr %s276, 36
      %s281 = sadd.s32 %s279, %s280
      %s282 = smul.addr %s281, 4
      %s283 = scalar_lea.vmem %s3, %s282
      // Predicated region
      $region33: #{double_conv_block.5} parent=31 // pred_check
        %p284 = pneg %p116
      $region34: #{double_conv_block.5} parent=31 // pred_check_branch
        %286 = sbr.rel (%p284) target = $region36
      $region35: #{double_conv_block.5} parent=31 // pred_region
        _
      $region36: #{double_conv_block.5} parent=31 // pred_fallthru
        _
    $region32: #{double_conv_block.5} parent=5 // pred_fallthru
      _
    %p287 = scmp.le.s32.totalorder 2, %s9
    // Predicated region
    $region37: #{double_conv_block.5} parent=5 // pred_check
      %p288 = pneg %p287
    $region38: #{double_conv_block.5} parent=5 // pred_check_branch
      %290 = sbr.rel (%p288) target = $region40
    $region39: #{double_conv_block.5} parent=5 // pred_region
      %s291 = ssub.s32 %s9, 2
      // Predicated region
      $region41: #{double_conv_block.5} parent=39 // pred_check
        %p292 = pneg %p122
      $region42: #{double_conv_block.5} parent=39 // pred_check_branch
        %294 = sbr.rel (%p292) target = $region44
      $region43: #{double_conv_block.5} parent=39 // pred_region
        %p295 = scmp.lt.s32.totalorder %s20, 1
        %s296 = scalar_select %p295, %s20, 1
        %p297 = scmp.lt.s32.totalorder %s21, 5
        %s298 = scalar_select %p297, %s21, 5
        %s299 = smul.addr %s298, 6
        %s300 = smul.addr %s296, 36
        %s301 = sadd.s32 %s299, %s300
        %s302 = smul.addr %s301, 4
        %s303 = scalar_lea.vmem %s3, %s302
      $region44: #{double_conv_block.5} parent=39 // pred_fallthru
        _
    $region40: #{double_conv_block.5} parent=5 // pred_fallthru
      _
  $region6: #{double_conv_block.5} parent=0 // loop_footer
    %s13 = sadd.s32 1, %s9
  $region7: #{double_conv_block.5} parent=0 // loop_footer_branch
    %8 = sbr.rel target = $region3
  $region8: #{double_conv_block.5} parent=0 // loop_exit
    _

// kernel: double_conv_block.4
$region0: #{double_conv_block.4}
  #allocation0 [shape = 'u32[]', space=smem, size = 0x4, offset = 0x4, fixed_abs, tag = 'smem constant byte address 0x4 - core index']
  #allocation1 [shape = 'u32[144,128]{1,0:T(1,128)}', space=vmem, size = 0x12000, scoped, tag = 'internal scratch']
  #allocation2 [shape = 'f32[48,128]{1,0:T(8,128)}', space=vmem, size = 0x6000, scoped, tag = 'scratch operand']
  %s0 = inlined_call_operand.vmem [shape: bf16[2,8,66,4], index: 0, kind: input, shape index: {}]
  %s1 = inlined_call_operand.vmem [shape: bf16[3,36,128], index: 1, kind: input, shape index: {}]
  %s2 = inlined_call_operand.vmem [shape: f32[1,128], index: 2, kind: input, shape index: {}]
  %s3 = inlined_call_operand.vmem [shape: f32[48,1], index: 3, kind: input, shape index: {}]
  %s4 = inlined_call_operand.vmem [shape: f32[2,6,48,128], index: 4, kind: output, shape index: {0}]
  %s5 = inlined_call_operand.vmem [shape: f32[2,6,1,128], index: 5, kind: output, shape index: {1}]
  %s6 = inlined_call_operand.vmem [shape: f32[2,6,1,128], index: 6, kind: output, shape index: {2}]
  %7 = xla_tuple %s4, %s5, %s6
  %s8 = sld [smem:[#allocation0]]
  $region73: #{double_conv_block.4} parent=0
    _
  %s10 = ssub.s32 1, %s8
  %s11 = scalar_select 0, %s10, %s8
  loop: start=0, step=1, limit=38
  $region2: #{double_conv_block.4} parent=0 // loop_pre_header
    _
  $region3: #{double_conv_block.4} parent=0 // loop_header
    %s13 = sphi 0, %s17
    %p14 = scmp.ge.s32.totalorder %s13, 38
    %s20 = sphi 0, %s39
    %s21 = sphi 0, %s35
    %s22 = sphi 0, %s31
    %s23 = sphi 0, %s20
    %s24 = sphi 0, %s21
    %s25 = sphi 0, %s22
    %s26 = sphi 0, %s23
    %s27 = sphi 0, %s24
    %s28 = sphi 0, %s25
    %s46 = sphi 0, %s48
    %s49 = sphi 0, %s46
    %s50 = sphi 0, %s49
    %s66 = sphi 0, %s50
    %s72 = sphi 0, %s74
    %s75 = sphi 0, %s72
    %s76 = sphi 0, %s75
    %s92 = sphi 0, %s76
    %s96 = sphi 0, %s96
    %s98 = sphi 0, %s96
    %s99 = sphi 0, %s98
    %s113 = sphi 0, %s99
    %s117 = sphi 0, %s117
    %s119 = sphi 0, %s117
    %s120 = sphi 0, %s119
    %s134 = sphi 0, %s120
    %s142 = sphi 0, %s144
    %s145 = sphi 0, %s142
    %s146 = sphi 0, %s145
    %s162 = sphi 0, %s146
    %s170 = sphi 0, %s172
    %s173 = sphi 0, %s170
    %s174 = sphi 0, %s173
    %s190 = sphi 0, %s174
    %s198 = sphi 0, %s200
    %s201 = sphi 0, %s198
    %s202 = sphi 0, %s201
    %s218 = sphi 0, %s202
  $region4: #{double_conv_block.4} parent=0 // loop_header_branch
    %16 = sbr.rel (%p14) target = $region8
  $region5: #{double_conv_block.4} parent=0 // loop_body
    %s18 = ssub.s32 %s13, 1
    %s19 = ssub.s32 %s13, 2
    %s29 = sadd.s32 1, %s22
    %p30 = scmp.ge.s32.totalorder %s29, 3
    %s31 = scalar_select %p30, 0, %s29
    %s32 = sadd.s32 1, %s21
    %s33 = scalar_select %p30, %s32, %s21
    %p34 = scmp.ge.s32.totalorder %s33, 6
    %s35 = scalar_select %p34, 0, %s33
    %s36 = sadd.s32 1, %s20
    %s37 = scalar_select %p34, %s36, %s20
    %p38 = scmp.ge.s32.totalorder %s37, 2
    %s39 = scalar_select %p38, 0, %s37
    %s40 = sadd.s32 %s21, %s22
    %s41 = sadd.s32 %s35, %s31
    %s42 = ssub.s32 %s20, %s39
    %s43 = ssub.s32 %s40, %s41
    %s44 = sor.u32 %s42, %s43
    %p45 = scmp.eq.s32.totalorder %s44, 0
    %s47 = sadd.s32 %s46, 1
    %s48 = scalar_select %p45, %s46, %s47
    %p51 = pneg %p45
    %p52 = scmp.eq.s32.totalorder %s13, 35
    %p53 = por %p51, %p52
    %p54 = scmp.ne.s32.totalorder %s46, %s49
    %p55 = scmp.eq.s32.totalorder %s13, 0
    %p56 = por %p54, %p55
    %p57 = scmp.ne.s32.totalorder %s46, %s49
    %p58 = scmp.eq.s32.totalorder %s18, 35
    %p59 = por %p57, %p58
    %p60 = scmp.ne.s32.totalorder %s49, %s50
    %p61 = scmp.eq.s32.totalorder %s18, 0
    %p62 = por %p60, %p61
    %p63 = scmp.ne.s32.totalorder %s49, %s50
    %p64 = scmp.eq.s32.totalorder %s19, 35
    %p65 = por %p63, %p64
    %p67 = scmp.ne.s32.totalorder %s50, %s66
    %p68 = scmp.eq.s32.totalorder %s19, 0
    %p69 = por %p67, %p68
    %s70 = ssub.s32 %s22, %s31
    %p71 = scmp.eq.s32.totalorder %s70, 0
    %s73 = sadd.s32 %s72, 1
    %s74 = scalar_select %p71, %s72, %s73
    %p77 = pneg %p71
    %p78 = scmp.eq.s32.totalorder %s13, 35
    %p79 = por %p77, %p78
    %p80 = scmp.ne.s32.totalorder %s72, %s75
    %p81 = scmp.eq.s32.totalorder %s13, 0
    %p82 = por %p80, %p81
    %p83 = scmp.ne.s32.totalorder %s72, %s75
    %p84 = scmp.eq.s32.totalorder %s18, 35
    %p85 = por %p83, %p84
    %p86 = scmp.ne.s32.totalorder %s75, %s76
    %p87 = scmp.eq.s32.totalorder %s18, 0
    %p88 = por %p86, %p87
    %p89 = scmp.ne.s32.totalorder %s75, %s76
    %p90 = scmp.eq.s32.totalorder %s19, 35
    %p91 = por %p89, %p90
    %p93 = scmp.ne.s32.totalorder %s76, %s92
    %p94 = scmp.eq.s32.totalorder %s19, 0
    %p95 = por %p93, %p94
    %s97 = sadd.s32 %s96, 1
    %p100 = scmp.eq.s32.totalorder %s13, 35
    %p101 = scmp.ne.s32.totalorder %s96, %s98
    %p102 = scmp.eq.s32.totalorder %s13, 0
    %p103 = por %p101, %p102
    %p104 = scmp.ne.s32.totalorder %s96, %s98
    %p105 = scmp.eq.s32.totalorder %s18, 35
    %p106 = por %p104, %p105
    %p107 = scmp.ne.s32.totalorder %s98, %s99
    %p108 = scmp.eq.s32.totalorder %s18, 0
    %p109 = por %p107, %p108
    %p110 = scmp.ne.s32.totalorder %s98, %s99
    %p111 = scmp.eq.s32.totalorder %s19, 35
    %p112 = por %p110, %p111
    %p114 = scmp.ne.s32.totalorder %s99, %s113
    %p115 = scmp.eq.s32.totalorder %s19, 0
    %p116 = por %p114, %p115
    %s118 = sadd.s32 %s117, 1
    %p121 = scmp.eq.s32.totalorder %s13, 35
    %p122 = scmp.ne.s32.totalorder %s117, %s119
    %p123 = scmp.eq.s32.totalorder %s13, 0
    %p124 = por %p122, %p123
    %p125 = scmp.ne.s32.totalorder %s117, %s119
    %p126 = scmp.eq.s32.totalorder %s18, 35
    %p127 = por %p125, %p126
    %p128 = scmp.ne.s32.totalorder %s119, %s120
    %p129 = scmp.eq.s32.totalorder %s18, 0
    %p130 = por %p128, %p129
    %p131 = scmp.ne.s32.totalorder %s119, %s120
    %p132 = scmp.eq.s32.totalorder %s19, 35
    %p133 = por %p131, %p132
    %p135 = scmp.ne.s32.totalorder %s120, %s134
    %p136 = scmp.eq.s32.totalorder %s19, 0
    %p137 = por %p135, %p136
    %s138 = ssub.s32 %s20, %s39
    %s139 = ssub.s32 %s21, %s35
    %s140 = sor.u32 %s138, %s139
    %p141 = scmp.eq.s32.totalorder %s140, 0
    %s143 = sadd.s32 %s142, 1
    %s144 = scalar_select %p141, %s142, %s143
    %p147 = pneg %p141
    %p148 = scmp.eq.s32.totalorder %s13, 35
    %p149 = por %p147, %p148
    %p150 = scmp.ne.s32.totalorder %s142, %s145
    %p151 = scmp.eq.s32.totalorder %s13, 0
    %p152 = por %p150, %p151
    %p153 = scmp.ne.s32.totalorder %s142, %s145
    %p154 = scmp.eq.s32.totalorder %s18, 35
    %p155 = por %p153, %p154
    %p156 = scmp.ne.s32.totalorder %s145, %s146
    %p157 = scmp.eq.s32.totalorder %s18, 0
    %p158 = por %p156, %p157
    %p159 = scmp.ne.s32.totalorder %s145, %s146
    %p160 = scmp.eq.s32.totalorder %s19, 35
    %p161 = por %p159, %p160
    %p163 = scmp.ne.s32.totalorder %s146, %s162
    %p164 = scmp.eq.s32.totalorder %s19, 0
    %p165 = por %p163, %p164
    %s166 = ssub.s32 %s20, %s39
    %s167 = ssub.s32 %s21, %s35
    %s168 = sor.u32 %s166, %s167
    %p169 = scmp.eq.s32.totalorder %s168, 0
    %s171 = sadd.s32 %s170, 1
    %s172 = scalar_select %p169, %s170, %s171
    %p175 = pneg %p169
    %p176 = scmp.eq.s32.totalorder %s13, 35
    %p177 = por %p175, %p176
    %p178 = scmp.ne.s32.totalorder %s170, %s173
    %p179 = scmp.eq.s32.totalorder %s13, 0
    %p180 = por %p178, %p179
    %p181 = scmp.ne.s32.totalorder %s170, %s173
    %p182 = scmp.eq.s32.totalorder %s18, 35
    %p183 = por %p181, %p182
    %p184 = scmp.ne.s32.totalorder %s173, %s174
    %p185 = scmp.eq.s32.totalorder %s18, 0
    %p186 = por %p184, %p185
    %p187 = scmp.ne.s32.totalorder %s173, %s174
    %p188 = scmp.eq.s32.totalorder %s19, 35
    %p189 = por %p187, %p188
    %p191 = scmp.ne.s32.totalorder %s174, %s190
    %p192 = scmp.eq.s32.totalorder %s19, 0
    %p193 = por %p191, %p192
    %s194 = ssub.s32 %s20, %s39
    %s195 = ssub.s32 %s21, %s35
    %s196 = sor.u32 %s194, %s195
    %p197 = scmp.eq.s32.totalorder %s196, 0
    %s199 = sadd.s32 %s198, 1
    %s200 = scalar_select %p197, %s198, %s199
    %p203 = pneg %p197
    %p204 = scmp.eq.s32.totalorder %s13, 35
    %p205 = por %p203, %p204
    %p206 = scmp.ne.s32.totalorder %s198, %s201
    %p207 = scmp.eq.s32.totalorder %s13, 0
    %p208 = por %p206, %p207
    %p209 = scmp.ne.s32.totalorder %s198, %s201
    %p210 = scmp.eq.s32.totalorder %s18, 35
    %p211 = por %p209, %p210
    %p212 = scmp.ne.s32.totalorder %s201, %s202
    %p213 = scmp.eq.s32.totalorder %s18, 0
    %p214 = por %p212, %p213
    %p215 = scmp.ne.s32.totalorder %s201, %s202
    %p216 = scmp.eq.s32.totalorder %s19, 35
    %p217 = por %p215, %p216
    %p219 = scmp.ne.s32.totalorder %s202, %s218
    %p220 = scmp.eq.s32.totalorder %s19, 0
    %p221 = por %p219, %p220
    %p222 = scmp.le.s32.totalorder 1, %s13
    %p223 = scmp.lt.s32.totalorder %s13, 37
    %p224 = pnand %p222, %p223
    %p225 = pneg %p224
    // Predicated region
    $region9: #{double_conv_block.4} parent=5 // pred_check
      _
    $region10: #{double_conv_block.4} parent=5 // pred_check_branch
      %227 = sbr.rel (%p224) target = $region12
    $region11: #{double_conv_block.4} parent=5 // pred_region
      %s228 = ssub.s32 %s13, 1
      // Predicated region
      $region13: #{double_conv_block.4} parent=11 // pred_check
        %p229 = pneg %p109
      $region14: #{double_conv_block.4} parent=11 // pred_check_branch
        %231 = sbr.rel (%p229) target = $region16
      $region15: #{double_conv_block.4} parent=11 // pred_region
        _
      $region16: #{double_conv_block.4} parent=11 // pred_fallthru
        _
      // Predicated region
      $region17: #{double_conv_block.4} parent=11 // pred_check
        %p232 = pneg %p130
      $region18: #{double_conv_block.4} parent=11 // pred_check_branch
        %234 = sbr.rel (%p232) target = $region20
      $region19: #{double_conv_block.4} parent=11 // pred_region
        _
      $region20: #{double_conv_block.4} parent=11 // pred_fallthru
        _
    $region12: #{double_conv_block.4} parent=5 // pred_fallthru
      _
    %p235 = scmp.lt.s32.totalorder %s13, 36
    // Predicated region
    $region21: #{double_conv_block.4} parent=5 // pred_check
      %p236 = pneg %p235
    $region22: #{double_conv_block.4} parent=5 // pred_check_branch
      %238 = sbr.rel (%p236) target = $region24
    $region23: #{double_conv_block.4} parent=5 // pred_region
      // Predicated region
      $region25: #{double_conv_block.4} parent=23 // pred_check
        %p239 = pneg %p56
      $region26: #{double_conv_block.4} parent=23 // pred_check_branch
        %241 = sbr.rel (%p239) target = $region28
      $region27: #{double_conv_block.4} parent=23 // pred_region
        %s242 = sadd.s32 %s21, %s22
        %p243 = scmp.lt.s32.totalorder %s20, 1
        %s244 = scalar_select %p243, %s20, 1
        %p245 = scmp.lt.s32.totalorder %s242, 7
        %s246 = scalar_select %p245, %s242, 7
        %s247 = smul.addr %s246, 9
        %s248 = smul.addr %s244, 72
        %s249 = sadd.s32 %s247, %s248
        %s250 = smul.addr %s249, 4
        %s251 = scalar_lea.vmem %s0, %s250
        %s252 = sadd.s32 %s21, %s22
      $region28: #{double_conv_block.4} parent=23 // pred_fallthru
        _
      // Predicated region
      $region29: #{double_conv_block.4} parent=23 // pred_check
        %p253 = pneg %p82
      $region30: #{double_conv_block.4} parent=23 // pred_check_branch
        %255 = sbr.rel (%p253) target = $region32
      $region31: #{double_conv_block.4} parent=23 // pred_region
        %p256 = scmp.lt.s32.totalorder %s22, 2
        %s257 = scalar_select %p256, %s22, 2
        %s258 = smul.addr %s257, 5
        %s259 = smul.addr %s258, 4
        %s260 = scalar_lea.vmem %s1, %s259
      $region32: #{double_conv_block.4} parent=23 // pred_fallthru
        _
    $region24: #{double_conv_block.4} parent=5 // pred_fallthru
      _
    %p261 = scmp.le.s32.totalorder 1, %s13
    %p262 = scmp.lt.s32.totalorder %s13, 37
    %p263 = pnand %p261, %p262
    %p264 = pneg %p263
    // Predicated region
    $region33: #{double_conv_block.4} parent=5 // pred_check
      _
    $region34: #{double_conv_block.4} parent=5 // pred_check_branch
      %266 = sbr.rel (%p263) target = $region36
    $region35: #{double_conv_block.4} parent=5 // pred_region
      %s267 = ssub.s32 %s13, 1
      %s268 = sadd.s32 %s24, %s25
      %p269 = scmp.lt.s32.totalorder %s23, 1
      %s270 = scalar_select %p269, %s23, 1
      %p271 = scmp.lt.s32.totalorder %s268, 7
      %s272 = scalar_select %p271, %s268, 7
      %s273 = smul.addr %s272, 9
      %s274 = smul.addr %s270, 72
      %s275 = sadd.s32 %s273, %s274
      %s276 = smul.addr %s275, 4
      %s277 = scalar_lea.vmem %s0, %s276
      %p278 = pneg %p62
      %p279 = pneg %p59
      %p280 = scmp.lt.s32.totalorder %s25, 2
      %s281 = scalar_select %p280, %s25, 2
      %s282 = smul.addr %s281, 5
      %s283 = smul.addr %s282, 4
      %s284 = scalar_lea.vmem %s1, %s283
      %p285 = pneg %p88
      %p286 = pneg %p85
      %p287 = pneg %p109
      %p288 = pneg %p106
      %p289 = pneg %p130
      %p290 = pneg %p127
      %p291 = pneg %p158
      %p292 = pneg %p155
      %p293 = scmp.lt.s32.totalorder %s23, 1
      %s294 = scalar_select %p293, %s23, 1
      %p295 = scmp.lt.s32.totalorder %s24, 5
      %s296 = scalar_select %p295, %s24, 5
      %s297 = smul.addr %s296, 6
      %s298 = smul.addr %s294, 36
      %s299 = sadd.s32 %s297, %s298
      %s300 = smul.addr %s299, 8
      %s301 = scalar_lea.vmem %s4, %s300
      %p302 = pneg %p186
      %p303 = pneg %p183
      %p304 = scmp.lt.s32.totalorder %s23, 1
      %s305 = scalar_select %p304, %s23, 1
      %p306 = scmp.lt.s32.totalorder %s24, 5
      %s307 = scalar_select %p306, %s24, 5
      %s308 = smul.addr %s305, 6
      %s309 = sadd.s32 %s307, %s308
      %s310 = scalar_lea.vmem %s5, %s309
      %p311 = pneg %p214
      %p312 = pneg %p211
      %p313 = scmp.lt.s32.totalorder %s23, 1
      %s314 = scalar_select %p313, %s23, 1
      %p315 = scmp.lt.s32.totalorder %s24, 5
      %s316 = scalar_select %p315, %s24, 5
      %s317 = smul.addr %s314, 6
      %s318 = sadd.s32 %s316, %s317
      %s319 = scalar_lea.vmem %s6, %s318
      %s320 = sadd.s32 %s24, %s25
      %p321 = scmp.lt.s32.totalorder %s23, 1
      %s322 = scalar_select %p321, %s23, 1
      %p323 = scmp.lt.s32.totalorder %s320, 7
      %s324 = scalar_select %p323, %s320, 7
      %s325 = smul.addr %s324, 9
      %s326 = smul.addr %s322, 72
      %s327 = sadd.s32 %s325, %s326
      %s328 = smul.addr %s327, 4
      %s329 = scalar_lea.vmem %s0, %s328
      %s330 = sadd.s32 %s24, %s25
      %p331 = scmp.lt.s32.totalorder %s25, 2
      %s332 = scalar_select %p331, %s25, 2
      %s333 = smul.addr %s332, 5
      %s334 = smul.addr %s333, 4
      %s335 = scalar_lea.vmem %s1, %s334
      %p336 = scmp.lt.s32.totalorder %s23, 1
      %s337 = scalar_select %p336, %s23, 1
      %p338 = scmp.lt.s32.totalorder %s24, 5
      %s339 = scalar_select %p338, %s24, 5
      %s340 = smul.addr %s339, 6
      %s341 = smul.addr %s337, 36
      %s342 = sadd.s32 %s340, %s341
      %s343 = smul.addr %s342, 8
      %s344 = scalar_lea.vmem %s4, %s343
      %p345 = scmp.lt.s32.totalorder %s23, 1
      %s346 = scalar_select %p345, %s23, 1
      %p347 = scmp.lt.s32.totalorder %s24, 5
      %s348 = scalar_select %p347, %s24, 5
      %s349 = smul.addr %s346, 6
      %s350 = sadd.s32 %s348, %s349
      %s351 = scalar_lea.vmem %s5, %s350
      %p352 = scmp.lt.s32.totalorder %s23, 1
      %s353 = scalar_select %p352, %s23, 1
      %p354 = scmp.lt.s32.totalorder %s24, 5
      %s355 = scalar_select %p354, %s24, 5
      %s356 = smul.addr %s353, 6
      %s357 = sadd.s32 %s355, %s356
      %s358 = scalar_lea.vmem %s6, %s357
      %p360 = scmp.eq.s32.totalorder %s25, 0
      // Predicated region
      $region37: #{double_conv_block.4} parent=35 // pred_check
        %p361 = pneg %p360
      $region38: #{double_conv_block.4} parent=35 // pred_check_branch
        %363 = sbr.rel (%p361) target = $region40
      $region39: #{double_conv_block.4} parent=35 // pred_region
        %v364 = vld [vmem:[%s2] sm:$0x1]
        %v366 = vlaneseq
        %v367 = vshrl.u32 %v366, 7
        %v368 = vsub.s32 0, %v367
        %v369 = vrot.slane %v364, %v368
        %371 = vst [vmem:[#allocation2] sm:$0xff] %v369
        %372 = vst [vmem:[#allocation2 + $0x8] sm:$0xff] %v369
        %373 = vst [vmem:[#allocation2 + $0x10] sm:$0xff] %v369
        %374 = vst [vmem:[#allocation2 + $0x18] sm:$0xff] %v369
        %375 = vst [vmem:[#allocation2 + $0x20] sm:$0xff] %v369
        %376 = vst [vmem:[#allocation2 + $0x28] sm:$0xff] %v369
      $region40: #{double_conv_block.4} parent=35 // pred_fallthru
        _
      %v377 = vld [vmem:[#allocation2] sm:$0xff]
      %v378 = vld [vmem:[#allocation2 + $0x8] sm:$0xff]
      %v379 = vld [vmem:[#allocation2 + $0x10] sm:$0xff]
      %v380 = vld [vmem:[#allocation2 + $0x18] sm:$0xff]
      %v381 = vld [vmem:[#allocation2 + $0x20] sm:$0xff]
      %v382 = vld [vmem:[#allocation2 + $0x28] sm:$0xff]
      %v383 = vld [vmem:[%s329] sm:$0xf]
      %v384 = vld [vmem:[%s329 + $0x4] sm:$0xf]
      %v385 = vld [vmem:[%s329 + $0x8] sm:$0xf]
      %v386 = vld [vmem:[%s329 + $0xc] sm:$0xf]
      %v387 = vld [vmem:[%s329 + $0x10] sm:$0xf]
      %v388 = vld [vmem:[%s329 + $0x14] sm:$0xf]
      %v389 = vld [vmem:[%s335] sm:$0x3]
      %v396 = vunpack.c.l.b16 %v383
      %v397 = vunpack.c.l.b16 %v384
      %v398 = vunpack.c.l.b16 %v385
      %v399 = vunpack.c.l.b16 %v386
      %v400 = vunpack.c.l.b16 %v387
      %v401 = vunpack.c.l.b16 %v388
      %v402 = vpack.c.b16 %v397, %v396
      %v403 = vpack.c.b16 %v399, %v398
      %v404 = vpack.c.b16 %v401, %v400
      %vm405 = vcmask 31744
      %v407 = vsel %vm405, %v402, 0
      %v410 = vsel %vm405, %v403, 0
      %v413 = vsel %vm405, %v404, 0
      %vm415 = vcmask 1041408
      %v417 = vsel %vm415, %v389, 0
      %419 = vmatprep.subr.bf16.mxu0 0
      %420 = vmatpush1.bf16.msra.mxu0 %v417
      %421 = vmatprep.subr.bf16.mxu0 0
      %422 = vmatpush1.bf16.msra.mxu0 0
      %423 = vmatprep.subr.bf16.mxu0 0
      %424 = vmatpush1.bf16.msra.mxu0 0
      %425 = vmatprep.subr.bf16.mxu0 0
      %426 = vmatpush1.bf16.msra.mxu0 0
      %427 = vmatprep.subr.bf16.mxu0 0
      %428 = vmatpush1.bf16.msra.mxu0 0
      %429 = vmatprep.subr.bf16.mxu0 0
      %430 = vmatpush1.bf16.msra.mxu0 0
      %431 = vmatprep.subr.bf16.mxu0 0
      %432 = vmatpush1.bf16.msra.mxu0 0
      %433 = vmatprep.subr.bf16.mxu0 0
      %434 = vmatpush1.bf16.msra.mxu0 0
      %435 = vmatprep.subr.bf16.mxu0 0
      %436 = vmatpush1.bf16.msra.mxu0 0
      %437 = vmatprep.subr.bf16.mxu0 0
      %438 = vmatpush1.bf16.msra.mxu0 0
      %439 = vmatprep.subr.bf16.mxu0 0
      %440 = vmatpush1.bf16.msra.mxu0 0
      %441 = vmatprep.subr.bf16.mxu0 0
      %442 = vmatpush1.bf16.msra.mxu0 0
      %443 = vmatprep.subr.bf16.mxu0 0
      %444 = vmatpush1.bf16.msra.mxu0 0
      %445 = vmatprep.subr.bf16.mxu0 0
      %446 = vmatpush1.bf16.msra.mxu0 0
      %447 = vmatprep.subr.bf16.mxu0 0
      %448 = vmatpush1.bf16.msra.mxu0 0
      %449 = vmatprep.subr.bf16.mxu0 0
      %450 = vmatpush1.bf16.msra.mxu0 0
      %451 = vmatprep.mubr.bf16.mxu0 0
      %452 = vmatmul.mubr.bf16.gmra.mrb[0].mxu0 %v407
      %v453 = vpop.f32.mrb[0].mxu0
      %v454 = vadd.f32 0.0, %v453
      %v455 = vpop.f32.mrb[0].mxu0
      %v456 = vpop.f32.mrb[0].mxu0
      %v457 = vadd.f32 0.0, %v456
      %v458 = vpop.f32.mrb[0].mxu0
      %459 = vmatprep.mubr.bf16.mxu0 0
      %460 = vmatmul.mubr.bf16.gmra.mrb[0].mxu0 %v410
      %v461 = vpop.f32.mrb[0].mxu0
      %v462 = vadd.f32 0.0, %v461
      %v463 = vpop.f32.mrb[0].mxu0
      %v464 = vpop.f32.mrb[0].mxu0
      %v465 = vadd.f32 0.0, %v464
      %v466 = vpop.f32.mrb[0].mxu0
      %467 = vmatprep.mubr.bf16.mxu0 0
      %468 = vmatmul.mubr.bf16.gmra.mrb[0].mxu0 %v413
      %v469 = vpop.f32.mrb[0].mxu0
      %v470 = vadd.f32 0.0, %v469
      %v471 = vpop.f32.mrb[0].mxu0
      %v472 = vpop.f32.mrb[0].mxu0
      %v473 = vadd.f32 0.0, %v472
      %v474 = vpop.f32.mrb[0].mxu0
      %475 = vdwg.mxu0
      %v476 = vadd.f32 %v377, %v454
      %v477 = vadd.f32 %v378, %v457
      %v478 = vadd.f32 %v379, %v462
      %v479 = vadd.f32 %v380, %v465
      %v480 = vadd.f32 %v381, %v470
      %v481 = vadd.f32 %v382, %v473
      %v482 = vld [vmem:[%s329] sm:$0xf]
      %v483 = vld [vmem:[%s329 + $0x4] sm:$0xf]
      %v484 = vld [vmem:[%s329 + $0x8] sm:$0xf]
      %v485 = vld [vmem:[%s329 + $0xc] sm:$0xf]
      %v486 = vld [vmem:[%s329 + $0x10] sm:$0xf]
      %v487 = vld [vmem:[%s329 + $0x14] sm:$0xf]
      %v488 = vld [vmem:[%s329 + $0x18] sm:$0x1]
      %v489 = vld [vmem:[%s335] sm:$0xc]
      %v497 = vunpack.c.l.b16 %v482
      %v498 = vunpack.c.l.b16 %v483
      %v499 = vunpack.c.l.b16 %v484
      %v500 = vunpack.c.l.b16 %v485
      %v501 = vunpack.c.l.b16 %v486
      %v502 = vunpack.c.l.b16 %v487
      %v503 = vunpack.c.l.b16 %v488
      %v504 = vpack.c.b16 %v498, %v497
      %v505 = vpack.c.b16 %v500, %v499
      %v506 = vpack.c.b16 %v502, %v501
      %v507 = vpack.c.b16 %v503, %v503
      %vm508 = vsmask.f32 7424
      %v510 = vshrl.u32 %v504, 16
      %v512 = vshll.u32 %v504, 16
      %v514 = vrot.slane %v512, 1
      %v515 = vor.u32 %v510, %v514
      %v517 = vshll.u32 %v505, 16
      %v519 = vrot.slane %v517, 1
      %v520 = vsel %vm508, %v515, %v519
      %v521 = vshrl.u32 %v505, 16
      %v523 = vor.u32 %v521, %v519
      %v525 = vshll.u32 %v506, 16
      %v527 = vrot.slane %v525, 1
      %v528 = vsel %vm508, %v523, %v527
      %v529 = vshrl.u32 %v506, 16
      %v531 = vor.u32 %v529, %v527
      %v533 = vshll.u32 %v507, 16
      %v535 = vrot.slane %v533, 1
      %v536 = vsel %vm508, %v531, %v535
      %v538 = vunpack.c.l.b16 %v489
      %v539 = vpack.c.b16 %v538, %v538
      %v540 = vrot.slane %v539, 2
      %v542 = vsel %vm405, %v520, 0
      %v545 = vsel %vm405, %v528, 0
      %v548 = vsel %vm405, %v536, 0
      %v551 = vsel %vm415, %v540, 0
      %553 = vmatprep.subr.bf16.mxu0 0
      %554 = vmatpush1.bf16.msra.mxu0 %v551
      %555 = vmatprep.subr.bf16.mxu0 0
      %556 = vmatpush1.bf16.msra.mxu0 0
      %557 = vmatprep.subr.bf16.mxu0 0
      %558 = vmatpush1.bf16.msra.mxu0 0
      %559 = vmatprep.subr.bf16.mxu0 0
      %560 = vmatpush1.bf16.msra.mxu0 0
      %561 = vmatprep.subr.bf16.mxu0 0
      %562 = vmatpush1.bf16.msra.mxu0 0
      %563 = vmatprep.subr.bf16.mxu0 0
      %564 = vmatpush1.bf16.msra.mxu0 0
      %565 = vmatprep.subr.bf16.mxu0 0
      %566 = vmatpush1.bf16.msra.mxu0 0
      %567 = vmatprep.subr.bf16.mxu0 0
      %568 = vmatpush1.bf16.msra.mxu0 0
      %569 = vmatprep.subr.bf16.mxu0 0
      %570 = vmatpush1.bf16.msra.mxu0 0
      %571 = vmatprep.subr.bf16.mxu0 0
      %572 = vmatpush1.bf16.msra.mxu0 0
      %573 = vmatprep.subr.bf16.mxu0 0
      %574 = vmatpush1.bf16.msra.mxu0 0
      %575 = vmatprep.subr.bf16.mxu0 0
      %576 = vmatpush1.bf16.msra.mxu0 0
      %577 = vmatprep.subr.bf16.mxu0 0
      %578 = vmatpush1.bf16.msra.mxu0 0
      %579 = vmatprep.subr.bf16.mxu0 0
      %580 = vmatpush1.bf16.msra.mxu0 0
      %581 = vmatprep.subr.bf16.mxu0 0
      %582 = vmatpush1.bf16.msra.mxu0 0
      %583 = vmatprep.subr.bf16.mxu0 0
      %584 = vmatpush1.bf16.msra.mxu0 0
      %585 = vmatprep.mubr.bf16.mxu0 0
      %586 = vmatmul.mubr.bf16.gmra.mrb[0].mxu0 %v542
      %v587 = vpop.f32.mrb[0].mxu0
      %v588 = vadd.f32 0.0, %v587
      %v589 = vpop.f32.mrb[0].mxu0
      %v590 = vpop.f32.mrb[0].mxu0
      %v591 = vadd.f32 0.0, %v590
      %v592 = vpop.f32.mrb[0].mxu0
      %593 = vmatprep.mubr.bf16.mxu0 0
      %594 = vmatmul.mubr.bf16.gmra.mrb[0].mxu0 %v545
      %v595 = vpop.f32.mrb[0].mxu0
      %v596 = vadd.f32 0.0, %v595
      %v597 = vpop.f32.mrb[0].mxu0
      %v598 = vpop.f32.mrb[0].mxu0
      %v599 = vadd.f32 0.0, %v598
      %v600 = vpop.f32.mrb[0].mxu0
      %601 = vmatprep.mubr.bf16.mxu0 0
      %602 = vmatmul.mubr.bf16.gmra.mrb[0].mxu0 %v548
      %v603 = vpop.f32.mrb[0].mxu0
      %v604 = vadd.f32 0.0, %v603
      %v605 = vpop.f32.mrb[0].mxu0
      %v606 = vpop.f32.mrb[0].mxu0
      %v607 = vadd.f32 0.0, %v606
      %v608 = vpop.f32.mrb[0].mxu0
      %609 = vdwg.mxu0
      %v610 = vadd.f32 %v476, %v588
      %v611 = vadd.f32 %v477, %v591
      %v612 = vadd.f32 %v478, %v596
      %v613 = vadd.f32 %v479, %v599
      %v614 = vadd.f32 %v480, %v604
      %v615 = vadd.f32 %v481, %v607
      %v616 = vld [vmem:[%s329] sm:$0xe]
      %v617 = vld [vmem:[%s335 + $0x4] sm:$0x3]
      %v619 = vunpack.c.l.b16 %v616
      %v620 = vpack.c.b16 %v498, %v619
      %vm621 = vcmask 1046528
      %v622 = vrot.slane %v620, 1
      %v623 = vrot.slane %v505, 1
      %v624 = vsel %vm621, %v622, %v623
      %v625 = vrot.slane %v506, 1
      %v626 = vsel %vm621, %v623, %v625
      %v627 = vrot.slane %v507, 1
      %v628 = vsel %vm621, %v625, %v627
      %v630 = vsel %vm405, %v624, 0
      %v633 = vsel %vm405, %v626, 0
      %v636 = vsel %vm405, %v628, 0
      %v639 = vsel %vm415, %v617, 0
      %641 = vmatprep.subr.bf16.mxu0 0
      %642 = vmatpush1.bf16.msra.mxu0 %v639
      %643 = vmatprep.subr.bf16.mxu0 0
      %644 = vmatpush1.bf16.msra.mxu0 0
      %645 = vmatprep.subr.bf16.mxu0 0
      %646 = vmatpush1.bf16.msra.mxu0 0
      %647 = vmatprep.subr.bf16.mxu0 0
      %648 = vmatpush1.bf16.msra.mxu0 0
      %649 = vmatprep.subr.bf16.mxu0 0
      %650 = vmatpush1.bf16.msra.mxu0 0
      %651 = vmatprep.subr.bf16.mxu0 0
      %652 = vmatpush1.bf16.msra.mxu0 0
      %653 = vmatprep.subr.bf16.mxu0 0
      %654 = vmatpush1.bf16.msra.mxu0 0
      %655 = vmatprep.subr.bf16.mxu0 0
      %656 = vmatpush1.bf16.msra.mxu0 0
      %657 = vmatprep.subr.bf16.mxu0 0
      %658 = vmatpush1.bf16.msra.mxu0 0
      %659 = vmatprep.subr.bf16.mxu0 0
      %660 = vmatpush1.bf16.msra.mxu0 0
      %661 = vmatprep.subr.bf16.mxu0 0
      %662 = vmatpush1.bf16.msra.mxu0 0
      %663 = vmatprep.subr.bf16.mxu0 0
      %664 = vmatpush1.bf16.msra.mxu0 0
      %665 = vmatprep.subr.bf16.mxu0 0
      %666 = vmatpush1.bf16.msra.mxu0 0
      %667 = vmatprep.subr.bf16.mxu0 0
      %668 = vmatpush1.bf16.msra.mxu0 0
      %669 = vmatprep.subr.bf16.mxu0 0
      %670 = vmatpush1.bf16.msra.mxu0 0
      %671 = vmatprep.subr.bf16.mxu0 0
      %672 = vmatpush1.bf16.msra.mxu0 0
      %673 = vmatprep.mubr.bf16.mxu0 0
      %674 = vmatmul.mubr.bf16.gmra.mrb[0].mxu0 %v630
      %v675 = vpop.f32.mrb[0].mxu0
      %v676 = vadd.f32 0.0, %v675
      %v677 = vpop.f32.mrb[0].mxu0
      %v678 = vpop.f32.mrb[0].mxu0
      %v679 = vadd.f32 0.0, %v678
      %v680 = vpop.f32.mrb[0].mxu0
      %681 = vmatprep.mubr.bf16.mxu0 0
      %682 = vmatmul.mubr.bf16.gmra.mrb[0].mxu0 %v633
      %v683 = vpop.f32.mrb[0].mxu0
      %v684 = vadd.f32 0.0, %v683
      %v685 = vpop.f32.mrb[0].mxu0
      %v686 = vpop.f32.mrb[0].mxu0
      %v687 = vadd.f32 0.0, %v686
      %v688 = vpop.f32.mrb[0].mxu0
      %689 = vmatprep.mubr.bf16.mxu0 0
      %690 = vmatmul.mubr.bf16.gmra.mrb[0].mxu0 %v636
      %v691 = vpop.f32.mrb[0].mxu0
      %v692 = vadd.f32 0.0, %v691
      %v693 = vpop.f32.mrb[0].mxu0
      %v694 = vpop.f32.mrb[0].mxu0
      %v695 = vadd.f32 0.0, %v694
      %v696 = vpop.f32.mrb[0].mxu0
      %697 = vdwg.mxu0
      %v698 = vadd.f32 %v610, %v676
      %v699 = vadd.f32 %v611, %v679
      %v700 = vadd.f32 %v612, %v684
      %v701 = vadd.f32 %v613, %v687
      %v702 = vadd.f32 %v614, %v692
      %v703 = vadd.f32 %v615, %v695
      %v704 = vld [vmem:[%s329 + $0x18] sm:$0xf]
      %v705 = vld [vmem:[%s335 + $0x4] sm:$0xc]
      %v707 = vunpack.c.l.b16 %v704
      %v708 = vpack.c.b16 %v499, %v498
      %v709 = vpack.c.b16 %v501, %v500
      %v710 = vpack.c.b16 %v707, %v502
      %v712 = vunpack.c.l.b16 %v705
      %v713 = vpack.c.b16 %v712, %v712
      %v714 = vrot.slane %v713, 2
      %v716 = vsel %vm405, %v708, 0
      %v719 = vsel %vm405, %v709, 0
      %v722 = vsel %vm405, %v710, 0
      %v725 = vsel %vm415, %v714, 0
      %727 = vmatprep.subr.bf16.mxu0 0
      %728 = vmatpush1.bf16.msra.mxu0 %v725
      %729 = vmatprep.subr.bf16.mxu0 0
      %730 = vmatpush1.bf16.msra.mxu0 0
      %731 = vmatprep.subr.bf16.mxu0 0
      %732 = vmatpush1.bf16.msra.mxu0 0
      %733 = vmatprep.subr.bf16.mxu0 0
      %734 = vmatpush1.bf16.msra.mxu0 0
      %735 = vmatprep.subr.bf16.mxu0 0
      %736 = vmatpush1.bf16.msra.mxu0 0
      %737 = vmatprep.subr.bf16.mxu0 0
      %738 = vmatpush1.bf16.msra.mxu0 0
      %739 = vmatprep.subr.bf16.mxu0 0
      %740 = vmatpush1.bf16.msra.mxu0 0
      %741 = vmatprep.subr.bf16.mxu0 0
      %742 = vmatpush1.bf16.msra.mxu0 0
      %743 = vmatprep.subr.bf16.mxu0 0
      %744 = vmatpush1.bf16.msra.mxu0 0
      %745 = vmatprep.subr.bf16.mxu0 0
      %746 = vmatpush1.bf16.msra.mxu0 0
      %747 = vmatprep.subr.bf16.mxu0 0
      %748 = vmatpush1.bf16.msra.mxu0 0
      %749 = vmatprep.subr.bf16.mxu0 0
      %750 = vmatpush1.bf16.msra.mxu0 0
      %751 = vmatprep.subr.bf16.mxu0 0
      %752 = vmatpush1.bf16.msra.mxu0 0
      %753 = vmatprep.subr.bf16.mxu0 0
      %754 = vmatpush1.bf16.msra.mxu0 0
      %755 = vmatprep.subr.bf16.mxu0 0
      %756 = vmatpush1.bf16.msra.mxu0 0
      %757 = vmatprep.subr.bf16.mxu0 0
      %758 = vmatpush1.bf16.msra.mxu0 0
      %759 = vmatprep.mubr.bf16.mxu0 0
      %760 = vmatmul.mubr.bf16.gmra.mrb[0].mxu0 %v716
      %v761 = vpop.f32.mrb[0].mxu0
      %v762 = vadd.f32 0.0, %v761
      %v763 = vpop.f32.mrb[0].mxu0
      %v764 = vpop.f32.mrb[0].mxu0
      %v765 = vadd.f32 0.0, %v764
      %v766 = vpop.f32.mrb[0].mxu0
      %767 = vmatprep.mubr.bf16.mxu0 0
      %768 = vmatmul.mubr.bf16.gmra.mrb[0].mxu0 %v719
      %v769 = vpop.f32.mrb[0].mxu0
      %v770 = vadd.f32 0.0, %v769
      %v771 = vpop.f32.mrb[0].mxu0
      %v772 = vpop.f32.mrb[0].mxu0
      %v773 = vadd.f32 0.0, %v772
      %v774 = vpop.f32.mrb[0].mxu0
      %775 = vmatprep.mubr.bf16.mxu0 0
      %776 = vmatmul.mubr.bf16.gmra.mrb[0].mxu0 %v722
      %v777 = vpop.f32.mrb[0].mxu0
      %v778 = vadd.f32 0.0, %v777
      %v779 = vpop.f32.mrb[0].mxu0
      %v780 = vpop.f32.mrb[0].mxu0
      %v781 = vadd.f32 0.0, %v780
      %v782 = vpop.f32.mrb[0].mxu0
      %783 = vdwg.mxu0
      %v784 = vadd.f32 %v698, %v762
      %v785 = vadd.f32 %v699, %v765
      %v786 = vadd.f32 %v700, %v770
      %v787 = vadd.f32 %v701, %v773
      %v788 = vadd.f32 %v702, %v778
      %v789 = vadd.f32 %v703, %v781
      %v790 = vld [vmem:[%s329 + $0x4] sm:$0xf]
      %v791 = vld [vmem:[%s329 + $0x8] sm:$0xf]
      %v792 = vld [vmem:[%s329 + $0xc] sm:$0xf]
      %v793 = vld [vmem:[%s329 + $0x10] sm:$0xf]
      %v794 = vld [vmem:[%s329 + $0x14] sm:$0xf]
      %v795 = vld [vmem:[%s329 + $0x18] sm:$0xf]
      %v796 = vld [vmem:[%s329 + $0x1c] sm:$0x1]
      %v797 = vld [vmem:[%s335 + $0x8] sm:$0x3]
      %v805 = vunpack.c.l.b16 %v790
      %v806 = vunpack.c.l.b16 %v791
      %v807 = vunpack.c.l.b16 %v792
      %v808 = vunpack.c.l.b16 %v793
      %v809 = vunpack.c.l.b16 %v794
      %v810 = vunpack.c.l.b16 %v795
      %v811 = vunpack.c.l.b16 %v796
      %v812 = vpack.c.b16 %v806, %v805
      %v813 = vpack.c.b16 %v808, %v807
      %v814 = vpack.c.b16 %v810, %v809
      %v815 = vpack.c.b16 %v811, %v811
      %v817 = vshrl.u32 %v812, 16
      %v819 = vshll.u32 %v812, 16
      %v821 = vrot.slane %v819, 1
      %v822 = vor.u32 %v817, %v821
      %v824 = vshll.u32 %v813, 16
      %v826 = vrot.slane %v824, 1
      %v827 = vsel %vm508, %v822, %v826
      %v828 = vshrl.u32 %v813, 16
      %v830 = vor.u32 %v828, %v826
      %v832 = vshll.u32 %v814, 16
      %v834 = vrot.slane %v832, 1
      %v835 = vsel %vm508, %v830, %v834
      %v836 = vshrl.u32 %v814, 16
      %v838 = vor.u32 %v836, %v834
      %v840 = vshll.u32 %v815, 16
      %v842 = vrot.slane %v840, 1
      %v843 = vsel %vm508, %v838, %v842
      %v845 = vsel %vm405, %v827, 0
      %v848 = vsel %vm405, %v835, 0
      %v851 = vsel %vm405, %v843, 0
      %v854 = vsel %vm415, %v797, 0
      %856 = vmatprep.subr.bf16.mxu0 0
      %857 = vmatpush1.bf16.msra.mxu0 %v854
      %858 = vmatprep.subr.bf16.mxu0 0
      %859 = vmatpush1.bf16.msra.mxu0 0
      %860 = vmatprep.subr.bf16.mxu0 0
      %861 = vmatpush1.bf16.msra.mxu0 0
      %862 = vmatprep.subr.bf16.mxu0 0
      %863 = vmatpush1.bf16.msra.mxu0 0
      %864 = vmatprep.subr.bf16.mxu0 0
      %865 = vmatpush1.bf16.msra.mxu0 0
      %866 = vmatprep.subr.bf16.mxu0 0
      %867 = vmatpush1.bf16.msra.mxu0 0
      %868 = vmatprep.subr.bf16.mxu0 0
      %869 = vmatpush1.bf16.msra.mxu0 0
      %870 = vmatprep.subr.bf16.mxu0 0
      %871 = vmatpush1.bf16.msra.mxu0 0
      %872 = vmatprep.subr.bf16.mxu0 0
      %873 = vmatpush1.bf16.msra.mxu0 0
      %874 = vmatprep.subr.bf16.mxu0 0
      %875 = vmatpush1.bf16.msra.mxu0 0
      %876 = vmatprep.subr.bf16.mxu0 0
      %877 = vmatpush1.bf16.msra.mxu0 0
      %878 = vmatprep.subr.bf16.mxu0 0
      %879 = vmatpush1.bf16.msra.mxu0 0
      %880 = vmatprep.subr.bf16.mxu0 0
      %881 = vmatpush1.bf16.msra.mxu0 0
      %882 = vmatprep.subr.bf16.mxu0 0
      %883 = vmatpush1.bf16.msra.mxu0 0
      %884 = vmatprep.subr.bf16.mxu0 0
      %885 = vmatpush1.bf16.msra.mxu0 0
      %886 = vmatprep.subr.bf16.mxu0 0
      %887 = vmatpush1.bf16.msra.mxu0 0
      %888 = vmatprep.mubr.bf16.mxu0 0
      %889 = vmatmul.mubr.bf16.gmra.mrb[0].mxu0 %v845
      %v890 = vpop.f32.mrb[0].mxu0
      %v891 = vadd.f32 0.0, %v890
      %v892 = vpop.f32.mrb[0].mxu0
      %v893 = vpop.f32.mrb[0].mxu0
      %v894 = vadd.f32 0.0, %v893
      %v895 = vpop.f32.mrb[0].mxu0
      %896 = vmatprep.mubr.bf16.mxu0 0
      %897 = vmatmul.mubr.bf16.gmra.mrb[0].mxu0 %v848
      %v898 = vpop.f32.mrb[0].mxu0
      %v899 = vadd.f32 0.0, %v898
      %v900 = vpop.f32.mrb[0].mxu0
      %v901 = vpop.f32.mrb[0].mxu0
      %v902 = vadd.f32 0.0, %v901
      %v903 = vpop.f32.mrb[0].mxu0
      %904 = vmatprep.mubr.bf16.mxu0 0
      %905 = vmatmul.mubr.bf16.gmra.mrb[0].mxu0 %v851
      %v906 = vpop.f32.mrb[0].mxu0
      %v907 = vadd.f32 0.0, %v906
      %v908 = vpop.f32.mrb[0].mxu0
      %v909 = vpop.f32.mrb[0].mxu0
      %v910 = vadd.f32 0.0, %v909
      %v911 = vpop.f32.mrb[0].mxu0
      %912 = vdwg.mxu0
      %v913 = vadd.f32 %v784, %v891
      %v914 = vadd.f32 %v785, %v894
      %v915 = vadd.f32 %v786, %v899
      %v916 = vadd.f32 %v787, %v902
      %v917 = vadd.f32 %v788, %v907
      %v918 = vadd.f32 %v789, %v910
      %v919 = vld [vmem:[%s329 + $0x4] sm:$0xe]
      %v920 = vld [vmem:[%s335 + $0x8] sm:$0xc]
      %v922 = vunpack.c.l.b16 %v919
      %v923 = vpack.c.b16 %v806, %v922
      %v924 = vrot.slane %v923, 1
      %v925 = vrot.slane %v813, 1
      %v926 = vsel %vm621, %v924, %v925
      %v927 = vrot.slane %v814, 1
      %v928 = vsel %vm621, %v925, %v927
      %v929 = vrot.slane %v815, 1
      %v930 = vsel %vm621, %v927, %v929
      %v932 = vunpack.c.l.b16 %v920
      %v933 = vpack.c.b16 %v932, %v932
      %v934 = vrot.slane %v933, 2
      %v936 = vsel %vm405, %v926, 0
      %v939 = vsel %vm405, %v928, 0
      %v942 = vsel %vm405, %v930, 0
      %v945 = vsel %vm415, %v934, 0
      %947 = vmatprep.subr.bf16.mxu0 0
      %948 = vmatpush1.bf16.msra.mxu0 %v945
      %949 = vmatprep.subr.bf16.mxu0 0
      %950 = vmatpush1.bf16.msra.mxu0 0
      %951 = vmatprep.subr.bf16.mxu0 0
      %952 = vmatpush1.bf16.msra.mxu0 0
      %953 = vmatprep.subr.bf16.mxu0 0
      %954 = vmatpush1.bf16.msra.mxu0 0
      %955 = vmatprep.subr.bf16.mxu0 0
      %956 = vmatpush1.bf16.msra.mxu0 0
      %957 = vmatprep.subr.bf16.mxu0 0
      %958 = vmatpush1.bf16.msra.mxu0 0
      %959 = vmatprep.subr.bf16.mxu0 0
      %960 = vmatpush1.bf16.msra.mxu0 0
      %961 = vmatprep.subr.bf16.mxu0 0
      %962 = vmatpush1.bf16.msra.mxu0 0
      %963 = vmatprep.subr.bf16.mxu0 0
      %964 = vmatpush1.bf16.msra.mxu0 0
      %965 = vmatprep.subr.bf16.mxu0 0
      %966 = vmatpush1.bf16.msra.mxu0 0
      %967 = vmatprep.subr.bf16.mxu0 0
      %968 = vmatpush1.bf16.msra.mxu0 0
      %969 = vmatprep.subr.bf16.mxu0 0
      %970 = vmatpush1.bf16.msra.mxu0 0
      %971 = vmatprep.subr.bf16.mxu0 0
      %972 = vmatpush1.bf16.msra.mxu0 0
      %973 = vmatprep.subr.bf16.mxu0 0
      %974 = vmatpush1.bf16.msra.mxu0 0
      %975 = vmatprep.subr.bf16.mxu0 0
      %976 = vmatpush1.bf16.msra.mxu0 0
      %977 = vmatprep.subr.bf16.mxu0 0
      %978 = vmatpush1.bf16.msra.mxu0 0
      %979 = vmatprep.mubr.bf16.mxu0 0
      %980 = vmatmul.mubr.bf16.gmra.mrb[0].mxu0 %v936
      %v981 = vpop.f32.mrb[0].mxu0
      %v982 = vadd.f32 0.0, %v981
      %v983 = vpop.f32.mrb[0].mxu0
      %v984 = vpop.f32.mrb[0].mxu0
      %v985 = vadd.f32 0.0, %v984
      %v986 = vpop.f32.mrb[0].mxu0
      %987 = vmatprep.mubr.bf16.mxu0 0
      %988 = vmatmul.mubr.bf16.gmra.mrb[0].mxu0 %v939
      %v989 = vpop.f32.mrb[0].mxu0
      %v990 = vadd.f32 0.0, %v989
      %v991 = vpop.f32.mrb[0].mxu0
      %v992 = vpop.f32.mrb[0].mxu0
      %v993 = vadd.f32 0.0, %v992
      %v994 = vpop.f32.mrb[0].mxu0
      %995 = vmatprep.mubr.bf16.mxu0 0
      %996 = vmatmul.mubr.bf16.gmra.mrb[0].mxu0 %v942
      %v997 = vpop.f32.mrb[0].mxu0
      %v998 = vadd.f32 0.0, %v997
      %v999 = vpop.f32.mrb[0].mxu0
      %v1000 = vpop.f32.mrb[0].mxu0
      %v1001 = vadd.f32 0.0, %v1000
      %v1002 = vpop.f32.mrb[0].mxu0
      %1003 = vdwg.mxu0
      %v1004 = vadd.f32 %v913, %v982
      %v1005 = vadd.f32 %v914, %v985
      %v1006 = vadd.f32 %v915, %v990
      %v1007 = vadd.f32 %v916, %v993
      %v1008 = vadd.f32 %v917, %v998
      %v1009 = vadd.f32 %v918, %v1001
      %v1010 = vld [vmem:[%s329 + $0x1c] sm:$0xf]
      %v1011 = vld [vmem:[%s335 + $0xc] sm:$0x3]
      %v1013 = vunpack.c.l.b16 %v1010
      %v1014 = vpack.c.b16 %v807, %v806
      %v1015 = vpack.c.b16 %v809, %v808
      %v1016 = vpack.c.b16 %v1013, %v810
      %v1018 = vsel %vm405, %v1014, 0
      %v1021 = vsel %vm405, %v1015, 0
      %v1024 = vsel %vm405, %v1016, 0
      %v1027 = vsel %vm415, %v1011, 0
      %1029 = vmatprep.subr.bf16.mxu0 0
      %1030 = vmatpush1.bf16.msra.mxu0 %v1027
      %1031 = vmatprep.subr.bf16.mxu0 0
      %1032 = vmatpush1.bf16.msra.mxu0 0
      %1033 = vmatprep.subr.bf16.mxu0 0
      %1034 = vmatpush1.bf16.msra.mxu0 0
      %1035 = vmatprep.subr.bf16.mxu0 0
      %1036 = vmatpush1.bf16.msra.mxu0 0
      %1037 = vmatprep.subr.bf16.mxu0 0
      %1038 = vmatpush1.bf16.msra.mxu0 0
      %1039 = vmatprep.subr.bf16.mxu0 0
      %1040 = vmatpush1.bf16.msra.mxu0 0
      %1041 = vmatprep.subr.bf16.mxu0 0
      %1042 = vmatpush1.bf16.msra.mxu0 0
      %1043 = vmatprep.subr.bf16.mxu0 0
      %1044 = vmatpush1.bf16.msra.mxu0 0
      %1045 = vmatprep.subr.bf16.mxu0 0
      %1046 = vmatpush1.bf16.msra.mxu0 0
      %1047 = vmatprep.subr.bf16.mxu0 0
      %1048 = vmatpush1.bf16.msra.mxu0 0
      %1049 = vmatprep.subr.bf16.mxu0 0
      %1050 = vmatpush1.bf16.msra.mxu0 0
      %1051 = vmatprep.subr.bf16.mxu0 0
      %1052 = vmatpush1.bf16.msra.mxu0 0
      %1053 = vmatprep.subr.bf16.mxu0 0
      %1054 = vmatpush1.bf16.msra.mxu0 0
      %1055 = vmatprep.subr.bf16.mxu0 0
      %1056 = vmatpush1.bf16.msra.mxu0 0
      %1057 = vmatprep.subr.bf16.mxu0 0
      %1058 = vmatpush1.bf16.msra.mxu0 0
      %1059 = vmatprep.subr.bf16.mxu0 0
      %1060 = vmatpush1.bf16.msra.mxu0 0
      %1061 = vmatprep.mubr.bf16.mxu0 0
      %1062 = vmatmul.mubr.bf16.gmra.mrb[0].mxu0 %v1018
      %v1063 = vpop.f32.mrb[0].mxu0
      %v1064 = vadd.f32 0.0, %v1063
      %v1065 = vpop.f32.mrb[0].mxu0
      %v1066 = vpop.f32.mrb[0].mxu0
      %v1067 = vadd.f32 0.0, %v1066
      %v1068 = vpop.f32.mrb[0].mxu0
      %1069 = vmatprep.mubr.bf16.mxu0 0
      %1070 = vmatmul.mubr.bf16.gmra.mrb[0].mxu0 %v1021
      %v1071 = vpop.f32.mrb[0].mxu0
      %v1072 = vadd.f32 0.0, %v1071
      %v1073 = vpop.f32.mrb[0].mxu0
      %v1074 = vpop.f32.mrb[0].mxu0
      %v1075 = vadd.f32 0.0, %v1074
      %v1076 = vpop.f32.mrb[0].mxu0
      %1077 = vmatprep.mubr.bf16.mxu0 0
      %1078 = vmatmul.mubr.bf16.gmra.mrb[0].mxu0 %v1024
      %v1079 = vpop.f32.mrb[0].mxu0
      %v1080 = vadd.f32 0.0, %v1079
      %v1081 = vpop.f32.mrb[0].mxu0
      %v1082 = vpop.f32.mrb[0].mxu0
      %v1083 = vadd.f32 0.0, %v1082
      %v1084 = vpop.f32.mrb[0].mxu0
      %1085 = vdwg.mxu0
      %v1086 = vadd.f32 %v1004, %v1064
      %v1087 = vadd.f32 %v1005, %v1067
      %v1088 = vadd.f32 %v1006, %v1072
      %v1089 = vadd.f32 %v1007, %v1075
      %v1090 = vadd.f32 %v1008, %v1080
      %v1091 = vadd.f32 %v1009, %v1083
      %v1092 = vld [vmem:[%s329 + $0x8] sm:$0xf]
      %v1093 = vld [vmem:[%s329 + $0xc] sm:$0xf]
      %v1094 = vld [vmem:[%s329 + $0x10] sm:$0xf]
      %v1095 = vld [vmem:[%s329 + $0x14] sm:$0xf]
      %v1096 = vld [vmem:[%s329 + $0x18] sm:$0xf]
      %v1097 = vld [vmem:[%s329 + $0x1c] sm:$0xf]
      %v1098 = vld [vmem:[%s329 + $0x20] sm:$0x1]
      %v1099 = vld [vmem:[%s335 + $0xc] sm:$0xc]
      %v1107 = vunpack.c.l.b16 %v1092
      %v1108 = vunpack.c.l.b16 %v1093
      %v1109 = vunpack.c.l.b16 %v1094
      %v1110 = vunpack.c.l.b16 %v1095
      %v1111 = vunpack.c.l.b16 %v1096
      %v1112 = vunpack.c.l.b16 %v1097
      %v1113 = vunpack.c.l.b16 %v1098
      %v1114 = vpack.c.b16 %v1108, %v1107
      %v1115 = vpack.c.b16 %v1110, %v1109
      %v1116 = vpack.c.b16 %v1112, %v1111
      %v1117 = vpack.c.b16 %v1113, %v1113
      %v1119 = vshrl.u32 %v1114, 16
      %v1121 = vshll.u32 %v1114, 16
      %v1123 = vrot.slane %v1121, 1
      %v1124 = vor.u32 %v1119, %v1123
      %v1126 = vshll.u32 %v1115, 16
      %v1128 = vrot.slane %v1126, 1
      %v1129 = vsel %vm508, %v1124, %v1128
      %v1130 = vshrl.u32 %v1115, 16
      %v1132 = vor.u32 %v1130, %v1128
      %v1134 = vshll.u32 %v1116, 16
      %v1136 = vrot.slane %v1134, 1
      %v1137 = vsel %vm508, %v1132, %v1136
      %v1138 = vshrl.u32 %v1116, 16
      %v1140 = vor.u32 %v1138, %v1136
      %v1142 = vshll.u32 %v1117, 16
      %v1144 = vrot.slane %v1142, 1
      %v1145 = vsel %vm508, %v1140, %v1144
      %v1147 = vunpack.c.l.b16 %v1099
      %v1148 = vpack.c.b16 %v1147, %v1147
      %v1149 = vrot.slane %v1148, 2
      %v1151 = vsel %vm405, %v1129, 0
      %v1154 = vsel %vm405, %v1137, 0
      %v1157 = vsel %vm405, %v1145, 0
      %v1160 = vsel %vm415, %v1149, 0
      %1162 = vmatprep.subr.bf16.mxu0 0
      %1163 = vmatpush1.bf16.msra.mxu0 %v1160
      %1164 = vmatprep.subr.bf16.mxu0 0
      %1165 = vmatpush1.bf16.msra.mxu0 0
      %1166 = vmatprep.subr.bf16.mxu0 0
      %1167 = vmatpush1.bf16.msra.mxu0 0
      %1168 = vmatprep.subr.bf16.mxu0 0
      %1169 = vmatpush1.bf16.msra.mxu0 0
      %1170 = vmatprep.subr.bf16.mxu0 0
      %1171 = vmatpush1.bf16.msra.mxu0 0
      %1172 = vmatprep.subr.bf16.mxu0 0
      %1173 = vmatpush1.bf16.msra.mxu0 0
      %1174 = vmatprep.subr.bf16.mxu0 0
      %1175 = vmatpush1.bf16.msra.mxu0 0
      %1176 = vmatprep.subr.bf16.mxu0 0
      %1177 = vmatpush1.bf16.msra.mxu0 0
      %1178 = vmatprep.subr.bf16.mxu0 0
      %1179 = vmatpush1.bf16.msra.mxu0 0
      %1180 = vmatprep.subr.bf16.mxu0 0
      %1181 = vmatpush1.bf16.msra.mxu0 0
      %1182 = vmatprep.subr.bf16.mxu0 0
      %1183 = vmatpush1.bf16.msra.mxu0 0
      %1184 = vmatprep.subr.bf16.mxu0 0
      %1185 = vmatpush1.bf16.msra.mxu0 0
      %1186 = vmatprep.subr.bf16.mxu0 0
      %1187 = vmatpush1.bf16.msra.mxu0 0
      %1188 = vmatprep.subr.bf16.mxu0 0
      %1189 = vmatpush1.bf16.msra.mxu0 0
      %1190 = vmatprep.subr.bf16.mxu0 0
      %1191 = vmatpush1.bf16.msra.mxu0 0
      %1192 = vmatprep.subr.bf16.mxu0 0
      %1193 = vmatpush1.bf16.msra.mxu0 0
      %1194 = vmatprep.mubr.bf16.mxu0 0
      %1195 = vmatmul.mubr.bf16.gmra.mrb[0].mxu0 %v1151
      %v1196 = vpop.f32.mrb[0].mxu0
      %v1197 = vadd.f32 0.0, %v1196
      %v1198 = vpop.f32.mrb[0].mxu0
      %v1199 = vpop.f32.mrb[0].mxu0
      %v1200 = vadd.f32 0.0, %v1199
      %v1201 = vpop.f32.mrb[0].mxu0
      %1202 = vmatprep.mubr.bf16.mxu0 0
      %1203 = vmatmul.mubr.bf16.gmra.mrb[0].mxu0 %v1154
      %v1204 = vpop.f32.mrb[0].mxu0
      %v1205 = vadd.f32 0.0, %v1204
      %v1206 = vpop.f32.mrb[0].mxu0
      %v1207 = vpop.f32.mrb[0].mxu0
      %v1208 = vadd.f32 0.0, %v1207
      %v1209 = vpop.f32.mrb[0].mxu0
      %1210 = vmatprep.mubr.bf16.mxu0 0
      %1211 = vmatmul.mubr.bf16.gmra.mrb[0].mxu0 %v1157
      %v1212 = vpop.f32.mrb[0].mxu0
      %v1213 = vadd.f32 0.0, %v1212
      %v1214 = vpop.f32.mrb[0].mxu0
      %v1215 = vpop.f32.mrb[0].mxu0
      %v1216 = vadd.f32 0.0, %v1215
      %v1217 = vpop.f32.mrb[0].mxu0
      %1218 = vdwg.mxu0
      %v1219 = vadd.f32 %v1086, %v1197
      %v1220 = vadd.f32 %v1087, %v1200
      %v1221 = vadd.f32 %v1088, %v1205
      %v1222 = vadd.f32 %v1089, %v1208
      %v1223 = vadd.f32 %v1090, %v1213
      %v1224 = vadd.f32 %v1091, %v1216
      %v1225 = vld [vmem:[%s329 + $0x8] sm:$0xe]
      %v1226 = vld [vmem:[%s335 + $0x10] sm:$0x3]
      %v1228 = vunpack.c.l.b16 %v1225
      %v1229 = vpack.c.b16 %v1108, %v1228
      %v1230 = vrot.slane %v1229, 1
      %v1231 = vrot.slane %v1115, 1
      %v1232 = vsel %vm621, %v1230, %v1231
      %v1233 = vrot.slane %v1116, 1
      %v1234 = vsel %vm621, %v1231, %v1233
      %v1235 = vrot.slane %v1117, 1
      %v1236 = vsel %vm621, %v1233, %v1235
      %v1238 = vsel %vm405, %v1232, 0
      %v1241 = vsel %vm405, %v1234, 0
      %v1244 = vsel %vm405, %v1236, 0
      %v1247 = vsel %vm415, %v1226, 0
      %1249 = vmatprep.subr.bf16.mxu0 0
      %1250 = vmatpush1.bf16.msra.mxu0 %v1247
      %1251 = vmatprep.subr.bf16.mxu0 0
      %1252 = vmatpush1.bf16.msra.mxu0 0
      %1253 = vmatprep.subr.bf16.mxu0 0
      %1254 = vmatpush1.bf16.msra.mxu0 0
      %1255 = vmatprep.subr.bf16.mxu0 0
      %1256 = vmatpush1.bf16.msra.mxu0 0
      %1257 = vmatprep.subr.bf16.mxu0 0
      %1258 = vmatpush1.bf16.msra.mxu0 0
      %1259 = vmatprep.subr.bf16.mxu0 0
      %1260 = vmatpush1.bf16.msra.mxu0 0
      %1261 = vmatprep.subr.bf16.mxu0 0
      %1262 = vmatpush1.bf16.msra.mxu0 0
      %1263 = vmatprep.subr.bf16.mxu0 0
      %1264 = vmatpush1.bf16.msra.mxu0 0
      %1265 = vmatprep.subr.bf16.mxu0 0
      %1266 = vmatpush1.bf16.msra.mxu0 0
      %1267 = vmatprep.subr.bf16.mxu0 0
      %1268 = vmatpush1.bf16.msra.mxu0 0
      %1269 = vmatprep.subr.bf16.mxu0 0
      %1270 = vmatpush1.bf16.msra.mxu0 0
      %1271 = vmatprep.subr.bf16.mxu0 0
      %1272 = vmatpush1.bf16.msra.mxu0 0
      %1273 = vmatprep.subr.bf16.mxu0 0
      %1274 = vmatpush1.bf16.msra.mxu0 0
      %1275 = vmatprep.subr.bf16.mxu0 0
      %1276 = vmatpush1.bf16.msra.mxu0 0
      %1277 = vmatprep.subr.bf16.mxu0 0
      %1278 = vmatpush1.bf16.msra.mxu0 0
      %1279 = vmatprep.subr.bf16.mxu0 0
      %1280 = vmatpush1.bf16.msra.mxu0 0
      %1281 = vmatprep.mubr.bf16.mxu0 0
      %1282 = vmatmul.mubr.bf16.gmra.mrb[0].mxu0 %v1238
      %v1283 = vpop.f32.mrb[0].mxu0
      %v1284 = vadd.f32 0.0, %v1283
      %v1285 = vpop.f32.mrb[0].mxu0
      %v1286 = vpop.f32.mrb[0].mxu0
      %v1287 = vadd.f32 0.0, %v1286
      %v1288 = vpop.f32.mrb[0].mxu0
      %1289 = vmatprep.mubr.bf16.mxu0 0
      %1290 = vmatmul.mubr.bf16.gmra.mrb[0].mxu0 %v1241
      %v1291 = vpop.f32.mrb[0].mxu0
      %v1292 = vadd.f32 0.0, %v1291
      %v1293 = vpop.f32.mrb[0].mxu0
      %v1294 = vpop.f32.mrb[0].mxu0
      %v1295 = vadd.f32 0.0, %v1294
      %v1296 = vpop.f32.mrb[0].mxu0
      %1297 = vmatprep.mubr.bf16.mxu0 0
      %1298 = vmatmul.mubr.bf16.gmra.mrb[0].mxu0 %v1244
      %v1299 = vpop.f32.mrb[0].mxu0
      %v1300 = vadd.f32 0.0, %v1299
      %v1301 = vpop.f32.mrb[0].mxu0
      %v1302 = vpop.f32.mrb[0].mxu0
      %v1303 = vadd.f32 0.0, %v1302
      %v1304 = vpop.f32.mrb[0].mxu0
      %1305 = vdwg.mxu0
      %v1306 = vadd.f32 %v1219, %v1284
      %v1307 = vadd.f32 %v1220, %v1287
      %v1308 = vadd.f32 %v1221, %v1292
      %v1309 = vadd.f32 %v1222, %v1295
      %v1310 = vadd.f32 %v1223, %v1300
      %v1311 = vadd.f32 %v1224, %v1303
      %1312 = vst [vmem:[#allocation2] sm:$0xff] %v1306
      %1313 = vst [vmem:[#allocation2 + $0x8] sm:$0xff] %v1307
      %1314 = vst [vmem:[#allocation2 + $0x10] sm:$0xff] %v1308
      %1315 = vst [vmem:[#allocation2 + $0x18] sm:$0xff] %v1309
      %1316 = vst [vmem:[#allocation2 + $0x20] sm:$0xff] %v1310
      %1317 = vst [vmem:[#allocation2 + $0x28] sm:$0xff] %v1311
      %p1318 = scmp.eq.s32.totalorder %s25, 2
      // Predicated region
      $region41: #{double_conv_block.4} parent=35 // pred_check
        %p1319 = pneg %p1318
      $region42: #{double_conv_block.4} parent=35 // pred_check_branch
        %1321 = sbr.rel (%p1319) target = $region44
      $region43: #{double_conv_block.4} parent=35 // pred_region
        %v1322 = vld [vmem:[#allocation2] sm:$0xff]
        %v1323 = vld [vmem:[#allocation2 + $0x8] sm:$0xff]
        %v1324 = vld [vmem:[#allocation2 + $0x10] sm:$0xff]
        %v1325 = vld [vmem:[#allocation2 + $0x18] sm:$0xff]
        %v1326 = vld [vmem:[#allocation2 + $0x20] sm:$0xff]
        %v1327 = vld [vmem:[#allocation2 + $0x28] sm:$0xff]
        %1328 = vst [vmem:[%s344] sm:$0xff] %v1322
        %1329 = vst [vmem:[%s344 + $0x8] sm:$0xff] %v1323
        %1330 = vst [vmem:[%s344 + $0x10] sm:$0xff] %v1324
        %1331 = vst [vmem:[%s344 + $0x18] sm:$0xff] %v1325
        %1332 = vst [vmem:[%s344 + $0x20] sm:$0xff] %v1326
        %1333 = vst [vmem:[%s344 + $0x28] sm:$0xff] %v1327
        %v1334 = vld [vmem:[%s3] sm:$0xff]
        %v1335 = vld [vmem:[%s3 + $0x8] sm:$0xff]
        %v1336 = vld [vmem:[%s3 + $0x10] sm:$0xff]
        %v1337 = vld [vmem:[%s3 + $0x18] sm:$0xff]
        %v1338 = vld [vmem:[%s3 + $0x20] sm:$0xff]
        %v1339 = vld [vmem:[%s3 + $0x28] sm:$0xff]
        %1341 = vset.pattern.permute.xlu0 0
        %1342 = vperm.xlu0 %1341, %v1334
        %v1343 = vpop.permute.xlu0 %1342
        %1346 = vset.pattern.permute.xlu0 0
        %1347 = vperm.xlu0 %1346, %v1335
        %v1348 = vpop.permute.xlu0 %1347
        %1351 = vset.pattern.permute.xlu0 0
        %1352 = vperm.xlu0 %1351, %v1336
        %v1353 = vpop.permute.xlu0 %1352
        %1356 = vset.pattern.permute.xlu0 0
        %1357 = vperm.xlu0 %1356, %v1337
        %v1358 = vpop.permute.xlu0 %1357
        %1361 = vset.pattern.permute.xlu0 0
        %1362 = vperm.xlu0 %1361, %v1338
        %v1363 = vpop.permute.xlu0 %1362
        %1366 = vset.pattern.permute.xlu0 0
        %1367 = vperm.xlu0 %1366, %v1339
        %v1368 = vpop.permute.xlu0 %1367
        %v1370 = vmul.f32 %v1322, %v1343
        %v1371 = vmul.f32 %v1323, %v1348
        %v1372 = vmul.f32 %v1324, %v1353
        %v1373 = vmul.f32 %v1325, %v1358
        %v1374 = vmul.f32 %v1326, %v1363
        %v1375 = vmul.f32 %v1327, %v1368
        %v1376 = vadd.f32 %v1370, %v1371
        %v1377 = vadd.f32 %v1376, %v1372
        %v1378 = vadd.f32 %v1377, %v1373
        %v1379 = vadd.f32 %v1378, %v1374
        %v1380 = vadd.f32 %v1379, %v1375
        %v1381 = vrot.slane %v1380, 4
        %v1382 = vadd.f32 %v1380, %v1381
        %v1383 = vrot.slane %v1382, 2
        %v1384 = vadd.f32 %v1382, %v1383
        %v1385 = vrot.slane %v1384, 1
        %v1386 = vadd.f32 %v1384, %v1385
        %1387 = vst [vmem:[%s351] sm:$0x1] %v1386
        %v1388 = vmul.f32 %v1370, %v1322
        %v1389 = vmul.f32 %v1371, %v1323
        %v1390 = vmul.f32 %v1372, %v1324
        %v1391 = vmul.f32 %v1373, %v1325
        %v1392 = vmul.f32 %v1374, %v1326
        %v1393 = vmul.f32 %v1375, %v1327
        %v1394 = vadd.f32 %v1388, %v1389
        %v1395 = vadd.f32 %v1394, %v1390
        %v1396 = vadd.f32 %v1395, %v1391
        %v1397 = vadd.f32 %v1396, %v1392
        %v1398 = vadd.f32 %v1397, %v1393
        %v1399 = vrot.slane %v1398, 4
        %v1400 = vadd.f32 %v1398, %v1399
        %v1401 = vrot.slane %v1400, 2
        %v1402 = vadd.f32 %v1400, %v1401
        %v1403 = vrot.slane %v1402, 1
        %v1404 = vadd.f32 %v1402, %v1403
        %1405 = vst [vmem:[%s358] sm:$0x1] %v1404
      $region44: #{double_conv_block.4} parent=35 // pred_fallthru
        _
      %p1406 = scmp.lt.s32.totalorder %s23, 1
      %s1407 = scalar_select %p1406, %s23, 1
      %p1408 = scmp.lt.s32.totalorder %s24, 5
      %s1409 = scalar_select %p1408, %s24, 5
      %s1410 = smul.addr %s1409, 6
      %s1411 = smul.addr %s1407, 36
      %s1412 = sadd.s32 %s1410, %s1411
      %s1413 = smul.addr %s1412, 8
      %s1414 = scalar_lea.vmem %s4, %s1413
      %p1415 = scmp.lt.s32.totalorder %s23, 1
      %s1416 = scalar_select %p1415, %s23, 1
      %p1417 = scmp.lt.s32.totalorder %s24, 5
      %s1418 = scalar_select %p1417, %s24, 5
      %s1419 = smul.addr %s1416, 6
      %s1420 = sadd.s32 %s1418, %s1419
      %s1421 = scalar_lea.vmem %s5, %s1420
      %p1422 = scmp.lt.s32.totalorder %s23, 1
      %s1423 = scalar_select %p1422, %s23, 1
      %p1424 = scmp.lt.s32.totalorder %s24, 5
      %s1425 = scalar_select %p1424, %s24, 5
      %s1426 = smul.addr %s1423, 6
      %s1427 = sadd.s32 %s1425, %s1426
      %s1428 = scalar_lea.vmem %s6, %s1427
      // Predicated region
      $region45: #{double_conv_block.4} parent=35 // pred_check
        %p1429 = pneg %p155
      $region46: #{double_conv_block.4} parent=35 // pred_check_branch
        %1431 = sbr.rel (%p1429) target = $region48
      $region47: #{double_conv_block.4} parent=35 // pred_region
        _
      $region48: #{double_conv_block.4} parent=35 // pred_fallthru
        _
      // Predicated region
      $region49: #{double_conv_block.4} parent=35 // pred_check
        %p1432 = pneg %p183
      $region50: #{double_conv_block.4} parent=35 // pred_check_branch
        %1434 = sbr.rel (%p1432) target = $region52
      $region51: #{double_conv_block.4} parent=35 // pred_region
        _
      $region52: #{double_conv_block.4} parent=35 // pred_fallthru
        _
      // Predicated region
      $region53: #{double_conv_block.4} parent=35 // pred_check
        %p1435 = pneg %p211
      $region54: #{double_conv_block.4} parent=35 // pred_check_branch
        %1437 = sbr.rel (%p1435) target = $region56
      $region55: #{double_conv_block.4} parent=35 // pred_region
        _
      $region56: #{double_conv_block.4} parent=35 // pred_fallthru
        _
    $region36: #{double_conv_block.4} parent=5 // pred_fallthru
      _
    %p1438 = scmp.le.s32.totalorder 2, %s13
    // Predicated region
    $region57: #{double_conv_block.4} parent=5 // pred_check
      %p1439 = pneg %p1438
    $region58: #{double_conv_block.4} parent=5 // pred_check_branch
      %1441 = sbr.rel (%p1439) target = $region60
    $region59: #{double_conv_block.4} parent=5 // pred_region
      %s1442 = ssub.s32 %s13, 2
      // Predicated region
      $region61: #{double_conv_block.4} parent=59 // pred_check
        %p1443 = pneg %p161
      $region62: #{double_conv_block.4} parent=59 // pred_check_branch
        %1445 = sbr.rel (%p1443) target = $region64
      $region63: #{double_conv_block.4} parent=59 // pred_region
        %p1446 = scmp.lt.s32.totalorder %s26, 1
        %s1447 = scalar_select %p1446, %s26, 1
        %p1448 = scmp.lt.s32.totalorder %s27, 5
        %s1449 = scalar_select %p1448, %s27, 5
        %s1450 = smul.addr %s1449, 6
        %s1451 = smul.addr %s1447, 36
        %s1452 = sadd.s32 %s1450, %s1451
        %s1453 = smul.addr %s1452, 8
        %s1454 = scalar_lea.vmem %s4, %s1453
      $region64: #{double_conv_block.4} parent=59 // pred_fallthru
        _
      // Predicated region
      $region65: #{double_conv_block.4} parent=59 // pred_check
        %p1455 = pneg %p189
      $region66: #{double_conv_block.4} parent=59 // pred_check_branch
        %1457 = sbr.rel (%p1455) target = $region68
      $region67: #{double_conv_block.4} parent=59 // pred_region
        %p1458 = scmp.lt.s32.totalorder %s26, 1
        %s1459 = scalar_select %p1458, %s26, 1
        %p1460 = scmp.lt.s32.totalorder %s27, 5
        %s1461 = scalar_select %p1460, %s27, 5
        %s1462 = smul.addr %s1459, 6
        %s1463 = sadd.s32 %s1461, %s1462
        %s1464 = scalar_lea.vmem %s5, %s1463
      $region68: #{double_conv_block.4} parent=59 // pred_fallthru
        _
      // Predicated region
      $region69: #{double_conv_block.4} parent=59 // pred_check
        %p1465 = pneg %p217
      $region70: #{double_conv_block.4} parent=59 // pred_check_branch
        %1467 = sbr.rel (%p1465) target = $region72
      $region71: #{double_conv_block.4} parent=59 // pred_region
        %p1468 = scmp.lt.s32.totalorder %s26, 1
        %s1469 = scalar_select %p1468, %s26, 1
        %p1470 = scmp.lt.s32.totalorder %s27, 5
        %s1471 = scalar_select %p1470, %s27, 5
        %s1472 = smul.addr %s1469, 6
        %s1473 = sadd.s32 %s1471, %s1472
        %s1474 = scalar_lea.vmem %s6, %s1473
      $region72: #{double_conv_block.4} parent=59 // pred_fallthru
        _
    $region60: #{double_conv_block.4} parent=5 // pred_fallthru
      _
  $region6: #{double_conv_block.4} parent=0 // loop_footer
    %s17 = sadd.s32 1, %s13
  $region7: #{double_conv_block.4} parent=0 // loop_footer_branch
    %12 = sbr.rel target = $region3
  $region8: #{double_conv_block.4} parent=0 // loop_exit
    _

// kernel: double_conv_block.7
$region0: #{double_conv_block.7}
  #allocation0 [shape = 'u32[]', space=smem, size = 0x4, offset = 0x4, fixed_abs, tag = 'smem constant byte address 0x4 - core index']
  #allocation1 [shape = 'u32[144,128]{1,0:T(1,128)}', space=vmem, size = 0x12000, scoped, tag = 'internal scratch']
  %s0 = inlined_call_operand.vmem [shape: f32[2,4,24,128], index: 0, kind: input, shape index: {}]
  %s1 = inlined_call_operand.vmem [shape: f32[1,128], index: 1, kind: input, shape index: {}]
  %s2 = inlined_call_operand.vmem [shape: f32[1,128], index: 2, kind: input, shape index: {}]
  %s3 = inlined_call_operand.vmem [shape: f32[2,4,24,128], index: 3, kind: output, shape index: {}]
  %s4 = sld [smem:[#allocation0]]
  $region45: #{double_conv_block.7} parent=0
    _
  %s6 = ssub.s32 1, %s4
  %s7 = scalar_select 0, %s6, %s4
  loop: start=0, step=1, limit=10
  $region2: #{double_conv_block.7} parent=0 // loop_pre_header
    _
  $region3: #{double_conv_block.7} parent=0 // loop_header
    %s9 = sphi 0, %s13
    %p10 = scmp.ge.s32.totalorder %s9, 10
    %s16 = sphi 0, %s28
    %s17 = sphi 0, %s24
    %s18 = sphi 0, %s16
    %s19 = sphi 0, %s17
    %s20 = sphi 0, %s18
    %s21 = sphi 0, %s19
    %s33 = sphi 0, %s35
    %s36 = sphi 0, %s33
    %s37 = sphi 0, %s36
    %s53 = sphi 0, %s37
    %s57 = sphi 0, %s57
    %s59 = sphi 0, %s57
    %s60 = sphi 0, %s59
    %s74 = sphi 0, %s60
    %s78 = sphi 0, %s78
    %s80 = sphi 0, %s78
    %s81 = sphi 0, %s80
    %s95 = sphi 0, %s81
    %s103 = sphi 0, %s105
    %s106 = sphi 0, %s103
    %s107 = sphi 0, %s106
    %s123 = sphi 0, %s107
  $region4: #{double_conv_block.7} parent=0 // loop_header_branch
    %12 = sbr.rel (%p10) target = $region8
  $region5: #{double_conv_block.7} parent=0 // loop_body
    %s14 = ssub.s32 %s9, 1
    %s15 = ssub.s32 %s9, 2
    %s22 = sadd.s32 1, %s17
    %p23 = scmp.ge.s32.totalorder %s22, 4
    %s24 = scalar_select %p23, 0, %s22
    %s25 = sadd.s32 1, %s16
    %s26 = scalar_select %p23, %s25, %s16
    %p27 = scmp.ge.s32.totalorder %s26, 2
    %s28 = scalar_select %p27, 0, %s26
    %s29 = ssub.s32 %s16, %s28
    %s30 = ssub.s32 %s17, %s24
    %s31 = sor.u32 %s29, %s30
    %p32 = scmp.eq.s32.totalorder %s31, 0
    %s34 = sadd.s32 %s33, 1
    %s35 = scalar_select %p32, %s33, %s34
    %p38 = pneg %p32
    %p39 = scmp.eq.s32.totalorder %s9, 7
    %p40 = por %p38, %p39
    %p41 = scmp.ne.s32.totalorder %s33, %s36
    %p42 = scmp.eq.s32.totalorder %s9, 0
    %p43 = por %p41, %p42
    %p44 = scmp.ne.s32.totalorder %s33, %s36
    %p45 = scmp.eq.s32.totalorder %s14, 7
    %p46 = por %p44, %p45
    %p47 = scmp.ne.s32.totalorder %s36, %s37
    %p48 = scmp.eq.s32.totalorder %s14, 0
    %p49 = por %p47, %p48
    %p50 = scmp.ne.s32.totalorder %s36, %s37
    %p51 = scmp.eq.s32.totalorder %s15, 7
    %p52 = por %p50, %p51
    %p54 = scmp.ne.s32.totalorder %s37, %s53
    %p55 = scmp.eq.s32.totalorder %s15, 0
    %p56 = por %p54, %p55
    %s58 = sadd.s32 %s57, 1
    %p61 = scmp.eq.s32.totalorder %s9, 7
    %p62 = scmp.ne.s32.totalorder %s57, %s59
    %p63 = scmp.eq.s32.totalorder %s9, 0
    %p64 = por %p62, %p63
    %p65 = scmp.ne.s32.totalorder %s57, %s59
    %p66 = scmp.eq.s32.totalorder %s14, 7
    %p67 = por %p65, %p66
    %p68 = scmp.ne.s32.totalorder %s59, %s60
    %p69 = scmp.eq.s32.totalorder %s14, 0
    %p70 = por %p68, %p69
    %p71 = scmp.ne.s32.totalorder %s59, %s60
    %p72 = scmp.eq.s32.totalorder %s15, 7
    %p73 = por %p71, %p72
    %p75 = scmp.ne.s32.totalorder %s60, %s74
    %p76 = scmp.eq.s32.totalorder %s15, 0
    %p77 = por %p75, %p76
    %s79 = sadd.s32 %s78, 1
    %p82 = scmp.eq.s32.totalorder %s9, 7
    %p83 = scmp.ne.s32.totalorder %s78, %s80
    %p84 = scmp.eq.s32.totalorder %s9, 0
    %p85 = por %p83, %p84
    %p86 = scmp.ne.s32.totalorder %s78, %s80
    %p87 = scmp.eq.s32.totalorder %s14, 7
    %p88 = por %p86, %p87
    %p89 = scmp.ne.s32.totalorder %s80, %s81
    %p90 = scmp.eq.s32.totalorder %s14, 0
    %p91 = por %p89, %p90
    %p92 = scmp.ne.s32.totalorder %s80, %s81
    %p93 = scmp.eq.s32.totalorder %s15, 7
    %p94 = por %p92, %p93
    %p96 = scmp.ne.s32.totalorder %s81, %s95
    %p97 = scmp.eq.s32.totalorder %s15, 0
    %p98 = por %p96, %p97
    %s99 = ssub.s32 %s16, %s28
    %s100 = ssub.s32 %s17, %s24
    %s101 = sor.u32 %s99, %s100
    %p102 = scmp.eq.s32.totalorder %s101, 0
    %s104 = sadd.s32 %s103, 1
    %s105 = scalar_select %p102, %s103, %s104
    %p108 = pneg %p102
    %p109 = scmp.eq.s32.totalorder %s9, 7
    %p110 = por %p108, %p109
    %p111 = scmp.ne.s32.totalorder %s103, %s106
    %p112 = scmp.eq.s32.totalorder %s9, 0
    %p113 = por %p111, %p112
    %p114 = scmp.ne.s32.totalorder %s103, %s106
    %p115 = scmp.eq.s32.totalorder %s14, 7
    %p116 = por %p114, %p115
    %p117 = scmp.ne.s32.totalorder %s106, %s107
    %p118 = scmp.eq.s32.totalorder %s14, 0
    %p119 = por %p117, %p118
    %p120 = scmp.ne.s32.totalorder %s106, %s107
    %p121 = scmp.eq.s32.totalorder %s15, 7
    %p122 = por %p120, %p121
    %p124 = scmp.ne.s32.totalorder %s107, %s123
    %p125 = scmp.eq.s32.totalorder %s15, 0
    %p126 = por %p124, %p125
    %p127 = scmp.le.s32.totalorder 1, %s9
    %p128 = scmp.lt.s32.totalorder %s9, 9
    %p129 = pnand %p127, %p128
    %p130 = pneg %p129
    // Predicated region
    $region9: #{double_conv_block.7} parent=5 // pred_check
      _
    $region10: #{double_conv_block.7} parent=5 // pred_check_branch
      %132 = sbr.rel (%p129) target = $region12
    $region11: #{double_conv_block.7} parent=5 // pred_region
      %s133 = ssub.s32 %s9, 1
      // Predicated region
      $region13: #{double_conv_block.7} parent=11 // pred_check
        %p134 = pneg %p70
      $region14: #{double_conv_block.7} parent=11 // pred_check_branch
        %136 = sbr.rel (%p134) target = $region16
      $region15: #{double_conv_block.7} parent=11 // pred_region
        _
      $region16: #{double_conv_block.7} parent=11 // pred_fallthru
        _
      // Predicated region
      $region17: #{double_conv_block.7} parent=11 // pred_check
        %p137 = pneg %p91
      $region18: #{double_conv_block.7} parent=11 // pred_check_branch
        %139 = sbr.rel (%p137) target = $region20
      $region19: #{double_conv_block.7} parent=11 // pred_region
        _
      $region20: #{double_conv_block.7} parent=11 // pred_fallthru
        _
    $region12: #{double_conv_block.7} parent=5 // pred_fallthru
      _
    %p140 = scmp.lt.s32.totalorder %s9, 8
    // Predicated region
    $region21: #{double_conv_block.7} parent=5 // pred_check
      %p141 = pneg %p140
    $region22: #{double_conv_block.7} parent=5 // pred_check_branch
      %143 = sbr.rel (%p141) target = $region24
    $region23: #{double_conv_block.7} parent=5 // pred_region
      // Predicated region
      $region25: #{double_conv_block.7} parent=23 // pred_check
        %p144 = pneg %p43
      $region26: #{double_conv_block.7} parent=23 // pred_check_branch
        %146 = sbr.rel (%p144) target = $region28
      $region27: #{double_conv_block.7} parent=23 // pred_region
        %p147 = scmp.lt.s32.totalorder %s16, 1
        %s148 = scalar_select %p147, %s16, 1
        %p149 = scmp.lt.s32.totalorder %s17, 3
        %s150 = scalar_select %p149, %s17, 3
        %s151 = smul.addr %s150, 3
        %s152 = smul.addr %s148, 12
        %s153 = sadd.s32 %s151, %s152
        %s154 = smul.addr %s153, 8
        %s155 = scalar_lea.vmem %s0, %s154
      $region28: #{double_conv_block.7} parent=23 // pred_fallthru
        _
    $region24: #{double_conv_block.7} parent=5 // pred_fallthru
      _
    %p156 = scmp.le.s32.totalorder 1, %s9
    %p157 = scmp.lt.s32.totalorder %s9, 9
    %p158 = pnand %p156, %p157
    %p159 = pneg %p158
    // Predicated region
    $region29: #{double_conv_block.7} parent=5 // pred_check
      _
    $region30: #{double_conv_block.7} parent=5 // pred_check_branch
      %161 = sbr.rel (%p158) target = $region32
    $region31: #{double_conv_block.7} parent=5 // pred_region
      %s162 = ssub.s32 %s9, 1
      %p163 = scmp.lt.s32.totalorder %s18, 1
      %s164 = scalar_select %p163, %s18, 1
      %p165 = scmp.lt.s32.totalorder %s19, 3
      %s166 = scalar_select %p165, %s19, 3
      %s167 = smul.addr %s166, 3
      %s168 = smul.addr %s164, 12
      %s169 = sadd.s32 %s167, %s168
      %s170 = smul.addr %s169, 8
      %s171 = scalar_lea.vmem %s0, %s170
      %p172 = pneg %p49
      %p173 = pneg %p46
      %p174 = pneg %p70
      %p175 = pneg %p67
      %p176 = pneg %p91
      %p177 = pneg %p88
      %p178 = pneg %p119
      %p179 = pneg %p116
      %p180 = scmp.lt.s32.totalorder %s18, 1
      %s181 = scalar_select %p180, %s18, 1
      %p182 = scmp.lt.s32.totalorder %s19, 3
      %s183 = scalar_select %p182, %s19, 3
      %s184 = smul.addr %s183, 3
      %s185 = smul.addr %s181, 12
      %s186 = sadd.s32 %s184, %s185
      %s187 = smul.addr %s186, 8
      %s188 = scalar_lea.vmem %s3, %s187
      %p189 = scmp.lt.s32.totalorder %s18, 1
      %s190 = scalar_select %p189, %s18, 1
      %p191 = scmp.lt.s32.totalorder %s19, 3
      %s192 = scalar_select %p191, %s19, 3
      %s193 = smul.addr %s192, 3
      %s194 = smul.addr %s190, 12
      %s195 = sadd.s32 %s193, %s194
      %s196 = smul.addr %s195, 8
      %s197 = scalar_lea.vmem %s0, %s196
      %p198 = scmp.lt.s32.totalorder %s18, 1
      %s199 = scalar_select %p198, %s18, 1
      %p200 = scmp.lt.s32.totalorder %s19, 3
      %s201 = scalar_select %p200, %s19, 3
      %s202 = smul.addr %s201, 3
      %s203 = smul.addr %s199, 12
      %s204 = sadd.s32 %s202, %s203
      %s205 = smul.addr %s204, 8
      %s206 = scalar_lea.vmem %s3, %s205
      %v207 = vld [vmem:[%s197] sm:$0xff]
      %v208 = vld [vmem:[%s197 + $0x8] sm:$0xff]
      %v209 = vld [vmem:[%s197 + $0x10] sm:$0xff]
      %v210 = vld [vmem:[%s1] sm:$0x1]
      %v212 = vlaneseq
      %v213 = vshrl.u32 %v212, 7
      %v214 = vsub.s32 0, %v213
      %v215 = vrot.slane %v210, %v214
      %v217 = vmul.f32 %v207, %v215
      %v218 = vmul.f32 %v208, %v215
      %v219 = vmul.f32 %v209, %v215
      %v220 = vld [vmem:[%s2] sm:$0x1]
      %v222 = vlaneseq
      %v223 = vshrl.u32 %v222, 7
      %v224 = vsub.s32 0, %v223
      %v225 = vrot.slane %v220, %v224
      %v227 = vadd.f32 %v217, %v225
      %v228 = vadd.f32 %v218, %v225
      %v229 = vadd.f32 %v219, %v225
      %v230 = vmax.f32 %v227, 0.0
      %v231 = vmax.f32 %v228, 0.0
      %v232 = vmax.f32 %v229, 0.0
      %233 = vst [vmem:[%s206] sm:$0xff] %v230
      %234 = vst [vmem:[%s206 + $0x8] sm:$0xff] %v231
      %235 = vst [vmem:[%s206 + $0x10] sm:$0xff] %v232
      %p236 = scmp.lt.s32.totalorder %s18, 1
      %s237 = scalar_select %p236, %s18, 1
      %p238 = scmp.lt.s32.totalorder %s19, 3
      %s239 = scalar_select %p238, %s19, 3
      %s240 = smul.addr %s239, 3
      %s241 = smul.addr %s237, 12
      %s242 = sadd.s32 %s240, %s241
      %s243 = smul.addr %s242, 8
      %s244 = scalar_lea.vmem %s3, %s243
      // Predicated region
      $region33: #{double_conv_block.7} parent=31 // pred_check
        %p245 = pneg %p116
      $region34: #{double_conv_block.7} parent=31 // pred_check_branch
        %247 = sbr.rel (%p245) target = $region36
      $region35: #{double_conv_block.7} parent=31 // pred_region
        _
      $region36: #{double_conv_block.7} parent=31 // pred_fallthru
        _
    $region32: #{double_conv_block.7} parent=5 // pred_fallthru
      _
    %p248 = scmp.le.s32.totalorder 2, %s9
    // Predicated region
    $region37: #{double_conv_block.7} parent=5 // pred_check
      %p249 = pneg %p248
    $region38: #{double_conv_block.7} parent=5 // pred_check_branch
      %251 = sbr.rel (%p249) target = $region40
    $region39: #{double_conv_block.7} parent=5 // pred_region
      %s252 = ssub.s32 %s9, 2
      // Predicated region
      $region41: #{double_conv_block.7} parent=39 // pred_check
        %p253 = pneg %p122
      $region42: #{double_conv_block.7} parent=39 // pred_check_branch
        %255 = sbr.rel (%p253) target = $region44
      $region43: #{double_conv_block.7} parent=39 // pred_region
        %p256 = scmp.lt.s32.totalorder %s20, 1
        %s257 = scalar_select %p256, %s20, 1
        %p258 = scmp.lt.s32.totalorder %s21, 3
        %s259 = scalar_select %p258, %s21, 3
        %s260 = smul.addr %s259, 3
        %s261 = smul.addr %s257, 12
        %s262 = sadd.s32 %s260, %s261
        %s263 = smul.addr %s262, 8
        %s264 = scalar_lea.vmem %s3, %s263
      $region44: #{double_conv_block.7} parent=39 // pred_fallthru
        _
    $region40: #{double_conv_block.7} parent=5 // pred_fallthru
      _
  $region6: #{double_conv_block.7} parent=0 // loop_footer
    %s13 = sadd.s32 1, %s9
  $region7: #{double_conv_block.7} parent=0 // loop_footer_branch
    %8 = sbr.rel target = $region3
  $region8: #{double_conv_block.7} parent=0 // loop_exit
    _

// kernel: double_conv_block.6
$region0: #{double_conv_block.6}
  #allocation0 [shape = 'u32[]', space=smem, size = 0x4, offset = 0x4, fixed_abs, tag = 'smem constant byte address 0x4 - core index']
  #allocation1 [shape = 'u32[144,128]{1,0:T(1,128)}', space=vmem, size = 0x12000, scoped, tag = 'internal scratch']
  #allocation2 [shape = 'f32[24,128]{1,0:T(8,128)}', space=vmem, size = 0x3000, scoped, tag = 'scratch operand']
  %s0 = inlined_call_operand.vmem [shape: bf16[2,6,38,8], index: 0, kind: input, shape index: {}]
  %s1 = inlined_call_operand.vmem [shape: bf16[3,72,128], index: 1, kind: input, shape index: {}]
  %s2 = inlined_call_operand.vmem [shape: f32[1,128], index: 2, kind: input, shape index: {}]
  %s3 = inlined_call_operand.vmem [shape: f32[24,1], index: 3, kind: input, shape index: {}]
  %s4 = inlined_call_operand.vmem [shape: f32[2,4,24,128], index: 4, kind: output, shape index: {0}]
  %s5 = inlined_call_operand.vmem [shape: f32[2,4,1,128], index: 5, kind: output, shape index: {1}]
  %s6 = inlined_call_operand.vmem [shape: f32[2,4,1,128], index: 6, kind: output, shape index: {2}]
  %7 = xla_tuple %s4, %s5, %s6
  %s8 = sld [smem:[#allocation0]]
  $region73: #{double_conv_block.6} parent=0
    _
  %s10 = ssub.s32 1, %s8
  %s11 = scalar_select 0, %s10, %s8
  loop: start=0, step=1, limit=26
  $region2: #{double_conv_block.6} parent=0 // loop_pre_header
    _
  $region3: #{double_conv_block.6} parent=0 // loop_header
    %s13 = sphi 0, %s17
    %p14 = scmp.ge.s32.totalorder %s13, 26
    %s20 = sphi 0, %s39
    %s21 = sphi 0, %s35
    %s22 = sphi 0, %s31
    %s23 = sphi 0, %s20
    %s24 = sphi 0, %s21
    %s25 = sphi 0, %s22
    %s26 = sphi 0, %s23
    %s27 = sphi 0, %s24
    %s28 = sphi 0, %s25
    %s46 = sphi 0, %s48
    %s49 = sphi 0, %s46
    %s50 = sphi 0, %s49
    %s66 = sphi 0, %s50
    %s72 = sphi 0, %s74
    %s75 = sphi 0, %s72
    %s76 = sphi 0, %s75
    %s92 = sphi 0, %s76
    %s96 = sphi 0, %s96
    %s98 = sphi 0, %s96
    %s99 = sphi 0, %s98
    %s113 = sphi 0, %s99
    %s117 = sphi 0, %s117
    %s119 = sphi 0, %s117
    %s120 = sphi 0, %s119
    %s134 = sphi 0, %s120
    %s142 = sphi 0, %s144
    %s145 = sphi 0, %s142
    %s146 = sphi 0, %s145
    %s162 = sphi 0, %s146
    %s170 = sphi 0, %s172
    %s173 = sphi 0, %s170
    %s174 = sphi 0, %s173
    %s190 = sphi 0, %s174
    %s198 = sphi 0, %s200
    %s201 = sphi 0, %s198
    %s202 = sphi 0, %s201
    %s218 = sphi 0, %s202
  $region4: #{double_conv_block.6} parent=0 // loop_header_branch
    %16 = sbr.rel (%p14) target = $region8
  $region5: #{double_conv_block.6} parent=0 // loop_body
    %s18 = ssub.s32 %s13, 1
    %s19 = ssub.s32 %s13, 2
    %s29 = sadd.s32 1, %s22
    %p30 = scmp.ge.s32.totalorder %s29, 3
    %s31 = scalar_select %p30, 0, %s29
    %s32 = sadd.s32 1, %s21
    %s33 = scalar_select %p30, %s32, %s21
    %p34 = scmp.ge.s32.totalorder %s33, 4
    %s35 = scalar_select %p34, 0, %s33
    %s36 = sadd.s32 1, %s20
    %s37 = scalar_select %p34, %s36, %s20
    %p38 = scmp.ge.s32.totalorder %s37, 2
    %s39 = scalar_select %p38, 0, %s37
    %s40 = sadd.s32 %s21, %s22
    %s41 = sadd.s32 %s35, %s31
    %s42 = ssub.s32 %s20, %s39
    %s43 = ssub.s32 %s40, %s41
    %s44 = sor.u32 %s42, %s43
    %p45 = scmp.eq.s32.totalorder %s44, 0
    %s47 = sadd.s32 %s46, 1
    %s48 = scalar_select %p45, %s46, %s47
    %p51 = pneg %p45
    %p52 = scmp.eq.s32.totalorder %s13, 23
    %p53 = por %p51, %p52
    %p54 = scmp.ne.s32.totalorder %s46, %s49
    %p55 = scmp.eq.s32.totalorder %s13, 0
    %p56 = por %p54, %p55
    %p57 = scmp.ne.s32.totalorder %s46, %s49
    %p58 = scmp.eq.s32.totalorder %s18, 23
    %p59 = por %p57, %p58
    %p60 = scmp.ne.s32.totalorder %s49, %s50
    %p61 = scmp.eq.s32.totalorder %s18, 0
    %p62 = por %p60, %p61
    %p63 = scmp.ne.s32.totalorder %s49, %s50
    %p64 = scmp.eq.s32.totalorder %s19, 23
    %p65 = por %p63, %p64
    %p67 = scmp.ne.s32.totalorder %s50, %s66
    %p68 = scmp.eq.s32.totalorder %s19, 0
    %p69 = por %p67, %p68
    %s70 = ssub.s32 %s22, %s31
    %p71 = scmp.eq.s32.totalorder %s70, 0
    %s73 = sadd.s32 %s72, 1
    %s74 = scalar_select %p71, %s72, %s73
    %p77 = pneg %p71
    %p78 = scmp.eq.s32.totalorder %s13, 23
    %p79 = por %p77, %p78
    %p80 = scmp.ne.s32.totalorder %s72, %s75
    %p81 = scmp.eq.s32.totalorder %s13, 0
    %p82 = por %p80, %p81
    %p83 = scmp.ne.s32.totalorder %s72, %s75
    %p84 = scmp.eq.s32.totalorder %s18, 23
    %p85 = por %p83, %p84
    %p86 = scmp.ne.s32.totalorder %s75, %s76
    %p87 = scmp.eq.s32.totalorder %s18, 0
    %p88 = por %p86, %p87
    %p89 = scmp.ne.s32.totalorder %s75, %s76
    %p90 = scmp.eq.s32.totalorder %s19, 23
    %p91 = por %p89, %p90
    %p93 = scmp.ne.s32.totalorder %s76, %s92
    %p94 = scmp.eq.s32.totalorder %s19, 0
    %p95 = por %p93, %p94
    %s97 = sadd.s32 %s96, 1
    %p100 = scmp.eq.s32.totalorder %s13, 23
    %p101 = scmp.ne.s32.totalorder %s96, %s98
    %p102 = scmp.eq.s32.totalorder %s13, 0
    %p103 = por %p101, %p102
    %p104 = scmp.ne.s32.totalorder %s96, %s98
    %p105 = scmp.eq.s32.totalorder %s18, 23
    %p106 = por %p104, %p105
    %p107 = scmp.ne.s32.totalorder %s98, %s99
    %p108 = scmp.eq.s32.totalorder %s18, 0
    %p109 = por %p107, %p108
    %p110 = scmp.ne.s32.totalorder %s98, %s99
    %p111 = scmp.eq.s32.totalorder %s19, 23
    %p112 = por %p110, %p111
    %p114 = scmp.ne.s32.totalorder %s99, %s113
    %p115 = scmp.eq.s32.totalorder %s19, 0
    %p116 = por %p114, %p115
    %s118 = sadd.s32 %s117, 1
    %p121 = scmp.eq.s32.totalorder %s13, 23
    %p122 = scmp.ne.s32.totalorder %s117, %s119
    %p123 = scmp.eq.s32.totalorder %s13, 0
    %p124 = por %p122, %p123
    %p125 = scmp.ne.s32.totalorder %s117, %s119
    %p126 = scmp.eq.s32.totalorder %s18, 23
    %p127 = por %p125, %p126
    %p128 = scmp.ne.s32.totalorder %s119, %s120
    %p129 = scmp.eq.s32.totalorder %s18, 0
    %p130 = por %p128, %p129
    %p131 = scmp.ne.s32.totalorder %s119, %s120
    %p132 = scmp.eq.s32.totalorder %s19, 23
    %p133 = por %p131, %p132
    %p135 = scmp.ne.s32.totalorder %s120, %s134
    %p136 = scmp.eq.s32.totalorder %s19, 0
    %p137 = por %p135, %p136
    %s138 = ssub.s32 %s20, %s39
    %s139 = ssub.s32 %s21, %s35
    %s140 = sor.u32 %s138, %s139
    %p141 = scmp.eq.s32.totalorder %s140, 0
    %s143 = sadd.s32 %s142, 1
    %s144 = scalar_select %p141, %s142, %s143
    %p147 = pneg %p141
    %p148 = scmp.eq.s32.totalorder %s13, 23
    %p149 = por %p147, %p148
    %p150 = scmp.ne.s32.totalorder %s142, %s145
    %p151 = scmp.eq.s32.totalorder %s13, 0
    %p152 = por %p150, %p151
    %p153 = scmp.ne.s32.totalorder %s142, %s145
    %p154 = scmp.eq.s32.totalorder %s18, 23
    %p155 = por %p153, %p154
    %p156 = scmp.ne.s32.totalorder %s145, %s146
    %p157 = scmp.eq.s32.totalorder %s18, 0
    %p158 = por %p156, %p157
    %p159 = scmp.ne.s32.totalorder %s145, %s146
    %p160 = scmp.eq.s32.totalorder %s19, 23
    %p161 = por %p159, %p160
    %p163 = scmp.ne.s32.totalorder %s146, %s162
    %p164 = scmp.eq.s32.totalorder %s19, 0
    %p165 = por %p163, %p164
    %s166 = ssub.s32 %s20, %s39
    %s167 = ssub.s32 %s21, %s35
    %s168 = sor.u32 %s166, %s167
    %p169 = scmp.eq.s32.totalorder %s168, 0
    %s171 = sadd.s32 %s170, 1
    %s172 = scalar_select %p169, %s170, %s171
    %p175 = pneg %p169
    %p176 = scmp.eq.s32.totalorder %s13, 23
    %p177 = por %p175, %p176
    %p178 = scmp.ne.s32.totalorder %s170, %s173
    %p179 = scmp.eq.s32.totalorder %s13, 0
    %p180 = por %p178, %p179
    %p181 = scmp.ne.s32.totalorder %s170, %s173
    %p182 = scmp.eq.s32.totalorder %s18, 23
    %p183 = por %p181, %p182
    %p184 = scmp.ne.s32.totalorder %s173, %s174
    %p185 = scmp.eq.s32.totalorder %s18, 0
    %p186 = por %p184, %p185
    %p187 = scmp.ne.s32.totalorder %s173, %s174
    %p188 = scmp.eq.s32.totalorder %s19, 23
    %p189 = por %p187, %p188
    %p191 = scmp.ne.s32.totalorder %s174, %s190
    %p192 = scmp.eq.s32.totalorder %s19, 0
    %p193 = por %p191, %p192
    %s194 = ssub.s32 %s20, %s39
    %s195 = ssub.s32 %s21, %s35
    %s196 = sor.u32 %s194, %s195
    %p197 = scmp.eq.s32.totalorder %s196, 0
    %s199 = sadd.s32 %s198, 1
    %s200 = scalar_select %p197, %s198, %s199
    %p203 = pneg %p197
    %p204 = scmp.eq.s32.totalorder %s13, 23
    %p205 = por %p203, %p204
    %p206 = scmp.ne.s32.totalorder %s198, %s201
    %p207 = scmp.eq.s32.totalorder %s13, 0
    %p208 = por %p206, %p207
    %p209 = scmp.ne.s32.totalorder %s198, %s201
    %p210 = scmp.eq.s32.totalorder %s18, 23
    %p211 = por %p209, %p210
    %p212 = scmp.ne.s32.totalorder %s201, %s202
    %p213 = scmp.eq.s32.totalorder %s18, 0
    %p214 = por %p212, %p213
    %p215 = scmp.ne.s32.totalorder %s201, %s202
    %p216 = scmp.eq.s32.totalorder %s19, 23
    %p217 = por %p215, %p216
    %p219 = scmp.ne.s32.totalorder %s202, %s218
    %p220 = scmp.eq.s32.totalorder %s19, 0
    %p221 = por %p219, %p220
    %p222 = scmp.le.s32.totalorder 1, %s13
    %p223 = scmp.lt.s32.totalorder %s13, 25
    %p224 = pnand %p222, %p223
    %p225 = pneg %p224
    // Predicated region
    $region9: #{double_conv_block.6} parent=5 // pred_check
      _
    $region10: #{double_conv_block.6} parent=5 // pred_check_branch
      %227 = sbr.rel (%p224) target = $region12
    $region11: #{double_conv_block.6} parent=5 // pred_region
      %s228 = ssub.s32 %s13, 1
      // Predicated region
      $region13: #{double_conv_block.6} parent=11 // pred_check
        %p229 = pneg %p109
      $region14: #{double_conv_block.6} parent=11 // pred_check_branch
        %231 = sbr.rel (%p229) target = $region16
      $region15: #{double_conv_block.6} parent=11 // pred_region
        _
      $region16: #{double_conv_block.6} parent=11 // pred_fallthru
        _
      // Predicated region
      $region17: #{double_conv_block.6} parent=11 // pred_check
        %p232 = pneg %p130
      $region18: #{double_conv_block.6} parent=11 // pred_check_branch
        %234 = sbr.rel (%p232) target = $region20
      $region19: #{double_conv_block.6} parent=11 // pred_region
        _
      $region20: #{double_conv_block.6} parent=11 // pred_fallthru
        _
    $region12: #{double_conv_block.6} parent=5 // pred_fallthru
      _
    %p235 = scmp.lt.s32.totalorder %s13, 24
    // Predicated region
    $region21: #{double_conv_block.6} parent=5 // pred_check
      %p236 = pneg %p235
    $region22: #{double_conv_block.6} parent=5 // pred_check_branch
      %238 = sbr.rel (%p236) target = $region24
    $region23: #{double_conv_block.6} parent=5 // pred_region
      // Predicated region
      $region25: #{double_conv_block.6} parent=23 // pred_check
        %p239 = pneg %p56
      $region26: #{double_conv_block.6} parent=23 // pred_check_branch
        %241 = sbr.rel (%p239) target = $region28
      $region27: #{double_conv_block.6} parent=23 // pred_region
        %s242 = sadd.s32 %s21, %s22
        %p243 = scmp.lt.s32.totalorder %s20, 1
        %s244 = scalar_select %p243, %s20, 1
        %p245 = scmp.lt.s32.totalorder %s242, 5
        %s246 = scalar_select %p245, %s242, 5
        %s247 = smul.addr %s246, 5
        %s248 = smul.addr %s244, 30
        %s249 = sadd.s32 %s247, %s248
        %s250 = smul.addr %s249, 4
        %s251 = scalar_lea.vmem %s0, %s250
        %s252 = sadd.s32 %s21, %s22
      $region28: #{double_conv_block.6} parent=23 // pred_fallthru
        _
      // Predicated region
      $region29: #{double_conv_block.6} parent=23 // pred_check
        %p253 = pneg %p82
      $region30: #{double_conv_block.6} parent=23 // pred_check_branch
        %255 = sbr.rel (%p253) target = $region32
      $region31: #{double_conv_block.6} parent=23 // pred_region
        %p256 = scmp.lt.s32.totalorder %s22, 2
        %s257 = scalar_select %p256, %s22, 2
        %s258 = smul.addr %s257, 9
        %s259 = smul.addr %s258, 4
        %s260 = scalar_lea.vmem %s1, %s259
      $region32: #{double_conv_block.6} parent=23 // pred_fallthru
        _
    $region24: #{double_conv_block.6} parent=5 // pred_fallthru
      _
    %p261 = scmp.le.s32.totalorder 1, %s13
    %p262 = scmp.lt.s32.totalorder %s13, 25
    %p263 = pnand %p261, %p262
    %p264 = pneg %p263
    // Predicated region
    $region33: #{double_conv_block.6} parent=5 // pred_check
      _
    $region34: #{double_conv_block.6} parent=5 // pred_check_branch
      %266 = sbr.rel (%p263) target = $region36
    $region35: #{double_conv_block.6} parent=5 // pred_region
      %s267 = ssub.s32 %s13, 1
      %s268 = sadd.s32 %s24, %s25
      %p269 = scmp.lt.s32.totalorder %s23, 1
      %s270 = scalar_select %p269, %s23, 1
      %p271 = scmp.lt.s32.totalorder %s268, 5
      %s272 = scalar_select %p271, %s268, 5
      %s273 = smul.addr %s272, 5
      %s274 = smul.addr %s270, 30
      %s275 = sadd.s32 %s273, %s274
      %s276 = smul.addr %s275, 4
      %s277 = scalar_lea.vmem %s0, %s276
      %p278 = pneg %p62
      %p279 = pneg %p59
      %p280 = scmp.lt.s32.totalorder %s25, 2
      %s281 = scalar_select %p280, %s25, 2
      %s282 = smul.addr %s281, 9
      %s283 = smul.addr %s282, 4
      %s284 = scalar_lea.vmem %s1, %s283
      %p285 = pneg %p88
      %p286 = pneg %p85
      %p287 = pneg %p109
      %p288 = pneg %p106
      %p289 = pneg %p130
      %p290 = pneg %p127
      %p291 = pneg %p158
      %p292 = pneg %p155
      %p293 = scmp.lt.s32.totalorder %s23, 1
      %s294 = scalar_select %p293, %s23, 1
      %p295 = scmp.lt.s32.totalorder %s24, 3
      %s296 = scalar_select %p295, %s24, 3
      %s297 = smul.addr %s296, 3
      %s298 = smul.addr %s294, 12
      %s299 = sadd.s32 %s297, %s298
      %s300 = smul.addr %s299, 8
      %s301 = scalar_lea.vmem %s4, %s300
      %p302 = pneg %p186
      %p303 = pneg %p183
      %p304 = scmp.lt.s32.totalorder %s23, 1
      %s305 = scalar_select %p304, %s23, 1
      %p306 = scmp.lt.s32.totalorder %s24, 3
      %s307 = scalar_select %p306, %s24, 3
      %s308 = smul.addr %s305, 4
      %s309 = sadd.s32 %s307, %s308
      %s310 = scalar_lea.vmem %s5, %s309
      %p311 = pneg %p214
      %p312 = pneg %p211
      %p313 = scmp.lt.s32.totalorder %s23, 1
      %s314 = scalar_select %p313, %s23, 1
      %p315 = scmp.lt.s32.totalorder %s24, 3
      %s316 = scalar_select %p315, %s24, 3
      %s317 = smul.addr %s314, 4
      %s318 = sadd.s32 %s316, %s317
      %s319 = scalar_lea.vmem %s6, %s318
      %s320 = sadd.s32 %s24, %s25
      %p321 = scmp.lt.s32.totalorder %s23, 1
      %s322 = scalar_select %p321, %s23, 1
      %p323 = scmp.lt.s32.totalorder %s320, 5
      %s324 = scalar_select %p323, %s320, 5
      %s325 = smul.addr %s324, 5
      %s326 = smul.addr %s322, 30
      %s327 = sadd.s32 %s325, %s326
      %s328 = smul.addr %s327, 4
      %s329 = scalar_lea.vmem %s0, %s328
      %s330 = sadd.s32 %s24, %s25
      %p331 = scmp.lt.s32.totalorder %s25, 2
      %s332 = scalar_select %p331, %s25, 2
      %s333 = smul.addr %s332, 9
      %s334 = smul.addr %s333, 4
      %s335 = scalar_lea.vmem %s1, %s334
      %p336 = scmp.lt.s32.totalorder %s23, 1
      %s337 = scalar_select %p336, %s23, 1
      %p338 = scmp.lt.s32.totalorder %s24, 3
      %s339 = scalar_select %p338, %s24, 3
      %s340 = smul.addr %s339, 3
      %s341 = smul.addr %s337, 12
      %s342 = sadd.s32 %s340, %s341
      %s343 = smul.addr %s342, 8
      %s344 = scalar_lea.vmem %s4, %s343
      %p345 = scmp.lt.s32.totalorder %s23, 1
      %s346 = scalar_select %p345, %s23, 1
      %p347 = scmp.lt.s32.totalorder %s24, 3
      %s348 = scalar_select %p347, %s24, 3
      %s349 = smul.addr %s346, 4
      %s350 = sadd.s32 %s348, %s349
      %s351 = scalar_lea.vmem %s5, %s350
      %p352 = scmp.lt.s32.totalorder %s23, 1
      %s353 = scalar_select %p352, %s23, 1
      %p354 = scmp.lt.s32.totalorder %s24, 3
      %s355 = scalar_select %p354, %s24, 3
      %s356 = smul.addr %s353, 4
      %s357 = sadd.s32 %s355, %s356
      %s358 = scalar_lea.vmem %s6, %s357
      %p360 = scmp.eq.s32.totalorder %s25, 0
      // Predicated region
      $region37: #{double_conv_block.6} parent=35 // pred_check
        %p361 = pneg %p360
      $region38: #{double_conv_block.6} parent=35 // pred_check_branch
        %363 = sbr.rel (%p361) target = $region40
      $region39: #{double_conv_block.6} parent=35 // pred_region
        %v364 = vld [vmem:[%s2] sm:$0x1]
        %v366 = vlaneseq
        %v367 = vshrl.u32 %v366, 7
        %v368 = vsub.s32 0, %v367
        %v369 = vrot.slane %v364, %v368
        %371 = vst [vmem:[#allocation2] sm:$0xff] %v369
        %372 = vst [vmem:[#allocation2 + $0x8] sm:$0xff] %v369
        %373 = vst [vmem:[#allocation2 + $0x10] sm:$0xff] %v369
      $region40: #{double_conv_block.6} parent=35 // pred_fallthru
        _
      %v374 = vld [vmem:[#allocation2] sm:$0xff]
      %v375 = vld [vmem:[#allocation2 + $0x8] sm:$0xff]
      %v376 = vld [vmem:[#allocation2 + $0x10] sm:$0xff]
      %v377 = vld [vmem:[%s329] sm:$0xf]
      %v378 = vld [vmem:[%s329 + $0x4] sm:$0xf]
      %v379 = vld [vmem:[%s329 + $0x8] sm:$0xf]
      %v380 = vld [vmem:[%s335] sm:$0xf]
      %v384 = vunpack.c.l.b16 %v377
      %v385 = vunpack.c.l.b16 %v378
      %v386 = vunpack.c.l.b16 %v379
      %v387 = vpack.c.b16 %v385, %v384
      %v388 = vpack.c.b16 %v386, %v386
      %vm389 = vcmask 64512
      %v391 = vsel %vm389, %v387, 0
      %v394 = vsel %vm389, %v388, 0
      %vm396 = vcmask 1043456
      %v398 = vsel %vm396, %v380, 0
      %400 = vmatprep.subr.bf16.mxu0 0
      %401 = vmatpush1.bf16.msra.mxu0 %v398
      %402 = vmatprep.subr.bf16.mxu0 0
      %403 = vmatpush1.bf16.msra.mxu0 0
      %404 = vmatprep.subr.bf16.mxu0 0
      %405 = vmatpush1.bf16.msra.mxu0 0
      %406 = vmatprep.subr.bf16.mxu0 0
      %407 = vmatpush1.bf16.msra.mxu0 0
      %408 = vmatprep.subr.bf16.mxu0 0
      %409 = vmatpush1.bf16.msra.mxu0 0
      %410 = vmatprep.subr.bf16.mxu0 0
      %411 = vmatpush1.bf16.msra.mxu0 0
      %412 = vmatprep.subr.bf16.mxu0 0
      %413 = vmatpush1.bf16.msra.mxu0 0
      %414 = vmatprep.subr.bf16.mxu0 0
      %415 = vmatpush1.bf16.msra.mxu0 0
      %416 = vmatprep.subr.bf16.mxu0 0
      %417 = vmatpush1.bf16.msra.mxu0 0
      %418 = vmatprep.subr.bf16.mxu0 0
      %419 = vmatpush1.bf16.msra.mxu0 0
      %420 = vmatprep.subr.bf16.mxu0 0
      %421 = vmatpush1.bf16.msra.mxu0 0
      %422 = vmatprep.subr.bf16.mxu0 0
      %423 = vmatpush1.bf16.msra.mxu0 0
      %424 = vmatprep.subr.bf16.mxu0 0
      %425 = vmatpush1.bf16.msra.mxu0 0
      %426 = vmatprep.subr.bf16.mxu0 0
      %427 = vmatpush1.bf16.msra.mxu0 0
      %428 = vmatprep.subr.bf16.mxu0 0
      %429 = vmatpush1.bf16.msra.mxu0 0
      %430 = vmatprep.subr.bf16.mxu0 0
      %431 = vmatpush1.bf16.msra.mxu0 0
      %432 = vmatprep.mubr.bf16.mxu0 0
      %433 = vmatmul.mubr.bf16.gmra.mrb[0].mxu0 %v391
      %v434 = vpop.f32.mrb[0].mxu0
      %v435 = vadd.f32 0.0, %v434
      %v436 = vpop.f32.mrb[0].mxu0
      %v437 = vpop.f32.mrb[0].mxu0
      %v438 = vadd.f32 0.0, %v437
      %v439 = vpop.f32.mrb[0].mxu0
      %440 = vmatprep.mubr.bf16.mxu0 0
      %441 = vmatmul.mubr.bf16.gmra.mrb[0].mxu0 %v394
      %v442 = vpop.f32.mrb[0].mxu0
      %v443 = vadd.f32 0.0, %v442
      %v444 = vpop.f32.mrb[0].mxu0
      %v445 = vpop.f32.mrb[0].mxu0
      %v446 = vpop.f32.mrb[0].mxu0
      %447 = vdwg.mxu0
      %v448 = vadd.f32 %v374, %v435
      %v449 = vadd.f32 %v375, %v438
      %v450 = vadd.f32 %v376, %v443
      %v451 = vld [vmem:[%s329] sm:$0xf]
      %v452 = vld [vmem:[%s329 + $0x4] sm:$0xf]
      %v453 = vld [vmem:[%s329 + $0x8] sm:$0xf]
      %v454 = vld [vmem:[%s329 + $0xc] sm:$0x1]
      %v455 = vld [vmem:[%s335 + $0x4] sm:$0xf]
      %v460 = vunpack.c.l.b16 %v451
      %v461 = vunpack.c.l.b16 %v452
      %v462 = vunpack.c.l.b16 %v453
      %v463 = vunpack.c.l.b16 %v454
      %v464 = vpack.c.b16 %v461, %v460
      %v465 = vpack.c.b16 %v463, %v462
      %vm466 = vsmask.f32 7424
      %v468 = vshrl.u32 %v464, 16
      %v470 = vshll.u32 %v464, 16
      %v472 = vrot.slane %v470, 1
      %v473 = vor.u32 %v468, %v472
      %v475 = vshll.u32 %v465, 16
      %v477 = vrot.slane %v475, 1
      %v478 = vsel %vm466, %v473, %v477
      %v479 = vshrl.u32 %v465, 16
      %v481 = vor.u32 %v479, %v477
      %v483 = vsel %vm389, %v478, 0
      %v486 = vsel %vm389, %v481, 0
      %v489 = vsel %vm396, %v455, 0
      %491 = vmatprep.subr.bf16.mxu0 0
      %492 = vmatpush1.bf16.msra.mxu0 %v489
      %493 = vmatprep.subr.bf16.mxu0 0
      %494 = vmatpush1.bf16.msra.mxu0 0
      %495 = vmatprep.subr.bf16.mxu0 0
      %496 = vmatpush1.bf16.msra.mxu0 0
      %497 = vmatprep.subr.bf16.mxu0 0
      %498 = vmatpush1.bf16.msra.mxu0 0
      %499 = vmatprep.subr.bf16.mxu0 0
      %500 = vmatpush1.bf16.msra.mxu0 0
      %501 = vmatprep.subr.bf16.mxu0 0
      %502 = vmatpush1.bf16.msra.mxu0 0
      %503 = vmatprep.subr.bf16.mxu0 0
      %504 = vmatpush1.bf16.msra.mxu0 0
      %505 = vmatprep.subr.bf16.mxu0 0
      %506 = vmatpush1.bf16.msra.mxu0 0
      %507 = vmatprep.subr.bf16.mxu0 0
      %508 = vmatpush1.bf16.msra.mxu0 0
      %509 = vmatprep.subr.bf16.mxu0 0
      %510 = vmatpush1.bf16.msra.mxu0 0
      %511 = vmatprep.subr.bf16.mxu0 0
      %512 = vmatpush1.bf16.msra.mxu0 0
      %513 = vmatprep.subr.bf16.mxu0 0
      %514 = vmatpush1.bf16.msra.mxu0 0
      %515 = vmatprep.subr.bf16.mxu0 0
      %516 = vmatpush1.bf16.msra.mxu0 0
      %517 = vmatprep.subr.bf16.mxu0 0
      %518 = vmatpush1.bf16.msra.mxu0 0
      %519 = vmatprep.subr.bf16.mxu0 0
      %520 = vmatpush1.bf16.msra.mxu0 0
      %521 = vmatprep.subr.bf16.mxu0 0
      %522 = vmatpush1.bf16.msra.mxu0 0
      %523 = vmatprep.mubr.bf16.mxu0 0
      %524 = vmatmul.mubr.bf16.gmra.mrb[0].mxu0 %v483
      %v525 = vpop.f32.mrb[0].mxu0
      %v526 = vadd.f32 0.0, %v525
      %v527 = vpop.f32.mrb[0].mxu0
      %v528 = vpop.f32.mrb[0].mxu0
      %v529 = vadd.f32 0.0, %v528
      %v530 = vpop.f32.mrb[0].mxu0
      %531 = vmatprep.mubr.bf16.mxu0 0
      %532 = vmatmul.mubr.bf16.gmra.mrb[0].mxu0 %v486
      %v533 = vpop.f32.mrb[0].mxu0
      %v534 = vadd.f32 0.0, %v533
      %v535 = vpop.f32.mrb[0].mxu0
      %v536 = vpop.f32.mrb[0].mxu0
      %v537 = vpop.f32.mrb[0].mxu0
      %538 = vdwg.mxu0
      %v539 = vadd.f32 %v448, %v526
      %v540 = vadd.f32 %v449, %v529
      %v541 = vadd.f32 %v450, %v534
      %v542 = vld [vmem:[%s329] sm:$0xe]
      %v543 = vld [vmem:[%s335 + $0x8] sm:$0xf]
      %v545 = vunpack.c.l.b16 %v542
      %v546 = vpack.c.b16 %v461, %v545
      %vm547 = vcmask 1046528
      %v548 = vrot.slane %v546, 1
      %v549 = vrot.slane %v465, 1
      %v550 = vsel %vm547, %v548, %v549
      %v552 = vsel %vm389, %v550, 0
      %v555 = vsel %vm389, %v549, 0
      %v558 = vsel %vm396, %v543, 0
      %560 = vmatprep.subr.bf16.mxu0 0
      %561 = vmatpush1.bf16.msra.mxu0 %v558
      %562 = vmatprep.subr.bf16.mxu0 0
      %563 = vmatpush1.bf16.msra.mxu0 0
      %564 = vmatprep.subr.bf16.mxu0 0
      %565 = vmatpush1.bf16.msra.mxu0 0
      %566 = vmatprep.subr.bf16.mxu0 0
      %567 = vmatpush1.bf16.msra.mxu0 0
      %568 = vmatprep.subr.bf16.mxu0 0
      %569 = vmatpush1.bf16.msra.mxu0 0
      %570 = vmatprep.subr.bf16.mxu0 0
      %571 = vmatpush1.bf16.msra.mxu0 0
      %572 = vmatprep.subr.bf16.mxu0 0
      %573 = vmatpush1.bf16.msra.mxu0 0
      %574 = vmatprep.subr.bf16.mxu0 0
      %575 = vmatpush1.bf16.msra.mxu0 0
      %576 = vmatprep.subr.bf16.mxu0 0
      %577 = vmatpush1.bf16.msra.mxu0 0
      %578 = vmatprep.subr.bf16.mxu0 0
      %579 = vmatpush1.bf16.msra.mxu0 0
      %580 = vmatprep.subr.bf16.mxu0 0
      %581 = vmatpush1.bf16.msra.mxu0 0
      %582 = vmatprep.subr.bf16.mxu0 0
      %583 = vmatpush1.bf16.msra.mxu0 0
      %584 = vmatprep.subr.bf16.mxu0 0
      %585 = vmatpush1.bf16.msra.mxu0 0
      %586 = vmatprep.subr.bf16.mxu0 0
      %587 = vmatpush1.bf16.msra.mxu0 0
      %588 = vmatprep.subr.bf16.mxu0 0
      %589 = vmatpush1.bf16.msra.mxu0 0
      %590 = vmatprep.subr.bf16.mxu0 0
      %591 = vmatpush1.bf16.msra.mxu0 0
      %592 = vmatprep.mubr.bf16.mxu0 0
      %593 = vmatmul.mubr.bf16.gmra.mrb[0].mxu0 %v552
      %v594 = vpop.f32.mrb[0].mxu0
      %v595 = vadd.f32 0.0, %v594
      %v596 = vpop.f32.mrb[0].mxu0
      %v597 = vpop.f32.mrb[0].mxu0
      %v598 = vadd.f32 0.0, %v597
      %v599 = vpop.f32.mrb[0].mxu0
      %600 = vmatprep.mubr.bf16.mxu0 0
      %601 = vmatmul.mubr.bf16.gmra.mrb[0].mxu0 %v555
      %v602 = vpop.f32.mrb[0].mxu0
      %v603 = vadd.f32 0.0, %v602
      %v604 = vpop.f32.mrb[0].mxu0
      %v605 = vpop.f32.mrb[0].mxu0
      %v606 = vpop.f32.mrb[0].mxu0
      %607 = vdwg.mxu0
      %v608 = vadd.f32 %v539, %v595
      %v609 = vadd.f32 %v540, %v598
      %v610 = vadd.f32 %v541, %v603
      %v611 = vld [vmem:[%s329] sm:$0x8]
      %v612 = vld [vmem:[%s329 + $0xc] sm:$0x7]
      %v613 = vld [vmem:[%s335 + $0xc] sm:$0xf]
      %v616 = vunpack.c.l.b16 %v611
      %v617 = vunpack.c.l.b16 %v612
      %v618 = vpack.c.b16 %v461, %v616
      %v619 = vpack.c.b16 %v617, %v462
      %vm620 = vcmask 1044480
      %v621 = vrot.slane %v618, 3
      %v622 = vrot.slane %v619, 3
      %v623 = vsel %vm620, %v621, %v622
      %v625 = vsel %vm389, %v623, 0
      %v628 = vsel %vm389, %v622, 0
      %v631 = vsel %vm396, %v613, 0
      %633 = vmatprep.subr.bf16.mxu0 0
      %634 = vmatpush1.bf16.msra.mxu0 %v631
      %635 = vmatprep.subr.bf16.mxu0 0
      %636 = vmatpush1.bf16.msra.mxu0 0
      %637 = vmatprep.subr.bf16.mxu0 0
      %638 = vmatpush1.bf16.msra.mxu0 0
      %639 = vmatprep.subr.bf16.mxu0 0
      %640 = vmatpush1.bf16.msra.mxu0 0
      %641 = vmatprep.subr.bf16.mxu0 0
      %642 = vmatpush1.bf16.msra.mxu0 0
      %643 = vmatprep.subr.bf16.mxu0 0
      %644 = vmatpush1.bf16.msra.mxu0 0
      %645 = vmatprep.subr.bf16.mxu0 0
      %646 = vmatpush1.bf16.msra.mxu0 0
      %647 = vmatprep.subr.bf16.mxu0 0
      %648 = vmatpush1.bf16.msra.mxu0 0
      %649 = vmatprep.subr.bf16.mxu0 0
      %650 = vmatpush1.bf16.msra.mxu0 0
      %651 = vmatprep.subr.bf16.mxu0 0
      %652 = vmatpush1.bf16.msra.mxu0 0
      %653 = vmatprep.subr.bf16.mxu0 0
      %654 = vmatpush1.bf16.msra.mxu0 0
      %655 = vmatprep.subr.bf16.mxu0 0
      %656 = vmatpush1.bf16.msra.mxu0 0
      %657 = vmatprep.subr.bf16.mxu0 0
      %658 = vmatpush1.bf16.msra.mxu0 0
      %659 = vmatprep.subr.bf16.mxu0 0
      %660 = vmatpush1.bf16.msra.mxu0 0
      %661 = vmatprep.subr.bf16.mxu0 0
      %662 = vmatpush1.bf16.msra.mxu0 0
      %663 = vmatprep.subr.bf16.mxu0 0
      %664 = vmatpush1.bf16.msra.mxu0 0
      %665 = vmatprep.mubr.bf16.mxu0 0
      %666 = vmatmul.mubr.bf16.gmra.mrb[0].mxu0 %v625
      %v667 = vpop.f32.mrb[0].mxu0
      %v668 = vadd.f32 0.0, %v667
      %v669 = vpop.f32.mrb[0].mxu0
      %v670 = vpop.f32.mrb[0].mxu0
      %v671 = vadd.f32 0.0, %v670
      %v672 = vpop.f32.mrb[0].mxu0
      %673 = vmatprep.mubr.bf16.mxu0 0
      %674 = vmatmul.mubr.bf16.gmra.mrb[0].mxu0 %v628
      %v675 = vpop.f32.mrb[0].mxu0
      %v676 = vadd.f32 0.0, %v675
      %v677 = vpop.f32.mrb[0].mxu0
      %v678 = vpop.f32.mrb[0].mxu0
      %v679 = vpop.f32.mrb[0].mxu0
      %680 = vdwg.mxu0
      %v681 = vadd.f32 %v608, %v668
      %v682 = vadd.f32 %v609, %v671
      %v683 = vadd.f32 %v610, %v676
      %v684 = vld [vmem:[%s329 + $0xc] sm:$0xf]
      %v685 = vld [vmem:[%s335 + $0x10] sm:$0xf]
      %v687 = vunpack.c.l.b16 %v684
      %v688 = vpack.c.b16 %v687, %v462
      %vm689 = vsmask.f32 4352
      %v691 = vshrl.u32 %v618, 16
      %v693 = vrot.slane %v691, 3
      %v694 = vshll.u32 %v618, 16
      %v696 = vrot.slane %v694, 4
      %v697 = vor.u32 %v693, %v696
      %v699 = vshrl.u32 %v688, 16
      %v701 = vrot.slane %v699, 3
      %v702 = vshll.u32 %v688, 16
      %v704 = vrot.slane %v702, 4
      %v705 = vor.u32 %v701, %v704
      %v706 = vsel %vm689, %v697, %v705
      %v708 = vsel %vm389, %v706, 0
      %v711 = vsel %vm389, %v705, 0
      %v714 = vsel %vm396, %v685, 0
      %716 = vmatprep.subr.bf16.mxu0 0
      %717 = vmatpush1.bf16.msra.mxu0 %v714
      %718 = vmatprep.subr.bf16.mxu0 0
      %719 = vmatpush1.bf16.msra.mxu0 0
      %720 = vmatprep.subr.bf16.mxu0 0
      %721 = vmatpush1.bf16.msra.mxu0 0
      %722 = vmatprep.subr.bf16.mxu0 0
      %723 = vmatpush1.bf16.msra.mxu0 0
      %724 = vmatprep.subr.bf16.mxu0 0
      %725 = vmatpush1.bf16.msra.mxu0 0
      %726 = vmatprep.subr.bf16.mxu0 0
      %727 = vmatpush1.bf16.msra.mxu0 0
      %728 = vmatprep.subr.bf16.mxu0 0
      %729 = vmatpush1.bf16.msra.mxu0 0
      %730 = vmatprep.subr.bf16.mxu0 0
      %731 = vmatpush1.bf16.msra.mxu0 0
      %732 = vmatprep.subr.bf16.mxu0 0
      %733 = vmatpush1.bf16.msra.mxu0 0
      %734 = vmatprep.subr.bf16.mxu0 0
      %735 = vmatpush1.bf16.msra.mxu0 0
      %736 = vmatprep.subr.bf16.mxu0 0
      %737 = vmatpush1.bf16.msra.mxu0 0
      %738 = vmatprep.subr.bf16.mxu0 0
      %739 = vmatpush1.bf16.msra.mxu0 0
      %740 = vmatprep.subr.bf16.mxu0 0
      %741 = vmatpush1.bf16.msra.mxu0 0
      %742 = vmatprep.subr.bf16.mxu0 0
      %743 = vmatpush1.bf16.msra.mxu0 0
      %744 = vmatprep.subr.bf16.mxu0 0
      %745 = vmatpush1.bf16.msra.mxu0 0
      %746 = vmatprep.subr.bf16.mxu0 0
      %747 = vmatpush1.bf16.msra.mxu0 0
      %748 = vmatprep.mubr.bf16.mxu0 0
      %749 = vmatmul.mubr.bf16.gmra.mrb[0].mxu0 %v708
      %v750 = vpop.f32.mrb[0].mxu0
      %v751 = vadd.f32 0.0, %v750
      %v752 = vpop.f32.mrb[0].mxu0
      %v753 = vpop.f32.mrb[0].mxu0
      %v754 = vadd.f32 0.0, %v753
      %v755 = vpop.f32.mrb[0].mxu0
      %756 = vmatprep.mubr.bf16.mxu0 0
      %757 = vmatmul.mubr.bf16.gmra.mrb[0].mxu0 %v711
      %v758 = vpop.f32.mrb[0].mxu0
      %v759 = vadd.f32 0.0, %v758
      %v760 = vpop.f32.mrb[0].mxu0
      %v761 = vpop.f32.mrb[0].mxu0
      %v762 = vpop.f32.mrb[0].mxu0
      %763 = vdwg.mxu0
      %v764 = vadd.f32 %v681, %v751
      %v765 = vadd.f32 %v682, %v754
      %v766 = vadd.f32 %v683, %v759
      %v767 = vld [vmem:[%s335 + $0x14] sm:$0xf]
      %v768 = vpack.c.b16 %v462, %v461
      %v769 = vpack.c.b16 %v687, %v687
      %v771 = vsel %vm389, %v768, 0
      %v774 = vsel %vm389, %v769, 0
      %v777 = vsel %vm396, %v767, 0
      %779 = vmatprep.subr.bf16.mxu0 0
      %780 = vmatpush1.bf16.msra.mxu0 %v777
      %781 = vmatprep.subr.bf16.mxu0 0
      %782 = vmatpush1.bf16.msra.mxu0 0
      %783 = vmatprep.subr.bf16.mxu0 0
      %784 = vmatpush1.bf16.msra.mxu0 0
      %785 = vmatprep.subr.bf16.mxu0 0
      %786 = vmatpush1.bf16.msra.mxu0 0
      %787 = vmatprep.subr.bf16.mxu0 0
      %788 = vmatpush1.bf16.msra.mxu0 0
      %789 = vmatprep.subr.bf16.mxu0 0
      %790 = vmatpush1.bf16.msra.mxu0 0
      %791 = vmatprep.subr.bf16.mxu0 0
      %792 = vmatpush1.bf16.msra.mxu0 0
      %793 = vmatprep.subr.bf16.mxu0 0
      %794 = vmatpush1.bf16.msra.mxu0 0
      %795 = vmatprep.subr.bf16.mxu0 0
      %796 = vmatpush1.bf16.msra.mxu0 0
      %797 = vmatprep.subr.bf16.mxu0 0
      %798 = vmatpush1.bf16.msra.mxu0 0
      %799 = vmatprep.subr.bf16.mxu0 0
      %800 = vmatpush1.bf16.msra.mxu0 0
      %801 = vmatprep.subr.bf16.mxu0 0
      %802 = vmatpush1.bf16.msra.mxu0 0
      %803 = vmatprep.subr.bf16.mxu0 0
      %804 = vmatpush1.bf16.msra.mxu0 0
      %805 = vmatprep.subr.bf16.mxu0 0
      %806 = vmatpush1.bf16.msra.mxu0 0
      %807 = vmatprep.subr.bf16.mxu0 0
      %808 = vmatpush1.bf16.msra.mxu0 0
      %809 = vmatprep.subr.bf16.mxu0 0
      %810 = vmatpush1.bf16.msra.mxu0 0
      %811 = vmatprep.mubr.bf16.mxu0 0
      %812 = vmatmul.mubr.bf16.gmra.mrb[0].mxu0 %v771
      %v813 = vpop.f32.mrb[0].mxu0
      %v814 = vadd.f32 0.0, %v813
      %v815 = vpop.f32.mrb[0].mxu0
      %v816 = vpop.f32.mrb[0].mxu0
      %v817 = vadd.f32 0.0, %v816
      %v818 = vpop.f32.mrb[0].mxu0
      %819 = vmatprep.mubr.bf16.mxu0 0
      %820 = vmatmul.mubr.bf16.gmra.mrb[0].mxu0 %v774
      %v821 = vpop.f32.mrb[0].mxu0
      %v822 = vadd.f32 0.0, %v821
      %v823 = vpop.f32.mrb[0].mxu0
      %v824 = vpop.f32.mrb[0].mxu0
      %v825 = vpop.f32.mrb[0].mxu0
      %826 = vdwg.mxu0
      %v827 = vadd.f32 %v764, %v814
      %v828 = vadd.f32 %v765, %v817
      %v829 = vadd.f32 %v766, %v822
      %v830 = vld [vmem:[%s329 + $0x4] sm:$0xc]
      %v831 = vld [vmem:[%s329 + $0x8] sm:$0xf]
      %v832 = vld [vmem:[%s329 + $0xc] sm:$0xf]
      %v833 = vld [vmem:[%s329 + $0x10] sm:$0x3]
      %v834 = vld [vmem:[%s335 + $0x18] sm:$0xf]
      %v839 = vunpack.c.l.b16 %v830
      %v840 = vunpack.c.l.b16 %v831
      %v841 = vunpack.c.l.b16 %v832
      %v842 = vunpack.c.l.b16 %v833
      %v843 = vpack.c.b16 %v840, %v839
      %v844 = vpack.c.b16 %v842, %v841
      %vm845 = vcmask 1045504
      %v846 = vrot.slane %v843, 2
      %v847 = vrot.slane %v844, 2
      %v848 = vsel %vm845, %v846, %v847
      %v850 = vsel %vm389, %v848, 0
      %v853 = vsel %vm389, %v847, 0
      %v856 = vsel %vm396, %v834, 0
      %858 = vmatprep.subr.bf16.mxu0 0
      %859 = vmatpush1.bf16.msra.mxu0 %v856
      %860 = vmatprep.subr.bf16.mxu0 0
      %861 = vmatpush1.bf16.msra.mxu0 0
      %862 = vmatprep.subr.bf16.mxu0 0
      %863 = vmatpush1.bf16.msra.mxu0 0
      %864 = vmatprep.subr.bf16.mxu0 0
      %865 = vmatpush1.bf16.msra.mxu0 0
      %866 = vmatprep.subr.bf16.mxu0 0
      %867 = vmatpush1.bf16.msra.mxu0 0
      %868 = vmatprep.subr.bf16.mxu0 0
      %869 = vmatpush1.bf16.msra.mxu0 0
      %870 = vmatprep.subr.bf16.mxu0 0
      %871 = vmatpush1.bf16.msra.mxu0 0
      %872 = vmatprep.subr.bf16.mxu0 0
      %873 = vmatpush1.bf16.msra.mxu0 0
      %874 = vmatprep.subr.bf16.mxu0 0
      %875 = vmatpush1.bf16.msra.mxu0 0
      %876 = vmatprep.subr.bf16.mxu0 0
      %877 = vmatpush1.bf16.msra.mxu0 0
      %878 = vmatprep.subr.bf16.mxu0 0
      %879 = vmatpush1.bf16.msra.mxu0 0
      %880 = vmatprep.subr.bf16.mxu0 0
      %881 = vmatpush1.bf16.msra.mxu0 0
      %882 = vmatprep.subr.bf16.mxu0 0
      %883 = vmatpush1.bf16.msra.mxu0 0
      %884 = vmatprep.subr.bf16.mxu0 0
      %885 = vmatpush1.bf16.msra.mxu0 0
      %886 = vmatprep.subr.bf16.mxu0 0
      %887 = vmatpush1.bf16.msra.mxu0 0
      %888 = vmatprep.subr.bf16.mxu0 0
      %889 = vmatpush1.bf16.msra.mxu0 0
      %890 = vmatprep.mubr.bf16.mxu0 0
      %891 = vmatmul.mubr.bf16.gmra.mrb[0].mxu0 %v850
      %v892 = vpop.f32.mrb[0].mxu0
      %v893 = vadd.f32 0.0, %v892
      %v894 = vpop.f32.mrb[0].mxu0
      %v895 = vpop.f32.mrb[0].mxu0
      %v896 = vadd.f32 0.0, %v895
      %v897 = vpop.f32.mrb[0].mxu0
      %898 = vmatprep.mubr.bf16.mxu0 0
      %899 = vmatmul.mubr.bf16.gmra.mrb[0].mxu0 %v853
      %v900 = vpop.f32.mrb[0].mxu0
      %v901 = vadd.f32 0.0, %v900
      %v902 = vpop.f32.mrb[0].mxu0
      %v903 = vpop.f32.mrb[0].mxu0
      %v904 = vpop.f32.mrb[0].mxu0
      %905 = vdwg.mxu0
      %v906 = vadd.f32 %v827, %v893
      %v907 = vadd.f32 %v828, %v896
      %v908 = vadd.f32 %v829, %v901
      %v909 = vld [vmem:[%s329 + $0x10] sm:$0x7]
      %v910 = vld [vmem:[%s335 + $0x1c] sm:$0xf]
      %v912 = vunpack.c.l.b16 %v909
      %v913 = vpack.c.b16 %v912, %v841
      %vm914 = vsmask.f32 5376
      %v916 = vshrl.u32 %v843, 16
      %v918 = vrot.slane %v916, 2
      %v919 = vshll.u32 %v843, 16
      %v921 = vrot.slane %v919, 3
      %v922 = vor.u32 %v918, %v921
      %v924 = vshrl.u32 %v913, 16
      %v926 = vrot.slane %v924, 2
      %v927 = vshll.u32 %v913, 16
      %v929 = vrot.slane %v927, 3
      %v930 = vor.u32 %v926, %v929
      %v931 = vsel %vm914, %v922, %v930
      %v933 = vsel %vm389, %v931, 0
      %v936 = vsel %vm389, %v930, 0
      %v939 = vsel %vm396, %v910, 0
      %941 = vmatprep.subr.bf16.mxu0 0
      %942 = vmatpush1.bf16.msra.mxu0 %v939
      %943 = vmatprep.subr.bf16.mxu0 0
      %944 = vmatpush1.bf16.msra.mxu0 0
      %945 = vmatprep.subr.bf16.mxu0 0
      %946 = vmatpush1.bf16.msra.mxu0 0
      %947 = vmatprep.subr.bf16.mxu0 0
      %948 = vmatpush1.bf16.msra.mxu0 0
      %949 = vmatprep.subr.bf16.mxu0 0
      %950 = vmatpush1.bf16.msra.mxu0 0
      %951 = vmatprep.subr.bf16.mxu0 0
      %952 = vmatpush1.bf16.msra.mxu0 0
      %953 = vmatprep.subr.bf16.mxu0 0
      %954 = vmatpush1.bf16.msra.mxu0 0
      %955 = vmatprep.subr.bf16.mxu0 0
      %956 = vmatpush1.bf16.msra.mxu0 0
      %957 = vmatprep.subr.bf16.mxu0 0
      %958 = vmatpush1.bf16.msra.mxu0 0
      %959 = vmatprep.subr.bf16.mxu0 0
      %960 = vmatpush1.bf16.msra.mxu0 0
      %961 = vmatprep.subr.bf16.mxu0 0
      %962 = vmatpush1.bf16.msra.mxu0 0
      %963 = vmatprep.subr.bf16.mxu0 0
      %964 = vmatpush1.bf16.msra.mxu0 0
      %965 = vmatprep.subr.bf16.mxu0 0
      %966 = vmatpush1.bf16.msra.mxu0 0
      %967 = vmatprep.subr.bf16.mxu0 0
      %968 = vmatpush1.bf16.msra.mxu0 0
      %969 = vmatprep.subr.bf16.mxu0 0
      %970 = vmatpush1.bf16.msra.mxu0 0
      %971 = vmatprep.subr.bf16.mxu0 0
      %972 = vmatpush1.bf16.msra.mxu0 0
      %973 = vmatprep.mubr.bf16.mxu0 0
      %974 = vmatmul.mubr.bf16.gmra.mrb[0].mxu0 %v933
      %v975 = vpop.f32.mrb[0].mxu0
      %v976 = vadd.f32 0.0, %v975
      %v977 = vpop.f32.mrb[0].mxu0
      %v978 = vpop.f32.mrb[0].mxu0
      %v979 = vadd.f32 0.0, %v978
      %v980 = vpop.f32.mrb[0].mxu0
      %981 = vmatprep.mubr.bf16.mxu0 0
      %982 = vmatmul.mubr.bf16.gmra.mrb[0].mxu0 %v936
      %v983 = vpop.f32.mrb[0].mxu0
      %v984 = vadd.f32 0.0, %v983
      %v985 = vpop.f32.mrb[0].mxu0
      %v986 = vpop.f32.mrb[0].mxu0
      %v987 = vpop.f32.mrb[0].mxu0
      %988 = vdwg.mxu0
      %v989 = vadd.f32 %v906, %v976
      %v990 = vadd.f32 %v907, %v979
      %v991 = vadd.f32 %v908, %v984
      %v992 = vld [vmem:[%s329 + $0x4] sm:$0x8]
      %v993 = vld [vmem:[%s335 + $0x20] sm:$0xf]
      %v995 = vunpack.c.l.b16 %v992
      %v996 = vpack.c.b16 %v840, %v995
      %v997 = vrot.slane %v996, 3
      %v998 = vrot.slane %v913, 3
      %v999 = vsel %vm620, %v997, %v998
      %v1001 = vsel %vm389, %v999, 0
      %v1004 = vsel %vm389, %v998, 0
      %v1007 = vsel %vm396, %v993, 0
      %1009 = vmatprep.subr.bf16.mxu0 0
      %1010 = vmatpush1.bf16.msra.mxu0 %v1007
      %1011 = vmatprep.subr.bf16.mxu0 0
      %1012 = vmatpush1.bf16.msra.mxu0 0
      %1013 = vmatprep.subr.bf16.mxu0 0
      %1014 = vmatpush1.bf16.msra.mxu0 0
      %1015 = vmatprep.subr.bf16.mxu0 0
      %1016 = vmatpush1.bf16.msra.mxu0 0
      %1017 = vmatprep.subr.bf16.mxu0 0
      %1018 = vmatpush1.bf16.msra.mxu0 0
      %1019 = vmatprep.subr.bf16.mxu0 0
      %1020 = vmatpush1.bf16.msra.mxu0 0
      %1021 = vmatprep.subr.bf16.mxu0 0
      %1022 = vmatpush1.bf16.msra.mxu0 0
      %1023 = vmatprep.subr.bf16.mxu0 0
      %1024 = vmatpush1.bf16.msra.mxu0 0
      %1025 = vmatprep.subr.bf16.mxu0 0
      %1026 = vmatpush1.bf16.msra.mxu0 0
      %1027 = vmatprep.subr.bf16.mxu0 0
      %1028 = vmatpush1.bf16.msra.mxu0 0
      %1029 = vmatprep.subr.bf16.mxu0 0
      %1030 = vmatpush1.bf16.msra.mxu0 0
      %1031 = vmatprep.subr.bf16.mxu0 0
      %1032 = vmatpush1.bf16.msra.mxu0 0
      %1033 = vmatprep.subr.bf16.mxu0 0
      %1034 = vmatpush1.bf16.msra.mxu0 0
      %1035 = vmatprep.subr.bf16.mxu0 0
      %1036 = vmatpush1.bf16.msra.mxu0 0
      %1037 = vmatprep.subr.bf16.mxu0 0
      %1038 = vmatpush1.bf16.msra.mxu0 0
      %1039 = vmatprep.subr.bf16.mxu0 0
      %1040 = vmatpush1.bf16.msra.mxu0 0
      %1041 = vmatprep.mubr.bf16.mxu0 0
      %1042 = vmatmul.mubr.bf16.gmra.mrb[0].mxu0 %v1001
      %v1043 = vpop.f32.mrb[0].mxu0
      %v1044 = vadd.f32 0.0, %v1043
      %v1045 = vpop.f32.mrb[0].mxu0
      %v1046 = vpop.f32.mrb[0].mxu0
      %v1047 = vadd.f32 0.0, %v1046
      %v1048 = vpop.f32.mrb[0].mxu0
      %1049 = vmatprep.mubr.bf16.mxu0 0
      %1050 = vmatmul.mubr.bf16.gmra.mrb[0].mxu0 %v1004
      %v1051 = vpop.f32.mrb[0].mxu0
      %v1052 = vadd.f32 0.0, %v1051
      %v1053 = vpop.f32.mrb[0].mxu0
      %v1054 = vpop.f32.mrb[0].mxu0
      %v1055 = vpop.f32.mrb[0].mxu0
      %1056 = vdwg.mxu0
      %v1057 = vadd.f32 %v989, %v1044
      %v1058 = vadd.f32 %v990, %v1047
      %v1059 = vadd.f32 %v991, %v1052
      %1060 = vst [vmem:[#allocation2] sm:$0xff] %v1057
      %1061 = vst [vmem:[#allocation2 + $0x8] sm:$0xff] %v1058
      %1062 = vst [vmem:[#allocation2 + $0x10] sm:$0xff] %v1059
      %p1063 = scmp.eq.s32.totalorder %s25, 2
      // Predicated region
      $region41: #{double_conv_block.6} parent=35 // pred_check
        %p1064 = pneg %p1063
      $region42: #{double_conv_block.6} parent=35 // pred_check_branch
        %1066 = sbr.rel (%p1064) target = $region44
      $region43: #{double_conv_block.6} parent=35 // pred_region
        %v1067 = vld [vmem:[#allocation2] sm:$0xff]
        %v1068 = vld [vmem:[#allocation2 + $0x8] sm:$0xff]
        %v1069 = vld [vmem:[#allocation2 + $0x10] sm:$0xff]
        %1070 = vst [vmem:[%s344] sm:$0xff] %v1067
        %1071 = vst [vmem:[%s344 + $0x8] sm:$0xff] %v1068
        %1072 = vst [vmem:[%s344 + $0x10] sm:$0xff] %v1069
        %v1073 = vld [vmem:[%s3] sm:$0xff]
        %v1074 = vld [vmem:[%s3 + $0x8] sm:$0xff]
        %v1075 = vld [vmem:[%s3 + $0x10] sm:$0xff]
        %1077 = vset.pattern.permute.xlu0 0
        %1078 = vperm.xlu0 %1077, %v1073
        %v1079 = vpop.permute.xlu0 %1078
        %1082 = vset.pattern.permute.xlu0 0
        %1083 = vperm.xlu0 %1082, %v1074
        %v1084 = vpop.permute.xlu0 %1083
        %1087 = vset.pattern.permute.xlu0 0
        %1088 = vperm.xlu0 %1087, %v1075
        %v1089 = vpop.permute.xlu0 %1088
        %v1091 = vmul.f32 %v1067, %v1079
        %v1092 = vmul.f32 %v1068, %v1084
        %v1093 = vmul.f32 %v1069, %v1089
        %v1094 = vadd.f32 %v1091, %v1092
        %v1095 = vadd.f32 %v1094, %v1093
        %v1096 = vrot.slane %v1095, 4
        %v1097 = vadd.f32 %v1095, %v1096
        %v1098 = vrot.slane %v1097, 2
        %v1099 = vadd.f32 %v1097, %v1098
        %v1100 = vrot.slane %v1099, 1
        %v1101 = vadd.f32 %v1099, %v1100
        %1102 = vst [vmem:[%s351] sm:$0x1] %v1101
        %v1103 = vmul.f32 %v1091, %v1067
        %v1104 = vmul.f32 %v1092, %v1068
        %v1105 = vmul.f32 %v1093, %v1069
        %v1106 = vadd.f32 %v1103, %v1104
        %v1107 = vadd.f32 %v1106, %v1105
        %v1108 = vrot.slane %v1107, 4
        %v1109 = vadd.f32 %v1107, %v1108
        %v1110 = vrot.slane %v1109, 2
        %v1111 = vadd.f32 %v1109, %v1110
        %v1112 = vrot.slane %v1111, 1
        %v1113 = vadd.f32 %v1111, %v1112
        %1114 = vst [vmem:[%s358] sm:$0x1] %v1113
      $region44: #{double_conv_block.6} parent=35 // pred_fallthru
        _
      %p1115 = scmp.lt.s32.totalorder %s23, 1
      %s1116 = scalar_select %p1115, %s23, 1
      %p1117 = scmp.lt.s32.totalorder %s24, 3
      %s1118 = scalar_select %p1117, %s24, 3
      %s1119 = smul.addr %s1118, 3
      %s1120 = smul.addr %s1116, 12
      %s1121 = sadd.s32 %s1119, %s1120
      %s1122 = smul.addr %s1121, 8
      %s1123 = scalar_lea.vmem %s4, %s1122
      %p1124 = scmp.lt.s32.totalorder %s23, 1
      %s1125 = scalar_select %p1124, %s23, 1
      %p1126 = scmp.lt.s32.totalorder %s24, 3
      %s1127 = scalar_select %p1126, %s24, 3
      %s1128 = smul.addr %s1125, 4
      %s1129 = sadd.s32 %s1127, %s1128
      %s1130 = scalar_lea.vmem %s5, %s1129
      %p1131 = scmp.lt.s32.totalorder %s23, 1
      %s1132 = scalar_select %p1131, %s23, 1
      %p1133 = scmp.lt.s32.totalorder %s24, 3
      %s1134 = scalar_select %p1133, %s24, 3
      %s1135 = smul.addr %s1132, 4
      %s1136 = sadd.s32 %s1134, %s1135
      %s1137 = scalar_lea.vmem %s6, %s1136
      // Predicated region
      $region45: #{double_conv_block.6} parent=35 // pred_check
        %p1138 = pneg %p155
      $region46: #{double_conv_block.6} parent=35 // pred_check_branch
        %1140 = sbr.rel (%p1138) target = $region48
      $region47: #{double_conv_block.6} parent=35 // pred_region
        _
      $region48: #{double_conv_block.6} parent=35 // pred_fallthru
        _
      // Predicated region
      $region49: #{double_conv_block.6} parent=35 // pred_check
        %p1141 = pneg %p183
      $region50: #{double_conv_block.6} parent=35 // pred_check_branch
        %1143 = sbr.rel (%p1141) target = $region52
      $region51: #{double_conv_block.6} parent=35 // pred_region
        _
      $region52: #{double_conv_block.6} parent=35 // pred_fallthru
        _
      // Predicated region
      $region53: #{double_conv_block.6} parent=35 // pred_check
        %p1144 = pneg %p211
      $region54: #{double_conv_block.6} parent=35 // pred_check_branch
        %1146 = sbr.rel (%p1144) target = $region56
      $region55: #{double_conv_block.6} parent=35 // pred_region
        _
      $region56: #{double_conv_block.6} parent=35 // pred_fallthru
        _
    $region36: #{double_conv_block.6} parent=5 // pred_fallthru
      _
    %p1147 = scmp.le.s32.totalorder 2, %s13
    // Predicated region
    $region57: #{double_conv_block.6} parent=5 // pred_check
      %p1148 = pneg %p1147
    $region58: #{double_conv_block.6} parent=5 // pred_check_branch
      %1150 = sbr.rel (%p1148) target = $region60
    $region59: #{double_conv_block.6} parent=5 // pred_region
      %s1151 = ssub.s32 %s13, 2
      // Predicated region
      $region61: #{double_conv_block.6} parent=59 // pred_check
        %p1152 = pneg %p161
      $region62: #{double_conv_block.6} parent=59 // pred_check_branch
        %1154 = sbr.rel (%p1152) target = $region64
      $region63: #{double_conv_block.6} parent=59 // pred_region
        %p1155 = scmp.lt.s32.totalorder %s26, 1
        %s1156 = scalar_select %p1155, %s26, 1
        %p1157 = scmp.lt.s32.totalorder %s27, 3
        %s1158 = scalar_select %p1157, %s27, 3
        %s1159 = smul.addr %s1158, 3
        %s1160 = smul.addr %s1156, 12
        %s1161 = sadd.s32 %s1159, %s1160
        %s1162 = smul.addr %s1161, 8
        %s1163 = scalar_lea.vmem %s4, %s1162
      $region64: #{double_conv_block.6} parent=59 // pred_fallthru
        _
      // Predicated region
      $region65: #{double_conv_block.6} parent=59 // pred_check
        %p1164 = pneg %p189
      $region66: #{double_conv_block.6} parent=59 // pred_check_branch
        %1166 = sbr.rel (%p1164) target = $region68
      $region67: #{double_conv_block.6} parent=59 // pred_region
        %p1167 = scmp.lt.s32.totalorder %s26, 1
        %s1168 = scalar_select %p1167, %s26, 1
        %p1169 = scmp.lt.s32.totalorder %s27, 3
        %s1170 = scalar_select %p1169, %s27, 3
        %s1171 = smul.addr %s1168, 4
        %s1172 = sadd.s32 %s1170, %s1171
        %s1173 = scalar_lea.vmem %s5, %s1172
      $region68: #{double_conv_block.6} parent=59 // pred_fallthru
        _
      // Predicated region
      $region69: #{double_conv_block.6} parent=59 // pred_check
        %p1174 = pneg %p217
      $region70: #{double_conv_block.6} parent=59 // pred_check_branch
        %1176 = sbr.rel (%p1174) target = $region72
      $region71: #{double_conv_block.6} parent=59 // pred_region
        %p1177 = scmp.lt.s32.totalorder %s26, 1
        %s1178 = scalar_select %p1177, %s26, 1
        %p1179 = scmp.lt.s32.totalorder %s27, 3
        %s1180 = scalar_select %p1179, %s27, 3
        %s1181 = smul.addr %s1178, 4
        %s1182 = sadd.s32 %s1180, %s1181
        %s1183 = scalar_lea.vmem %s6, %s1182
      $region72: #{double_conv_block.6} parent=59 // pred_fallthru
        _
    $region60: #{double_conv_block.6} parent=5 // pred_fallthru
      _
  $region6: #{double_conv_block.6} parent=0 // loop_footer
    %s17 = sadd.s32 1, %s13
  $region7: #{double_conv_block.6} parent=0 // loop_footer_branch
    %12 = sbr.rel target = $region3
  $region8: #{double_conv_block.6} parent=0 // loop_exit
    _

</llo_original>
